<compile_context>
chip_gen: v7x
topology: tpu7x:2x2x1
jax: 0.10.0
libtpu: 0.0.40
codegen_flags: <defaults>
</compile_context>

<pallas_src>
import math

import jax
import jax.numpy as jnp
from jax.experimental import pallas as pl
from jax.experimental.pallas import tpu as pltpu


# ---------------------------------------------------------------------------
# Helpers
# ---------------------------------------------------------------------------
def _pad_leading_axis(a, axis, front, back):
    """Zero-pad an untiled leading axis with a single concatenate (skipped if no-op)."""
    if front == 0 and back == 0:
        return a
    parts = []
    if front > 0:
        shp = list(a.shape)
        shp[axis] = front
        parts.append(jnp.zeros(shp, a.dtype))
    parts.append(a)
    if back > 0:
        shp = list(a.shape)
        shp[axis] = back
        parts.append(jnp.zeros(shp, a.dtype))
    return jnp.concatenate(parts, axis=axis)


# ---------------------------------------------------------------------------
# Fused forward kernel (all conv layers + GAP + classifier in one program)
# ---------------------------------------------------------------------------
def _make_fused_kernel(depth, k, pad):
    def kernel(x_ref, *refs):
        o_ref = refs[-1]
        wcls_ref = refs[-2]
        conv_refs = refs[:-2]            # (w0, b0, w1, b1, ...)

        # (Bt, H, W, 1, Cin): batch tile + H/W are untiled leading axes,
        # input channels on lanes.
        a = x_ref[...]
        bt = a.shape[0]

        for l in range(depth):
            w_ref = conv_refs[2 * l]
            b_ref = conv_refs[2 * l + 1]
            in_on_lanes = (l % 2 == 0)   # where this layer's input channels live

            h_cur, w_cur = a.shape[1], a.shape[2]
            h_in, w_in = h_cur + 2 * pad, w_cur + 2 * pad
            ho = (h_in - k) // 2 + 1
            wo = (w_in - k) // 2 + 1

            # Even-sized padded extent covering every kernel offset for the
            # stride-2 phase decomposition (rows/cols beyond the semantic
            # padded extent are never read).
            hp = max(2 * ((k - 1) // 2 + ho), h_in)
            hp += hp % 2
            wp = max(2 * ((k - 1) // 2 + wo), w_in)
            wp += wp % 2

            # One concatenate per spatial axis (merges conv zero-padding and
            # even-up padding); no concatenate at all when already aligned.
            a = _pad_leading_axis(a, 1, pad, hp - h_cur - pad)
            a = _pad_leading_axis(a, 2, pad, wp - w_cur - pad)

            # Phase split: purely leading-dim reshape (no data movement in the
            # tiled minor dims).  Output (i,j) for offset (ki,kj) reads input
            # row 2i+ki, col 2j+kj.
            r = a.reshape(bt, hp // 2, 2, wp // 2, 2, a.shape[3], a.shape[4])

            wv = w_ref[...]              # (k*k, Cout, Cin) or (k*k, Cin, Cout)

            # Accumulate the (..., Cout, Cin)/(..., Cin, Cout) products over all
            # k*k offsets with VPU adds; the expensive cross-minor (XLU) channel
            # reduce is issued ONCE per layer below (review item #1).
            acc = None
            for ki in range(k):
                for kj in range(k):
                    patch = r[:, ki // 2: ki // 2 + ho, ki % 2,
                              kj // 2: kj // 2 + wo, kj % 2]     # (Bt,Ho,Wo,c1,c2)
                    term = patch * wv[ki * k + kj]
                    acc = term if acc is None else acc + term

            conv = jnp.sum(acc, axis=(-1 if in_on_lanes else -2), keepdims=True)
            conv = conv + b_ref[...]                 # conv bias
            a = jnp.maximum(conv, 0.2 * conv)        # LeakyReLU(0.2)

        # Global average pool over the (leading) spatial dims: pure VPU adds.
        hf, wf = a.shape[1], a.shape[2]
        gap = jnp.sum(jnp.sum(a, axis=1), axis=1) * (1.0 / float(hf * wf))

        # Bias-free Linear(C, 1): elementwise multiply + single channel reduce
        # (avoids an N=1 MXU matmul).
        red_axis = 1 if (depth % 2 == 1) else 2
        o_ref[...] = jnp.sum(gap * wcls_ref[...], axis=red_axis, keepdims=True)

    return kernel


# ---------------------------------------------------------------------------
# Wrapper: layout plumbing only (transposes / reshapes of tiny weight tensors)
# ---------------------------------------------------------------------------
def discriminator_forward(img_nchw, params, *, k=3, pad=0):
    B, Cin, H, W = img_nchw.shape
    depth = len(params["convs"])

    # NCHW -> (B, H, W, 1, Cin): channels on the lane axis, singleton sublane
    # axis, B/H/W untiled so stride-2 windows are pure leading-dim slices.
    x = jnp.transpose(img_nchw, (0, 2, 3, 1)).reshape(B, H, W, 1, Cin)

    # Fold the batch into the program (grid over batch tiles).  For B=2 this
    # gives grid=(1,) -> no serial grid steps on single-TC chips.  For larger
    # batches on v7x one would shrink bt and mark this axis pltpu.CORE_PARALLEL
    # to guarantee the 2-TensorCore split.
    bt = math.gcd(B, 32)
    nb = B // bt

    def _resident_spec(arr):
        zeros = (0,) * arr.ndim
        return pl.BlockSpec(arr.shape, lambda b, zeros=zeros: zeros)

    flat_inputs = [x]
    in_specs = [pl.BlockSpec((bt, H, W, 1, Cin), lambda b: (b, 0, 0, 0, 0))]

    for l, (w_hwio, bias) in enumerate(params["convs"]):
        cin, cout = w_hwio.shape[2], w_hwio.shape[3]
        w_flat = w_hwio.reshape(k * k, cin, cout)
        if l % 2 == 0:
            # input channels on lanes -> weight oriented (k*k, Cout, Cin)
            w_kernel = jnp.transpose(w_flat, (0, 2, 1))
            b_kernel = bias.reshape(cout, 1)
        else:
            # input channels on sublanes -> weight oriented (k*k, Cin, Cout)
            w_kernel = w_flat
            b_kernel = bias.reshape(1, cout)
        flat_inputs += [w_kernel, b_kernel]
        in_specs += [_resident_spec(w_kernel), _resident_spec(b_kernel)]

    w_cls = params["classifier"]                      # (C_last, 1)
    if depth % 2 == 0:
        w_cls = w_cls.reshape(1, -1)                  # match final layout
    flat_inputs.append(w_cls)
    in_specs.append(_resident_spec(w_cls))

    out = pl.pallas_call(
        _make_fused_kernel(depth, k, pad),
        out_shape=jax.ShapeDtypeStruct((B, 1, 1), jnp.float32),
        grid=(nb,),
        in_specs=in_specs,
        out_specs=pl.BlockSpec((bt, 1, 1), lambda b: (b, 0, 0)),
        compiler_params=pltpu.CompilerParams(
            # single batch-tile program here; tiles are independent otherwise
            dimension_semantics=("arbitrary",),
            # a few MiB are actually used; 32 MiB keeps headroom on every chip
            # (v5e 16 MiB default scoped, v7x 64 MiB physical VMEM).
            vmem_limit_bytes=32 * 1024 * 1024),
    )(*flat_inputs)
    return out.reshape(B)   # .view(b) in the PyTorch module


# ---------------------------------------------------------------------------
# Deterministic parameter construction (synthetic weights)
# ---------------------------------------------------------------------------
def init_params(key, channels, depth, nf, k):
    params = {"convs": []}
    cin = channels
    for i in range(depth):
        cout = nf * (2 ** i)
        kw = jax.random.fold_in(key, 2 * i)
        kb = jax.random.fold_in(key, 2 * i + 1)
        w = 0.05 * jax.random.normal(kw, (k, k, cin, cout), dtype=jnp.float32)  # HWIO
        b = 0.05 * jax.random.normal(kb, (cout,), dtype=jnp.float32)
        params["convs"].append((w, b))
        cin = cout
    kcls = jax.random.fold_in(key, 1000)
    params["classifier"] = 0.05 * jax.random.normal(kcls, (cin, 1), dtype=jnp.float32)
    return params


# ---------------------------------------------------------------------------
# Pure-JAX reference (for correctness check only)
# ---------------------------------------------------------------------------
def reference_forward(img_nchw, params, *, k=3, pad=0):
    x = jnp.transpose(img_nchw, (0, 2, 3, 1))
    for (w, b) in params["convs"]:
        x = jax.lax.conv_general_dilated(
            x, w, window_strides=(2, 2),
            padding=[(pad, pad), (pad, pad)],
            dimension_numbers=("NHWC", "HWIO", "NHWC"))
        x = x + b
        x = jnp.where(x > 0, x, 0.2 * x)
    gap = jnp.mean(x, axis=(1, 2))
    return (gap @ params["classifier"]).reshape(img_nchw.shape[0])


# ---------------------------------------------------------------------------
if __name__ == "__main__":
    # Discriminator(input_dim=16, channels=3, depth=3, nf=8, k=3, pad=0, GAP='True')
    input_dim, channels, depth, nf, k, pad = 16, 3, 3, 8, 3, 0
    batch = 2

    key = jax.random.PRNGKey(0)
    params = init_params(key, channels, depth, nf, k)
    img = jax.random.normal(jax.random.fold_in(key, 9999),
                            (batch, channels, input_dim, input_dim),
                            dtype=jnp.float32)

    out = discriminator_forward(img, params, k=k, pad=pad)
    out = jax.block_until_ready(out)

    ref = jax.block_until_ready(reference_forward(img, params, k=k, pad=pad))
    assert out.shape == (batch,), out.shape
    assert jnp.allclose(out, ref, atol=1e-4, rtol=1e-4), (out, ref)

    print("KERNEL_OK")
</pallas_src>

<mosaic_0001>
module attributes {stable_mosaic.version = 11 : i64} {
  func.func @kernel(%arg0: i32, %arg1: memref<2x16x16x1x3xf32, #tpu.memory_space<vmem>>, %arg2: memref<9x8x3xf32, #tpu.memory_space<vmem>>, %arg3: memref<8x1xf32, #tpu.memory_space<vmem>>, %arg4: memref<9x8x16xf32, #tpu.memory_space<vmem>>, %arg5: memref<1x16xf32, #tpu.memory_space<vmem>>, %arg6: memref<9x32x16xf32, #tpu.memory_space<vmem>>, %arg7: memref<32x1xf32, #tpu.memory_space<vmem>>, %arg8: memref<32x1xf32, #tpu.memory_space<vmem>>, %arg9: memref<2x1x1xf32, #tpu.memory_space<vmem>>) attributes {dimension_semantics = [#tpu.dimension_semantics<arbitrary>], iteration_bounds = array<i64: 1>, scalar_prefetch = 0 : i64, scratch_operands = 0 : i64, tpu.core_type = #tpu.core_type<tc>, window_params = [{transform_indices = @transform_0, window_bounds = array<i64: 2, 16, 16, 1, 3>}, {pipeline_mode = #tpu.pipeline_mode<synchronous>, transform_indices = @transform_1, window_bounds = array<i64: 9, 8, 3>}, {pipeline_mode = #tpu.pipeline_mode<synchronous>, transform_indices = @transform_2, window_bounds = array<i64: 8, 1>}, {pipeline_mode = #tpu.pipeline_mode<synchronous>, transform_indices = @transform_3, window_bounds = array<i64: 9, 8, 16>}, {pipeline_mode = #tpu.pipeline_mode<synchronous>, transform_indices = @transform_4, window_bounds = array<i64: 1, 16>}, {pipeline_mode = #tpu.pipeline_mode<synchronous>, transform_indices = @transform_5, window_bounds = array<i64: 9, 32, 16>}, {pipeline_mode = #tpu.pipeline_mode<synchronous>, transform_indices = @transform_6, window_bounds = array<i64: 32, 1>}, {pipeline_mode = #tpu.pipeline_mode<synchronous>, transform_indices = @transform_7, window_bounds = array<i64: 32, 1>}, {transform_indices = @transform_8, window_bounds = array<i64: 2, 1, 1>}]} {
    %c0 = arith.constant 0 : index
    %c0_0 = arith.constant 0 : index
    %c0_1 = arith.constant 0 : index
    %c0_2 = arith.constant 0 : index
    %c0_3 = arith.constant 0 : index
    %0 = vector.load %arg1[%c0, %c0_0, %c0_1, %c0_2, %c0_3] : memref<2x16x16x1x3xf32, #tpu.memory_space<vmem>>, vector<2x16x16x1x3xf32>
    %1 = vector.shape_cast %0 : vector<2x16x16x1x3xf32> to vector<2x8x2x8x2x1x3xf32>
    %c0_4 = arith.constant 0 : index
    %c0_5 = arith.constant 0 : index
    %c0_6 = arith.constant 0 : index
    %2 = vector.load %arg2[%c0_4, %c0_5, %c0_6] : memref<9x8x3xf32, #tpu.memory_space<vmem>>, vector<9x8x3xf32>
    %3 = vector.extract_strided_slice %1 {offsets = [0, 0, 0, 0, 0, 0, 0], sizes = [2, 7, 1, 7, 1, 1, 3], strides = [1, 1, 1, 1, 1, 1, 1]} : vector<2x8x2x8x2x1x3xf32> to vector<2x7x1x7x1x1x3xf32>
    %4 = vector.shape_cast %3 : vector<2x7x1x7x1x1x3xf32> to vector<2x7x7x1x3xf32>
    %5 = vector.extract_strided_slice %2 {offsets = [0, 0, 0], sizes = [1, 8, 3], strides = [1, 1, 1]} : vector<9x8x3xf32> to vector<1x8x3xf32>
    %6 = vector.shape_cast %5 : vector<1x8x3xf32> to vector<8x3xf32>
    %7 = vector.shape_cast %6 : vector<8x3xf32> to vector<1x1x1x8x3xf32>
    %8 = vector.broadcast %4 : vector<2x7x7x1x3xf32> to vector<2x7x7x8x3xf32>
    %9 = vector.broadcast %7 : vector<1x1x1x8x3xf32> to vector<2x7x7x8x3xf32>
    %10 = arith.mulf %8, %9 : vector<2x7x7x8x3xf32>
    %11 = vector.extract_strided_slice %1 {offsets = [0, 0, 0, 0, 1, 0, 0], sizes = [2, 7, 1, 7, 1, 1, 3], strides = [1, 1, 1, 1, 1, 1, 1]} : vector<2x8x2x8x2x1x3xf32> to vector<2x7x1x7x1x1x3xf32>
    %12 = vector.shape_cast %11 : vector<2x7x1x7x1x1x3xf32> to vector<2x7x7x1x3xf32>
    %13 = vector.extract_strided_slice %2 {offsets = [1, 0, 0], sizes = [1, 8, 3], strides = [1, 1, 1]} : vector<9x8x3xf32> to vector<1x8x3xf32>
    %14 = vector.shape_cast %13 : vector<1x8x3xf32> to vector<8x3xf32>
    %15 = vector.shape_cast %14 : vector<8x3xf32> to vector<1x1x1x8x3xf32>
    %16 = vector.broadcast %12 : vector<2x7x7x1x3xf32> to vector<2x7x7x8x3xf32>
    %17 = vector.broadcast %15 : vector<1x1x1x8x3xf32> to vector<2x7x7x8x3xf32>
    %18 = arith.mulf %16, %17 : vector<2x7x7x8x3xf32>
    %19 = arith.addf %10, %18 : vector<2x7x7x8x3xf32>
    %20 = vector.extract_strided_slice %1 {offsets = [0, 0, 0, 1, 0, 0, 0], sizes = [2, 7, 1, 7, 1, 1, 3], strides = [1, 1, 1, 1, 1, 1, 1]} : vector<2x8x2x8x2x1x3xf32> to vector<2x7x1x7x1x1x3xf32>
    %21 = vector.shape_cast %20 : vector<2x7x1x7x1x1x3xf32> to vector<2x7x7x1x3xf32>
    %22 = vector.extract_strided_slice %2 {offsets = [2, 0, 0], sizes = [1, 8, 3], strides = [1, 1, 1]} : vector<9x8x3xf32> to vector<1x8x3xf32>
    %23 = vector.shape_cast %22 : vector<1x8x3xf32> to vector<8x3xf32>
    %24 = vector.shape_cast %23 : vector<8x3xf32> to vector<1x1x1x8x3xf32>
    %25 = vector.broadcast %21 : vector<2x7x7x1x3xf32> to vector<2x7x7x8x3xf32>
    %26 = vector.broadcast %24 : vector<1x1x1x8x3xf32> to vector<2x7x7x8x3xf32>
    %27 = arith.mulf %25, %26 : vector<2x7x7x8x3xf32>
    %28 = arith.addf %19, %27 : vector<2x7x7x8x3xf32>
    %29 = vector.extract_strided_slice %1 {offsets = [0, 0, 1, 0, 0, 0, 0], sizes = [2, 7, 1, 7, 1, 1, 3], strides = [1, 1, 1, 1, 1, 1, 1]} : vector<2x8x2x8x2x1x3xf32> to vector<2x7x1x7x1x1x3xf32>
    %30 = vector.shape_cast %29 : vector<2x7x1x7x1x1x3xf32> to vector<2x7x7x1x3xf32>
    %31 = vector.extract_strided_slice %2 {offsets = [3, 0, 0], sizes = [1, 8, 3], strides = [1, 1, 1]} : vector<9x8x3xf32> to vector<1x8x3xf32>
    %32 = vector.shape_cast %31 : vector<1x8x3xf32> to vector<8x3xf32>
    %33 = vector.shape_cast %32 : vector<8x3xf32> to vector<1x1x1x8x3xf32>
    %34 = vector.broadcast %30 : vector<2x7x7x1x3xf32> to vector<2x7x7x8x3xf32>
    %35 = vector.broadcast %33 : vector<1x1x1x8x3xf32> to vector<2x7x7x8x3xf32>
    %36 = arith.mulf %34, %35 : vector<2x7x7x8x3xf32>
    %37 = arith.addf %28, %36 : vector<2x7x7x8x3xf32>
    %38 = vector.extract_strided_slice %1 {offsets = [0, 0, 1, 0, 1, 0, 0], sizes = [2, 7, 1, 7, 1, 1, 3], strides = [1, 1, 1, 1, 1, 1, 1]} : vector<2x8x2x8x2x1x3xf32> to vector<2x7x1x7x1x1x3xf32>
    %39 = vector.shape_cast %38 : vector<2x7x1x7x1x1x3xf32> to vector<2x7x7x1x3xf32>
    %40 = vector.extract_strided_slice %2 {offsets = [4, 0, 0], sizes = [1, 8, 3], strides = [1, 1, 1]} : vector<9x8x3xf32> to vector<1x8x3xf32>
    %41 = vector.shape_cast %40 : vector<1x8x3xf32> to vector<8x3xf32>
    %42 = vector.shape_cast %41 : vector<8x3xf32> to vector<1x1x1x8x3xf32>
    %43 = vector.broadcast %39 : vector<2x7x7x1x3xf32> to vector<2x7x7x8x3xf32>
    %44 = vector.broadcast %42 : vector<1x1x1x8x3xf32> to vector<2x7x7x8x3xf32>
    %45 = arith.mulf %43, %44 : vector<2x7x7x8x3xf32>
    %46 = arith.addf %37, %45 : vector<2x7x7x8x3xf32>
    %47 = vector.extract_strided_slice %1 {offsets = [0, 0, 1, 1, 0, 0, 0], sizes = [2, 7, 1, 7, 1, 1, 3], strides = [1, 1, 1, 1, 1, 1, 1]} : vector<2x8x2x8x2x1x3xf32> to vector<2x7x1x7x1x1x3xf32>
    %48 = vector.shape_cast %47 : vector<2x7x1x7x1x1x3xf32> to vector<2x7x7x1x3xf32>
    %49 = vector.extract_strided_slice %2 {offsets = [5, 0, 0], sizes = [1, 8, 3], strides = [1, 1, 1]} : vector<9x8x3xf32> to vector<1x8x3xf32>
    %50 = vector.shape_cast %49 : vector<1x8x3xf32> to vector<8x3xf32>
    %51 = vector.shape_cast %50 : vector<8x3xf32> to vector<1x1x1x8x3xf32>
    %52 = vector.broadcast %48 : vector<2x7x7x1x3xf32> to vector<2x7x7x8x3xf32>
    %53 = vector.broadcast %51 : vector<1x1x1x8x3xf32> to vector<2x7x7x8x3xf32>
    %54 = arith.mulf %52, %53 : vector<2x7x7x8x3xf32>
    %55 = arith.addf %46, %54 : vector<2x7x7x8x3xf32>
    %56 = vector.extract_strided_slice %1 {offsets = [0, 1, 0, 0, 0, 0, 0], sizes = [2, 7, 1, 7, 1, 1, 3], strides = [1, 1, 1, 1, 1, 1, 1]} : vector<2x8x2x8x2x1x3xf32> to vector<2x7x1x7x1x1x3xf32>
    %57 = vector.shape_cast %56 : vector<2x7x1x7x1x1x3xf32> to vector<2x7x7x1x3xf32>
    %58 = vector.extract_strided_slice %2 {offsets = [6, 0, 0], sizes = [1, 8, 3], strides = [1, 1, 1]} : vector<9x8x3xf32> to vector<1x8x3xf32>
    %59 = vector.shape_cast %58 : vector<1x8x3xf32> to vector<8x3xf32>
    %60 = vector.shape_cast %59 : vector<8x3xf32> to vector<1x1x1x8x3xf32>
    %61 = vector.broadcast %57 : vector<2x7x7x1x3xf32> to vector<2x7x7x8x3xf32>
    %62 = vector.broadcast %60 : vector<1x1x1x8x3xf32> to vector<2x7x7x8x3xf32>
    %63 = arith.mulf %61, %62 : vector<2x7x7x8x3xf32>
    %64 = arith.addf %55, %63 : vector<2x7x7x8x3xf32>
    %65 = vector.extract_strided_slice %1 {offsets = [0, 1, 0, 0, 1, 0, 0], sizes = [2, 7, 1, 7, 1, 1, 3], strides = [1, 1, 1, 1, 1, 1, 1]} : vector<2x8x2x8x2x1x3xf32> to vector<2x7x1x7x1x1x3xf32>
    %66 = vector.shape_cast %65 : vector<2x7x1x7x1x1x3xf32> to vector<2x7x7x1x3xf32>
    %67 = vector.extract_strided_slice %2 {offsets = [7, 0, 0], sizes = [1, 8, 3], strides = [1, 1, 1]} : vector<9x8x3xf32> to vector<1x8x3xf32>
    %68 = vector.shape_cast %67 : vector<1x8x3xf32> to vector<8x3xf32>
    %69 = vector.shape_cast %68 : vector<8x3xf32> to vector<1x1x1x8x3xf32>
    %70 = vector.broadcast %66 : vector<2x7x7x1x3xf32> to vector<2x7x7x8x3xf32>
    %71 = vector.broadcast %69 : vector<1x1x1x8x3xf32> to vector<2x7x7x8x3xf32>
    %72 = arith.mulf %70, %71 : vector<2x7x7x8x3xf32>
    %73 = arith.addf %64, %72 : vector<2x7x7x8x3xf32>
    %74 = vector.extract_strided_slice %1 {offsets = [0, 1, 0, 1, 0, 0, 0], sizes = [2, 7, 1, 7, 1, 1, 3], strides = [1, 1, 1, 1, 1, 1, 1]} : vector<2x8x2x8x2x1x3xf32> to vector<2x7x1x7x1x1x3xf32>
    %75 = vector.shape_cast %74 : vector<2x7x1x7x1x1x3xf32> to vector<2x7x7x1x3xf32>
    %76 = vector.extract_strided_slice %2 {offsets = [8, 0, 0], sizes = [1, 8, 3], strides = [1, 1, 1]} : vector<9x8x3xf32> to vector<1x8x3xf32>
    %77 = vector.shape_cast %76 : vector<1x8x3xf32> to vector<8x3xf32>
    %78 = vector.shape_cast %77 : vector<8x3xf32> to vector<1x1x1x8x3xf32>
    %79 = vector.broadcast %75 : vector<2x7x7x1x3xf32> to vector<2x7x7x8x3xf32>
    %80 = vector.broadcast %78 : vector<1x1x1x8x3xf32> to vector<2x7x7x8x3xf32>
    %81 = arith.mulf %79, %80 : vector<2x7x7x8x3xf32>
    %82 = arith.addf %73, %81 : vector<2x7x7x8x3xf32>
    %cst = arith.constant dense<0.000000e+00> : vector<2x7x7x8xf32>
    %83 = vector.multi_reduction <add>, %82, %cst [4] : vector<2x7x7x8x3xf32> to vector<2x7x7x8xf32>
    %84 = vector.shape_cast %83 : vector<2x7x7x8xf32> to vector<2x7x7x8x1xf32>
    %c0_7 = arith.constant 0 : index
    %c0_8 = arith.constant 0 : index
    %85 = vector.load %arg3[%c0_7, %c0_8] : memref<8x1xf32, #tpu.memory_space<vmem>>, vector<8x1xf32>
    %86 = vector.shape_cast %85 : vector<8x1xf32> to vector<1x1x1x8x1xf32>
    %87 = vector.broadcast %86 : vector<1x1x1x8x1xf32> to vector<2x7x7x8x1xf32>
    %88 = arith.addf %84, %87 : vector<2x7x7x8x1xf32>
    %cst_9 = arith.constant 2.000000e-01 : f32
    %89 = vector.broadcast %cst_9 : f32 to vector<2x7x7x8x1xf32>
    %90 = arith.mulf %89, %88 : vector<2x7x7x8x1xf32>
    %91 = arith.maximumf %88, %90 : vector<2x7x7x8x1xf32>
    %cst_10 = arith.constant 0.000000e+00 : f32
    %92 = vector.broadcast %cst_10 : f32 to vector<2x1x7x8x1xf32>
    %93 = tpu.concatenate %91, %92 in 1 : vector<2x7x7x8x1xf32>, vector<2x1x7x8x1xf32> -> vector<2x8x7x8x1xf32>
    %cst_11 = arith.constant 0.000000e+00 : f32
    %94 = vector.broadcast %cst_11 : f32 to vector<2x8x1x8x1xf32>
    %95 = tpu.concatenate %93, %94 in 2 : vector<2x8x7x8x1xf32>, vector<2x8x1x8x1xf32> -> vector<2x8x8x8x1xf32>
    %96 = vector.shape_cast %95 : vector<2x8x8x8x1xf32> to vector<2x4x2x4x2x8x1xf32>
    %c0_12 = arith.constant 0 : index
    %c0_13 = arith.constant 0 : index
    %c0_14 = arith.constant 0 : index
    %97 = vector.load %arg4[%c0_12, %c0_13, %c0_14] : memref<9x8x16xf32, #tpu.memory_space<vmem>>, vector<9x8x16xf32>
    %98 = vector.extract_strided_slice %96 {offsets = [0, 0, 0, 0, 0, 0, 0], sizes = [2, 3, 1, 3, 1, 8, 1], strides = [1, 1, 1, 1, 1, 1, 1]} : vector<2x4x2x4x2x8x1xf32> to vector<2x3x1x3x1x8x1xf32>
    %99 = vector.shape_cast %98 : vector<2x3x1x3x1x8x1xf32> to vector<2x3x3x8x1xf32>
    %100 = vector.extract_strided_slice %97 {offsets = [0, 0, 0], sizes = [1, 8, 16], strides = [1, 1, 1]} : vector<9x8x16xf32> to vector<1x8x16xf32>
    %101 = vector.shape_cast %100 : vector<1x8x16xf32> to vector<8x16xf32>
    %102 = vector.shape_cast %101 : vector<8x16xf32> to vector<1x1x1x8x16xf32>
    %103 = vector.broadcast %99 : vector<2x3x3x8x1xf32> to vector<2x3x3x8x16xf32>
    %104 = vector.broadcast %102 : vector<1x1x1x8x16xf32> to vector<2x3x3x8x16xf32>
    %105 = arith.mulf %103, %104 : vector<2x3x3x8x16xf32>
    %106 = vector.extract_strided_slice %96 {offsets = [0, 0, 0, 0, 1, 0, 0], sizes = [2, 3, 1, 3, 1, 8, 1], strides = [1, 1, 1, 1, 1, 1, 1]} : vector<2x4x2x4x2x8x1xf32> to vector<2x3x1x3x1x8x1xf32>
    %107 = vector.shape_cast %106 : vector<2x3x1x3x1x8x1xf32> to vector<2x3x3x8x1xf32>
    %108 = vector.extract_strided_slice %97 {offsets = [1, 0, 0], sizes = [1, 8, 16], strides = [1, 1, 1]} : vector<9x8x16xf32> to vector<1x8x16xf32>
    %109 = vector.shape_cast %108 : vector<1x8x16xf32> to vector<8x16xf32>
    %110 = vector.shape_cast %109 : vector<8x16xf32> to vector<1x1x1x8x16xf32>
    %111 = vector.broadcast %107 : vector<2x3x3x8x1xf32> to vector<2x3x3x8x16xf32>
    %112 = vector.broadcast %110 : vector<1x1x1x8x16xf32> to vector<2x3x3x8x16xf32>
    %113 = arith.mulf %111, %112 : vector<2x3x3x8x16xf32>
    %114 = arith.addf %105, %113 : vector<2x3x3x8x16xf32>
    %115 = vector.extract_strided_slice %96 {offsets = [0, 0, 0, 1, 0, 0, 0], sizes = [2, 3, 1, 3, 1, 8, 1], strides = [1, 1, 1, 1, 1, 1, 1]} : vector<2x4x2x4x2x8x1xf32> to vector<2x3x1x3x1x8x1xf32>
    %116 = vector.shape_cast %115 : vector<2x3x1x3x1x8x1xf32> to vector<2x3x3x8x1xf32>
    %117 = vector.extract_strided_slice %97 {offsets = [2, 0, 0], sizes = [1, 8, 16], strides = [1, 1, 1]} : vector<9x8x16xf32> to vector<1x8x16xf32>
    %118 = vector.shape_cast %117 : vector<1x8x16xf32> to vector<8x16xf32>
    %119 = vector.shape_cast %118 : vector<8x16xf32> to vector<1x1x1x8x16xf32>
    %120 = vector.broadcast %116 : vector<2x3x3x8x1xf32> to vector<2x3x3x8x16xf32>
    %121 = vector.broadcast %119 : vector<1x1x1x8x16xf32> to vector<2x3x3x8x16xf32>
    %122 = arith.mulf %120, %121 : vector<2x3x3x8x16xf32>
    %123 = arith.addf %114, %122 : vector<2x3x3x8x16xf32>
    %124 = vector.extract_strided_slice %96 {offsets = [0, 0, 1, 0, 0, 0, 0], sizes = [2, 3, 1, 3, 1, 8, 1], strides = [1, 1, 1, 1, 1, 1, 1]} : vector<2x4x2x4x2x8x1xf32> to vector<2x3x1x3x1x8x1xf32>
    %125 = vector.shape_cast %124 : vector<2x3x1x3x1x8x1xf32> to vector<2x3x3x8x1xf32>
    %126 = vector.extract_strided_slice %97 {offsets = [3, 0, 0], sizes = [1, 8, 16], strides = [1, 1, 1]} : vector<9x8x16xf32> to vector<1x8x16xf32>
    %127 = vector.shape_cast %126 : vector<1x8x16xf32> to vector<8x16xf32>
    %128 = vector.shape_cast %127 : vector<8x16xf32> to vector<1x1x1x8x16xf32>
    %129 = vector.broadcast %125 : vector<2x3x3x8x1xf32> to vector<2x3x3x8x16xf32>
    %130 = vector.broadcast %128 : vector<1x1x1x8x16xf32> to vector<2x3x3x8x16xf32>
    %131 = arith.mulf %129, %130 : vector<2x3x3x8x16xf32>
    %132 = arith.addf %123, %131 : vector<2x3x3x8x16xf32>
    %133 = vector.extract_strided_slice %96 {offsets = [0, 0, 1, 0, 1, 0, 0], sizes = [2, 3, 1, 3, 1, 8, 1], strides = [1, 1, 1, 1, 1, 1, 1]} : vector<2x4x2x4x2x8x1xf32> to vector<2x3x1x3x1x8x1xf32>
    %134 = vector.shape_cast %133 : vector<2x3x1x3x1x8x1xf32> to vector<2x3x3x8x1xf32>
    %135 = vector.extract_strided_slice %97 {offsets = [4, 0, 0], sizes = [1, 8, 16], strides = [1, 1, 1]} : vector<9x8x16xf32> to vector<1x8x16xf32>
    %136 = vector.shape_cast %135 : vector<1x8x16xf32> to vector<8x16xf32>
    %137 = vector.shape_cast %136 : vector<8x16xf32> to vector<1x1x1x8x16xf32>
    %138 = vector.broadcast %134 : vector<2x3x3x8x1xf32> to vector<2x3x3x8x16xf32>
    %139 = vector.broadcast %137 : vector<1x1x1x8x16xf32> to vector<2x3x3x8x16xf32>
    %140 = arith.mulf %138, %139 : vector<2x3x3x8x16xf32>
    %141 = arith.addf %132, %140 : vector<2x3x3x8x16xf32>
    %142 = vector.extract_strided_slice %96 {offsets = [0, 0, 1, 1, 0, 0, 0], sizes = [2, 3, 1, 3, 1, 8, 1], strides = [1, 1, 1, 1, 1, 1, 1]} : vector<2x4x2x4x2x8x1xf32> to vector<2x3x1x3x1x8x1xf32>
    %143 = vector.shape_cast %142 : vector<2x3x1x3x1x8x1xf32> to vector<2x3x3x8x1xf32>
    %144 = vector.extract_strided_slice %97 {offsets = [5, 0, 0], sizes = [1, 8, 16], strides = [1, 1, 1]} : vector<9x8x16xf32> to vector<1x8x16xf32>
    %145 = vector.shape_cast %144 : vector<1x8x16xf32> to vector<8x16xf32>
    %146 = vector.shape_cast %145 : vector<8x16xf32> to vector<1x1x1x8x16xf32>
    %147 = vector.broadcast %143 : vector<2x3x3x8x1xf32> to vector<2x3x3x8x16xf32>
    %148 = vector.broadcast %146 : vector<1x1x1x8x16xf32> to vector<2x3x3x8x16xf32>
    %149 = arith.mulf %147, %148 : vector<2x3x3x8x16xf32>
    %150 = arith.addf %141, %149 : vector<2x3x3x8x16xf32>
    %151 = vector.extract_strided_slice %96 {offsets = [0, 1, 0, 0, 0, 0, 0], sizes = [2, 3, 1, 3, 1, 8, 1], strides = [1, 1, 1, 1, 1, 1, 1]} : vector<2x4x2x4x2x8x1xf32> to vector<2x3x1x3x1x8x1xf32>
    %152 = vector.shape_cast %151 : vector<2x3x1x3x1x8x1xf32> to vector<2x3x3x8x1xf32>
    %153 = vector.extract_strided_slice %97 {offsets = [6, 0, 0], sizes = [1, 8, 16], strides = [1, 1, 1]} : vector<9x8x16xf32> to vector<1x8x16xf32>
    %154 = vector.shape_cast %153 : vector<1x8x16xf32> to vector<8x16xf32>
    %155 = vector.shape_cast %154 : vector<8x16xf32> to vector<1x1x1x8x16xf32>
    %156 = vector.broadcast %152 : vector<2x3x3x8x1xf32> to vector<2x3x3x8x16xf32>
    %157 = vector.broadcast %155 : vector<1x1x1x8x16xf32> to vector<2x3x3x8x16xf32>
    %158 = arith.mulf %156, %157 : vector<2x3x3x8x16xf32>
    %159 = arith.addf %150, %158 : vector<2x3x3x8x16xf32>
    %160 = vector.extract_strided_slice %96 {offsets = [0, 1, 0, 0, 1, 0, 0], sizes = [2, 3, 1, 3, 1, 8, 1], strides = [1, 1, 1, 1, 1, 1, 1]} : vector<2x4x2x4x2x8x1xf32> to vector<2x3x1x3x1x8x1xf32>
    %161 = vector.shape_cast %160 : vector<2x3x1x3x1x8x1xf32> to vector<2x3x3x8x1xf32>
    %162 = vector.extract_strided_slice %97 {offsets = [7, 0, 0], sizes = [1, 8, 16], strides = [1, 1, 1]} : vector<9x8x16xf32> to vector<1x8x16xf32>
    %163 = vector.shape_cast %162 : vector<1x8x16xf32> to vector<8x16xf32>
    %164 = vector.shape_cast %163 : vector<8x16xf32> to vector<1x1x1x8x16xf32>
    %165 = vector.broadcast %161 : vector<2x3x3x8x1xf32> to vector<2x3x3x8x16xf32>
    %166 = vector.broadcast %164 : vector<1x1x1x8x16xf32> to vector<2x3x3x8x16xf32>
    %167 = arith.mulf %165, %166 : vector<2x3x3x8x16xf32>
    %168 = arith.addf %159, %167 : vector<2x3x3x8x16xf32>
    %169 = vector.extract_strided_slice %96 {offsets = [0, 1, 0, 1, 0, 0, 0], sizes = [2, 3, 1, 3, 1, 8, 1], strides = [1, 1, 1, 1, 1, 1, 1]} : vector<2x4x2x4x2x8x1xf32> to vector<2x3x1x3x1x8x1xf32>
    %170 = vector.shape_cast %169 : vector<2x3x1x3x1x8x1xf32> to vector<2x3x3x8x1xf32>
    %171 = vector.extract_strided_slice %97 {offsets = [8, 0, 0], sizes = [1, 8, 16], strides = [1, 1, 1]} : vector<9x8x16xf32> to vector<1x8x16xf32>
    %172 = vector.shape_cast %171 : vector<1x8x16xf32> to vector<8x16xf32>
    %173 = vector.shape_cast %172 : vector<8x16xf32> to vector<1x1x1x8x16xf32>
    %174 = vector.broadcast %170 : vector<2x3x3x8x1xf32> to vector<2x3x3x8x16xf32>
    %175 = vector.broadcast %173 : vector<1x1x1x8x16xf32> to vector<2x3x3x8x16xf32>
    %176 = arith.mulf %174, %175 : vector<2x3x3x8x16xf32>
    %177 = arith.addf %168, %176 : vector<2x3x3x8x16xf32>
    %cst_15 = arith.constant dense<0.000000e+00> : vector<2x3x3x16xf32>
    %178 = vector.multi_reduction <add>, %177, %cst_15 [3] : vector<2x3x3x8x16xf32> to vector<2x3x3x16xf32>
    %179 = vector.shape_cast %178 : vector<2x3x3x16xf32> to vector<2x3x3x1x16xf32>
    %c0_16 = arith.constant 0 : index
    %c0_17 = arith.constant 0 : index
    %180 = vector.load %arg5[%c0_16, %c0_17] : memref<1x16xf32, #tpu.memory_space<vmem>>, vector<1x16xf32>
    %181 = vector.shape_cast %180 : vector<1x16xf32> to vector<1x1x1x1x16xf32>
    %182 = vector.broadcast %181 : vector<1x1x1x1x16xf32> to vector<2x3x3x1x16xf32>
    %183 = arith.addf %179, %182 : vector<2x3x3x1x16xf32>
    %cst_18 = arith.constant 2.000000e-01 : f32
    %184 = vector.broadcast %cst_18 : f32 to vector<2x3x3x1x16xf32>
    %185 = arith.mulf %184, %183 : vector<2x3x3x1x16xf32>
    %186 = arith.maximumf %183, %185 : vector<2x3x3x1x16xf32>
    %cst_19 = arith.constant 0.000000e+00 : f32
    %187 = vector.broadcast %cst_19 : f32 to vector<2x1x3x1x16xf32>
    %188 = tpu.concatenate %186, %187 in 1 : vector<2x3x3x1x16xf32>, vector<2x1x3x1x16xf32> -> vector<2x4x3x1x16xf32>
    %cst_20 = arith.constant 0.000000e+00 : f32
    %189 = vector.broadcast %cst_20 : f32 to vector<2x4x1x1x16xf32>
    %190 = tpu.concatenate %188, %189 in 2 : vector<2x4x3x1x16xf32>, vector<2x4x1x1x16xf32> -> vector<2x4x4x1x16xf32>
    %191 = vector.shape_cast %190 : vector<2x4x4x1x16xf32> to vector<2x2x2x2x2x1x16xf32>
    %c0_21 = arith.constant 0 : index
    %c0_22 = arith.constant 0 : index
    %c0_23 = arith.constant 0 : index
    %192 = vector.load %arg6[%c0_21, %c0_22, %c0_23] : memref<9x32x16xf32, #tpu.memory_space<vmem>>, vector<9x32x16xf32>
    %193 = vector.extract_strided_slice %191 {offsets = [0, 0, 0, 0, 0, 0, 0], sizes = [2, 1, 1, 1, 1, 1, 16], strides = [1, 1, 1, 1, 1, 1, 1]} : vector<2x2x2x2x2x1x16xf32> to vector<2x1x1x1x1x1x16xf32>
    %194 = vector.shape_cast %193 : vector<2x1x1x1x1x1x16xf32> to vector<2x1x1x1x16xf32>
    %195 = vector.extract_strided_slice %192 {offsets = [0, 0, 0], sizes = [1, 32, 16], strides = [1, 1, 1]} : vector<9x32x16xf32> to vector<1x32x16xf32>
    %196 = vector.shape_cast %195 : vector<1x32x16xf32> to vector<32x16xf32>
    %197 = vector.shape_cast %196 : vector<32x16xf32> to vector<1x1x1x32x16xf32>
    %198 = vector.broadcast %194 : vector<2x1x1x1x16xf32> to vector<2x1x1x32x16xf32>
    %199 = vector.broadcast %197 : vector<1x1x1x32x16xf32> to vector<2x1x1x32x16xf32>
    %200 = arith.mulf %198, %199 : vector<2x1x1x32x16xf32>
    %201 = vector.extract_strided_slice %191 {offsets = [0, 0, 0, 0, 1, 0, 0], sizes = [2, 1, 1, 1, 1, 1, 16], strides = [1, 1, 1, 1, 1, 1, 1]} : vector<2x2x2x2x2x1x16xf32> to vector<2x1x1x1x1x1x16xf32>
    %202 = vector.shape_cast %201 : vector<2x1x1x1x1x1x16xf32> to vector<2x1x1x1x16xf32>
    %203 = vector.extract_strided_slice %192 {offsets = [1, 0, 0], sizes = [1, 32, 16], strides = [1, 1, 1]} : vector<9x32x16xf32> to vector<1x32x16xf32>
    %204 = vector.shape_cast %203 : vector<1x32x16xf32> to vector<32x16xf32>
    %205 = vector.shape_cast %204 : vector<32x16xf32> to vector<1x1x1x32x16xf32>
    %206 = vector.broadcast %202 : vector<2x1x1x1x16xf32> to vector<2x1x1x32x16xf32>
    %207 = vector.broadcast %205 : vector<1x1x1x32x16xf32> to vector<2x1x1x32x16xf32>
    %208 = arith.mulf %206, %207 : vector<2x1x1x32x16xf32>
    %209 = arith.addf %200, %208 : vector<2x1x1x32x16xf32>
    %210 = vector.extract_strided_slice %191 {offsets = [0, 0, 0, 1, 0, 0, 0], sizes = [2, 1, 1, 1, 1, 1, 16], strides = [1, 1, 1, 1, 1, 1, 1]} : vector<2x2x2x2x2x1x16xf32> to vector<2x1x1x1x1x1x16xf32>
    %211 = vector.shape_cast %210 : vector<2x1x1x1x1x1x16xf32> to vector<2x1x1x1x16xf32>
    %212 = vector.extract_strided_slice %192 {offsets = [2, 0, 0], sizes = [1, 32, 16], strides = [1, 1, 1]} : vector<9x32x16xf32> to vector<1x32x16xf32>
    %213 = vector.shape_cast %212 : vector<1x32x16xf32> to vector<32x16xf32>
    %214 = vector.shape_cast %213 : vector<32x16xf32> to vector<1x1x1x32x16xf32>
    %215 = vector.broadcast %211 : vector<2x1x1x1x16xf32> to vector<2x1x1x32x16xf32>
    %216 = vector.broadcast %214 : vector<1x1x1x32x16xf32> to vector<2x1x1x32x16xf32>
    %217 = arith.mulf %215, %216 : vector<2x1x1x32x16xf32>
    %218 = arith.addf %209, %217 : vector<2x1x1x32x16xf32>
    %219 = vector.extract_strided_slice %191 {offsets = [0, 0, 1, 0, 0, 0, 0], sizes = [2, 1, 1, 1, 1, 1, 16], strides = [1, 1, 1, 1, 1, 1, 1]} : vector<2x2x2x2x2x1x16xf32> to vector<2x1x1x1x1x1x16xf32>
    %220 = vector.shape_cast %219 : vector<2x1x1x1x1x1x16xf32> to vector<2x1x1x1x16xf32>
    %221 = vector.extract_strided_slice %192 {offsets = [3, 0, 0], sizes = [1, 32, 16], strides = [1, 1, 1]} : vector<9x32x16xf32> to vector<1x32x16xf32>
    %222 = vector.shape_cast %221 : vector<1x32x16xf32> to vector<32x16xf32>
    %223 = vector.shape_cast %222 : vector<32x16xf32> to vector<1x1x1x32x16xf32>
    %224 = vector.broadcast %220 : vector<2x1x1x1x16xf32> to vector<2x1x1x32x16xf32>
    %225 = vector.broadcast %223 : vector<1x1x1x32x16xf32> to vector<2x1x1x32x16xf32>
    %226 = arith.mulf %224, %225 : vector<2x1x1x32x16xf32>
    %227 = arith.addf %218, %226 : vector<2x1x1x32x16xf32>
    %228 = vector.extract_strided_slice %191 {offsets = [0, 0, 1, 0, 1, 0, 0], sizes = [2, 1, 1, 1, 1, 1, 16], strides = [1, 1, 1, 1, 1, 1, 1]} : vector<2x2x2x2x2x1x16xf32> to vector<2x1x1x1x1x1x16xf32>
    %229 = vector.shape_cast %228 : vector<2x1x1x1x1x1x16xf32> to vector<2x1x1x1x16xf32>
    %230 = vector.extract_strided_slice %192 {offsets = [4, 0, 0], sizes = [1, 32, 16], strides = [1, 1, 1]} : vector<9x32x16xf32> to vector<1x32x16xf32>
    %231 = vector.shape_cast %230 : vector<1x32x16xf32> to vector<32x16xf32>
    %232 = vector.shape_cast %231 : vector<32x16xf32> to vector<1x1x1x32x16xf32>
    %233 = vector.broadcast %229 : vector<2x1x1x1x16xf32> to vector<2x1x1x32x16xf32>
    %234 = vector.broadcast %232 : vector<1x1x1x32x16xf32> to vector<2x1x1x32x16xf32>
    %235 = arith.mulf %233, %234 : vector<2x1x1x32x16xf32>
    %236 = arith.addf %227, %235 : vector<2x1x1x32x16xf32>
    %237 = vector.extract_strided_slice %191 {offsets = [0, 0, 1, 1, 0, 0, 0], sizes = [2, 1, 1, 1, 1, 1, 16], strides = [1, 1, 1, 1, 1, 1, 1]} : vector<2x2x2x2x2x1x16xf32> to vector<2x1x1x1x1x1x16xf32>
    %238 = vector.shape_cast %237 : vector<2x1x1x1x1x1x16xf32> to vector<2x1x1x1x16xf32>
    %239 = vector.extract_strided_slice %192 {offsets = [5, 0, 0], sizes = [1, 32, 16], strides = [1, 1, 1]} : vector<9x32x16xf32> to vector<1x32x16xf32>
    %240 = vector.shape_cast %239 : vector<1x32x16xf32> to vector<32x16xf32>
    %241 = vector.shape_cast %240 : vector<32x16xf32> to vector<1x1x1x32x16xf32>
    %242 = vector.broadcast %238 : vector<2x1x1x1x16xf32> to vector<2x1x1x32x16xf32>
    %243 = vector.broadcast %241 : vector<1x1x1x32x16xf32> to vector<2x1x1x32x16xf32>
    %244 = arith.mulf %242, %243 : vector<2x1x1x32x16xf32>
    %245 = arith.addf %236, %244 : vector<2x1x1x32x16xf32>
    %246 = vector.extract_strided_slice %191 {offsets = [0, 1, 0, 0, 0, 0, 0], sizes = [2, 1, 1, 1, 1, 1, 16], strides = [1, 1, 1, 1, 1, 1, 1]} : vector<2x2x2x2x2x1x16xf32> to vector<2x1x1x1x1x1x16xf32>
    %247 = vector.shape_cast %246 : vector<2x1x1x1x1x1x16xf32> to vector<2x1x1x1x16xf32>
    %248 = vector.extract_strided_slice %192 {offsets = [6, 0, 0], sizes = [1, 32, 16], strides = [1, 1, 1]} : vector<9x32x16xf32> to vector<1x32x16xf32>
    %249 = vector.shape_cast %248 : vector<1x32x16xf32> to vector<32x16xf32>
    %250 = vector.shape_cast %249 : vector<32x16xf32> to vector<1x1x1x32x16xf32>
    %251 = vector.broadcast %247 : vector<2x1x1x1x16xf32> to vector<2x1x1x32x16xf32>
    %252 = vector.broadcast %250 : vector<1x1x1x32x16xf32> to vector<2x1x1x32x16xf32>
    %253 = arith.mulf %251, %252 : vector<2x1x1x32x16xf32>
    %254 = arith.addf %245, %253 : vector<2x1x1x32x16xf32>
    %255 = vector.extract_strided_slice %191 {offsets = [0, 1, 0, 0, 1, 0, 0], sizes = [2, 1, 1, 1, 1, 1, 16], strides = [1, 1, 1, 1, 1, 1, 1]} : vector<2x2x2x2x2x1x16xf32> to vector<2x1x1x1x1x1x16xf32>
    %256 = vector.shape_cast %255 : vector<2x1x1x1x1x1x16xf32> to vector<2x1x1x1x16xf32>
    %257 = vector.extract_strided_slice %192 {offsets = [7, 0, 0], sizes = [1, 32, 16], strides = [1, 1, 1]} : vector<9x32x16xf32> to vector<1x32x16xf32>
    %258 = vector.shape_cast %257 : vector<1x32x16xf32> to vector<32x16xf32>
    %259 = vector.shape_cast %258 : vector<32x16xf32> to vector<1x1x1x32x16xf32>
    %260 = vector.broadcast %256 : vector<2x1x1x1x16xf32> to vector<2x1x1x32x16xf32>
    %261 = vector.broadcast %259 : vector<1x1x1x32x16xf32> to vector<2x1x1x32x16xf32>
    %262 = arith.mulf %260, %261 : vector<2x1x1x32x16xf32>
    %263 = arith.addf %254, %262 : vector<2x1x1x32x16xf32>
    %264 = vector.extract_strided_slice %191 {offsets = [0, 1, 0, 1, 0, 0, 0], sizes = [2, 1, 1, 1, 1, 1, 16], strides = [1, 1, 1, 1, 1, 1, 1]} : vector<2x2x2x2x2x1x16xf32> to vector<2x1x1x1x1x1x16xf32>
    %265 = vector.shape_cast %264 : vector<2x1x1x1x1x1x16xf32> to vector<2x1x1x1x16xf32>
    %266 = vector.extract_strided_slice %192 {offsets = [8, 0, 0], sizes = [1, 32, 16], strides = [1, 1, 1]} : vector<9x32x16xf32> to vector<1x32x16xf32>
    %267 = vector.shape_cast %266 : vector<1x32x16xf32> to vector<32x16xf32>
    %268 = vector.shape_cast %267 : vector<32x16xf32> to vector<1x1x1x32x16xf32>
    %269 = vector.broadcast %265 : vector<2x1x1x1x16xf32> to vector<2x1x1x32x16xf32>
    %270 = vector.broadcast %268 : vector<1x1x1x32x16xf32> to vector<2x1x1x32x16xf32>
    %271 = arith.mulf %269, %270 : vector<2x1x1x32x16xf32>
    %272 = arith.addf %263, %271 : vector<2x1x1x32x16xf32>
    %cst_24 = arith.constant dense<0.000000e+00> : vector<2x1x1x32xf32>
    %273 = vector.multi_reduction <add>, %272, %cst_24 [4] : vector<2x1x1x32x16xf32> to vector<2x1x1x32xf32>
    %274 = vector.shape_cast %273 : vector<2x1x1x32xf32> to vector<2x1x1x32x1xf32>
    %c0_25 = arith.constant 0 : index
    %c0_26 = arith.constant 0 : index
    %275 = vector.load %arg7[%c0_25, %c0_26] : memref<32x1xf32, #tpu.memory_space<vmem>>, vector<32x1xf32>
    %276 = vector.shape_cast %275 : vector<32x1xf32> to vector<1x1x1x32x1xf32>
    %277 = vector.broadcast %276 : vector<1x1x1x32x1xf32> to vector<2x1x1x32x1xf32>
    %278 = arith.addf %274, %277 : vector<2x1x1x32x1xf32>
    %cst_27 = arith.constant 2.000000e-01 : f32
    %279 = vector.broadcast %cst_27 : f32 to vector<2x1x1x32x1xf32>
    %280 = arith.mulf %279, %278 : vector<2x1x1x32x1xf32>
    %281 = arith.maximumf %278, %280 : vector<2x1x1x32x1xf32>
    %cst_28 = arith.constant dense<0.000000e+00> : vector<2x1x32x1xf32>
    %282 = vector.multi_reduction <add>, %281, %cst_28 [1] : vector<2x1x1x32x1xf32> to vector<2x1x32x1xf32>
    %cst_29 = arith.constant dense<0.000000e+00> : vector<2x32x1xf32>
    %283 = vector.multi_reduction <add>, %282, %cst_29 [1] : vector<2x1x32x1xf32> to vector<2x32x1xf32>
    %cst_30 = arith.constant 1.000000e+00 : f32
    %284 = vector.broadcast %cst_30 : f32 to vector<2x32x1xf32>
    %285 = arith.mulf %283, %284 : vector<2x32x1xf32>
    %c0_31 = arith.constant 0 : index
    %c0_32 = arith.constant 0 : index
    %286 = vector.load %arg8[%c0_31, %c0_32] : memref<32x1xf32, #tpu.memory_space<vmem>>, vector<32x1xf32>
    %287 = vector.shape_cast %286 : vector<32x1xf32> to vector<1x32x1xf32>
    %288 = vector.broadcast %287 : vector<1x32x1xf32> to vector<2x32x1xf32>
    %289 = arith.mulf %285, %288 : vector<2x32x1xf32>
    %cst_33 = arith.constant dense<0.000000e+00> : vector<2x1xf32>
    %290 = vector.multi_reduction <add>, %289, %cst_33 [1] : vector<2x32x1xf32> to vector<2x1xf32>
    %291 = vector.shape_cast %290 : vector<2x1xf32> to vector<2x1x1xf32>
    %c0_34 = arith.constant 0 : index
    %c0_35 = arith.constant 0 : index
    %c0_36 = arith.constant 0 : index
    %292 = vector.load %arg9[%c0_34, %c0_35, %c0_36] : memref<2x1x1xf32, #tpu.memory_space<vmem>>, vector<2x1x1xf32>
    tpu.vector_store %arg9[%c0_34, %c0_35, %c0_36], %291 {strides = array<i32>} : memref<2x1x1xf32, #tpu.memory_space<vmem>>, vector<2x1x1xf32>,
    return
  }
  func.func @transform_0(%arg0: i32) -> (i32, i32, i32, i32, i32) {
    %c0_i32 = arith.constant 0 : i32
    %c0_i32_0 = arith.constant 0 : i32
    %c0_i32_1 = arith.constant 0 : i32
    %c0_i32_2 = arith.constant 0 : i32
    %c0_i32_3 = arith.constant 0 : i32
    return %arg0, %c0_i32, %c0_i32_0, %c0_i32_1, %c0_i32_2 : i32, i32, i32, i32, i32
  }
  func.func @transform_1(%arg0: i32) -> (i32, i32, i32) {
    %c0_i32 = arith.constant 0 : i32
    %c0_i32_0 = arith.constant 0 : i32
    %c0_i32_1 = arith.constant 0 : i32
    %c0_i32_2 = arith.constant 0 : i32
    return %c0_i32, %c0_i32_0, %c0_i32_1 : i32, i32, i32
  }
  func.func @transform_2(%arg0: i32) -> (i32, i32) {
    %c0_i32 = arith.constant 0 : i32
    %c0_i32_0 = arith.constant 0 : i32
    %c0_i32_1 = arith.constant 0 : i32
    return %c0_i32, %c0_i32_0 : i32, i32
  }
  func.func @transform_3(%arg0: i32) -> (i32, i32, i32) {
    %c0_i32 = arith.constant 0 : i32
    %c0_i32_0 = arith.constant 0 : i32
    %c0_i32_1 = arith.constant 0 : i32
    %c0_i32_2 = arith.constant 0 : i32
    return %c0_i32, %c0_i32_0, %c0_i32_1 : i32, i32, i32
  }
  func.func @transform_4(%arg0: i32) -> (i32, i32) {
    %c0_i32 = arith.constant 0 : i32
    %c0_i32_0 = arith.constant 0 : i32
    %c0_i32_1 = arith.constant 0 : i32
    return %c0_i32, %c0_i32_0 : i32, i32
  }
  func.func @transform_5(%arg0: i32) -> (i32, i32, i32) {
    %c0_i32 = arith.constant 0 : i32
    %c0_i32_0 = arith.constant 0 : i32
    %c0_i32_1 = arith.constant 0 : i32
    %c0_i32_2 = arith.constant 0 : i32
    return %c0_i32, %c0_i32_0, %c0_i32_1 : i32, i32, i32
  }
  func.func @transform_6(%arg0: i32) -> (i32, i32) {
    %c0_i32 = arith.constant 0 : i32
    %c0_i32_0 = arith.constant 0 : i32
    %c0_i32_1 = arith.constant 0 : i32
    return %c0_i32, %c0_i32_0 : i32, i32
  }
  func.func @transform_7(%arg0: i32) -> (i32, i32) {
    %c0_i32 = arith.constant 0 : i32
    %c0_i32_0 = arith.constant 0 : i32
    %c0_i32_1 = arith.constant 0 : i32
    return %c0_i32, %c0_i32_0 : i32, i32
  }
  func.func @transform_8(%arg0: i32) -> (i32, i32, i32) {
    %c0_i32 = arith.constant 0 : i32
    %c0_i32_0 = arith.constant 0 : i32
    %c0_i32_1 = arith.constant 0 : i32
    return %arg0, %c0_i32, %c0_i32_0 : i32, i32, i32
  }
}

</mosaic_0001>

<llo_original>
// kernel: tpu_custom_call.1
$region0: #{tpu_custom_call.1}
  #allocation0 [shape = 'u32[]', space=smem, size = 0x4, offset = 0x4, fixed_abs, tag = 'smem constant byte address 0x4 - core index']
  #allocation1 [shape = 'u32[144,128]{1,0:T(1,128)}', space=vmem, size = 0x12000, scoped, tag = 'internal scratch']
  %s0 = inlined_call_operand.vmem [shape: f32[2,16,16,1,3], index: 0, kind: input, shape index: {}]
  %s1 = inlined_call_operand.vmem [shape: f32[9,8,3], index: 1, kind: input, shape index: {}]
  %s2 = inlined_call_operand.vmem [shape: f32[8,1], index: 2, kind: input, shape index: {}]
  %s3 = inlined_call_operand.vmem [shape: f32[9,8,16], index: 3, kind: input, shape index: {}]
  %s4 = inlined_call_operand.vmem [shape: f32[1,16], index: 4, kind: input, shape index: {}]
  %s5 = inlined_call_operand.vmem [shape: f32[9,32,16], index: 5, kind: input, shape index: {}]
  %s6 = inlined_call_operand.vmem [shape: f32[32,1], index: 6, kind: input, shape index: {}]
  %s7 = inlined_call_operand.vmem [shape: f32[32,1], index: 7, kind: input, shape index: {}]
  %s8 = inlined_call_operand.vmem [shape: f32[2,1,1], index: 8, kind: output, shape index: {}]
  %s9 = sld [smem:[#allocation0]]
  $region42: #{tpu_custom_call.1} parent=0
    _
  %s11 = ssub.s32 1, %s9
  %s12 = scalar_select 0, %s11, %s9
  // Predicated region
  $region2: #{tpu_custom_call.1} parent=0 // pred_check
    _
  $region3: #{tpu_custom_call.1} parent=0 // pred_check_branch
    %14 = sbr.rel (0) target = $region5
  $region4: #{tpu_custom_call.1} parent=0 // pred_region
    _
  $region5: #{tpu_custom_call.1} parent=0 // pred_fallthru
    _
  // Predicated region
  $region6: #{tpu_custom_call.1} parent=0 // pred_check
    _
  $region7: #{tpu_custom_call.1} parent=0 // pred_check_branch
    %16 = sbr.rel (0) target = $region9
  $region8: #{tpu_custom_call.1} parent=0 // pred_region
    _
  $region9: #{tpu_custom_call.1} parent=0 // pred_fallthru
    _
  // Predicated region
  $region10: #{tpu_custom_call.1} parent=0 // pred_check
    _
  $region11: #{tpu_custom_call.1} parent=0 // pred_check_branch
    %18 = sbr.rel (0) target = $region13
  $region12: #{tpu_custom_call.1} parent=0 // pred_region
    _
  $region13: #{tpu_custom_call.1} parent=0 // pred_fallthru
    _
  // Predicated region
  $region14: #{tpu_custom_call.1} parent=0 // pred_check
    _
  $region15: #{tpu_custom_call.1} parent=0 // pred_check_branch
    %20 = sbr.rel (0) target = $region17
  $region16: #{tpu_custom_call.1} parent=0 // pred_region
    _
  $region17: #{tpu_custom_call.1} parent=0 // pred_fallthru
    _
  // Predicated region
  $region18: #{tpu_custom_call.1} parent=0 // pred_check
    _
  $region19: #{tpu_custom_call.1} parent=0 // pred_check_branch
    %22 = sbr.rel (0) target = $region21
  $region20: #{tpu_custom_call.1} parent=0 // pred_region
    _
  $region21: #{tpu_custom_call.1} parent=0 // pred_fallthru
    _
  // Predicated region
  $region22: #{tpu_custom_call.1} parent=0 // pred_check
    _
  $region23: #{tpu_custom_call.1} parent=0 // pred_check_branch
    %24 = sbr.rel (0) target = $region25
  $region24: #{tpu_custom_call.1} parent=0 // pred_region
    _
  $region25: #{tpu_custom_call.1} parent=0 // pred_fallthru
    _
  // Predicated region
  $region26: #{tpu_custom_call.1} parent=0 // pred_check
    _
  $region27: #{tpu_custom_call.1} parent=0 // pred_check_branch
    %26 = sbr.rel (0) target = $region29
  $region28: #{tpu_custom_call.1} parent=0 // pred_region
    _
  $region29: #{tpu_custom_call.1} parent=0 // pred_fallthru
    _
  // Predicated region
  $region30: #{tpu_custom_call.1} parent=0 // pred_check
    _
  $region31: #{tpu_custom_call.1} parent=0 // pred_check_branch
    %28 = sbr.rel (0) target = $region33
  $region32: #{tpu_custom_call.1} parent=0 // pred_region
    _
  $region33: #{tpu_custom_call.1} parent=0 // pred_fallthru
    _
  %v29 = vld [vmem:[%s0] sm:$0x1]
  %v30 = vld [vmem:[%s0 + $0x1] sm:$0x1]
  %v31 = vld [vmem:[%s0 + $0x2] sm:$0x1]
  %v32 = vld [vmem:[%s0 + $0x3] sm:$0x1]
  %v33 = vld [vmem:[%s0 + $0x4] sm:$0x1]
  %v34 = vld [vmem:[%s0 + $0x5] sm:$0x1]
  %v35 = vld [vmem:[%s0 + $0x6] sm:$0x1]
  %v36 = vld [vmem:[%s0 + $0x7] sm:$0x1]
  %v37 = vld [vmem:[%s0 + $0x8] sm:$0x1]
  %v38 = vld [vmem:[%s0 + $0x9] sm:$0x1]
  %v39 = vld [vmem:[%s0 + $0xa] sm:$0x1]
  %v40 = vld [vmem:[%s0 + $0xb] sm:$0x1]
  %v41 = vld [vmem:[%s0 + $0xc] sm:$0x1]
  %v42 = vld [vmem:[%s0 + $0xd] sm:$0x1]
  %v43 = vld [vmem:[%s0 + $0xe] sm:$0x1]
  %v44 = vld [vmem:[%s0 + $0x10] sm:$0x1]
  %v45 = vld [vmem:[%s0 + $0x11] sm:$0x1]
  %v46 = vld [vmem:[%s0 + $0x12] sm:$0x1]
  %v47 = vld [vmem:[%s0 + $0x13] sm:$0x1]
  %v48 = vld [vmem:[%s0 + $0x14] sm:$0x1]
  %v49 = vld [vmem:[%s0 + $0x15] sm:$0x1]
  %v50 = vld [vmem:[%s0 + $0x16] sm:$0x1]
  %v51 = vld [vmem:[%s0 + $0x17] sm:$0x1]
  %v52 = vld [vmem:[%s0 + $0x18] sm:$0x1]
  %v53 = vld [vmem:[%s0 + $0x19] sm:$0x1]
  %v54 = vld [vmem:[%s0 + $0x1a] sm:$0x1]
  %v55 = vld [vmem:[%s0 + $0x1b] sm:$0x1]
  %v56 = vld [vmem:[%s0 + $0x1c] sm:$0x1]
  %v57 = vld [vmem:[%s0 + $0x1d] sm:$0x1]
  %v58 = vld [vmem:[%s0 + $0x1e] sm:$0x1]
  %v59 = vld [vmem:[%s0 + $0x20] sm:$0x1]
  %v60 = vld [vmem:[%s0 + $0x21] sm:$0x1]
  %v61 = vld [vmem:[%s0 + $0x22] sm:$0x1]
  %v62 = vld [vmem:[%s0 + $0x23] sm:$0x1]
  %v63 = vld [vmem:[%s0 + $0x24] sm:$0x1]
  %v64 = vld [vmem:[%s0 + $0x25] sm:$0x1]
  %v65 = vld [vmem:[%s0 + $0x26] sm:$0x1]
  %v66 = vld [vmem:[%s0 + $0x27] sm:$0x1]
  %v67 = vld [vmem:[%s0 + $0x28] sm:$0x1]
  %v68 = vld [vmem:[%s0 + $0x29] sm:$0x1]
  %v69 = vld [vmem:[%s0 + $0x2a] sm:$0x1]
  %v70 = vld [vmem:[%s0 + $0x2b] sm:$0x1]
  %v71 = vld [vmem:[%s0 + $0x2c] sm:$0x1]
  %v72 = vld [vmem:[%s0 + $0x2d] sm:$0x1]
  %v73 = vld [vmem:[%s0 + $0x2e] sm:$0x1]
  %v74 = vld [vmem:[%s0 + $0x30] sm:$0x1]
  %v75 = vld [vmem:[%s0 + $0x31] sm:$0x1]
  %v76 = vld [vmem:[%s0 + $0x32] sm:$0x1]
  %v77 = vld [vmem:[%s0 + $0x33] sm:$0x1]
  %v78 = vld [vmem:[%s0 + $0x34] sm:$0x1]
  %v79 = vld [vmem:[%s0 + $0x35] sm:$0x1]
  %v80 = vld [vmem:[%s0 + $0x36] sm:$0x1]
  %v81 = vld [vmem:[%s0 + $0x37] sm:$0x1]
  %v82 = vld [vmem:[%s0 + $0x38] sm:$0x1]
  %v83 = vld [vmem:[%s0 + $0x39] sm:$0x1]
  %v84 = vld [vmem:[%s0 + $0x3a] sm:$0x1]
  %v85 = vld [vmem:[%s0 + $0x3b] sm:$0x1]
  %v86 = vld [vmem:[%s0 + $0x3c] sm:$0x1]
  %v87 = vld [vmem:[%s0 + $0x3d] sm:$0x1]
  %v88 = vld [vmem:[%s0 + $0x3e] sm:$0x1]
  %v89 = vld [vmem:[%s0 + $0x40] sm:$0x1]
  %v90 = vld [vmem:[%s0 + $0x41] sm:$0x1]
  %v91 = vld [vmem:[%s0 + $0x42] sm:$0x1]
  %v92 = vld [vmem:[%s0 + $0x43] sm:$0x1]
  %v93 = vld [vmem:[%s0 + $0x44] sm:$0x1]
  %v94 = vld [vmem:[%s0 + $0x45] sm:$0x1]
  %v95 = vld [vmem:[%s0 + $0x46] sm:$0x1]
  %v96 = vld [vmem:[%s0 + $0x47] sm:$0x1]
  %v97 = vld [vmem:[%s0 + $0x48] sm:$0x1]
  %v98 = vld [vmem:[%s0 + $0x49] sm:$0x1]
  %v99 = vld [vmem:[%s0 + $0x4a] sm:$0x1]
  %v100 = vld [vmem:[%s0 + $0x4b] sm:$0x1]
  %v101 = vld [vmem:[%s0 + $0x4c] sm:$0x1]
  %v102 = vld [vmem:[%s0 + $0x4d] sm:$0x1]
  %v103 = vld [vmem:[%s0 + $0x4e] sm:$0x1]
  %v104 = vld [vmem:[%s0 + $0x50] sm:$0x1]
  %v105 = vld [vmem:[%s0 + $0x51] sm:$0x1]
  %v106 = vld [vmem:[%s0 + $0x52] sm:$0x1]
  %v107 = vld [vmem:[%s0 + $0x53] sm:$0x1]
  %v108 = vld [vmem:[%s0 + $0x54] sm:$0x1]
  %v109 = vld [vmem:[%s0 + $0x55] sm:$0x1]
  %v110 = vld [vmem:[%s0 + $0x56] sm:$0x1]
  %v111 = vld [vmem:[%s0 + $0x57] sm:$0x1]
  %v112 = vld [vmem:[%s0 + $0x58] sm:$0x1]
  %v113 = vld [vmem:[%s0 + $0x59] sm:$0x1]
  %v114 = vld [vmem:[%s0 + $0x5a] sm:$0x1]
  %v115 = vld [vmem:[%s0 + $0x5b] sm:$0x1]
  %v116 = vld [vmem:[%s0 + $0x5c] sm:$0x1]
  %v117 = vld [vmem:[%s0 + $0x5d] sm:$0x1]
  %v118 = vld [vmem:[%s0 + $0x5e] sm:$0x1]
  %v119 = vld [vmem:[%s0 + $0x60] sm:$0x1]
  %v120 = vld [vmem:[%s0 + $0x61] sm:$0x1]
  %v121 = vld [vmem:[%s0 + $0x62] sm:$0x1]
  %v122 = vld [vmem:[%s0 + $0x63] sm:$0x1]
  %v123 = vld [vmem:[%s0 + $0x64] sm:$0x1]
  %v124 = vld [vmem:[%s0 + $0x65] sm:$0x1]
  %v125 = vld [vmem:[%s0 + $0x66] sm:$0x1]
  %v126 = vld [vmem:[%s0 + $0x67] sm:$0x1]
  %v127 = vld [vmem:[%s0 + $0x68] sm:$0x1]
  %v128 = vld [vmem:[%s0 + $0x69] sm:$0x1]
  %v129 = vld [vmem:[%s0 + $0x6a] sm:$0x1]
  %v130 = vld [vmem:[%s0 + $0x6b] sm:$0x1]
  %v131 = vld [vmem:[%s0 + $0x6c] sm:$0x1]
  %v132 = vld [vmem:[%s0 + $0x6d] sm:$0x1]
  %v133 = vld [vmem:[%s0 + $0x6e] sm:$0x1]
  %v134 = vld [vmem:[%s0 + $0x70] sm:$0x1]
  %v135 = vld [vmem:[%s0 + $0x71] sm:$0x1]
  %v136 = vld [vmem:[%s0 + $0x72] sm:$0x1]
  %v137 = vld [vmem:[%s0 + $0x73] sm:$0x1]
  %v138 = vld [vmem:[%s0 + $0x74] sm:$0x1]
  %v139 = vld [vmem:[%s0 + $0x75] sm:$0x1]
  %v140 = vld [vmem:[%s0 + $0x76] sm:$0x1]
  %v141 = vld [vmem:[%s0 + $0x77] sm:$0x1]
  %v142 = vld [vmem:[%s0 + $0x78] sm:$0x1]
  %v143 = vld [vmem:[%s0 + $0x79] sm:$0x1]
  %v144 = vld [vmem:[%s0 + $0x7a] sm:$0x1]
  %v145 = vld [vmem:[%s0 + $0x7b] sm:$0x1]
  %v146 = vld [vmem:[%s0 + $0x7c] sm:$0x1]
  %v147 = vld [vmem:[%s0 + $0x7d] sm:$0x1]
  %v148 = vld [vmem:[%s0 + $0x7e] sm:$0x1]
  %v149 = vld [vmem:[%s0 + $0x80] sm:$0x1]
  %v150 = vld [vmem:[%s0 + $0x81] sm:$0x1]
  %v151 = vld [vmem:[%s0 + $0x82] sm:$0x1]
  %v152 = vld [vmem:[%s0 + $0x83] sm:$0x1]
  %v153 = vld [vmem:[%s0 + $0x84] sm:$0x1]
  %v154 = vld [vmem:[%s0 + $0x85] sm:$0x1]
  %v155 = vld [vmem:[%s0 + $0x86] sm:$0x1]
  %v156 = vld [vmem:[%s0 + $0x87] sm:$0x1]
  %v157 = vld [vmem:[%s0 + $0x88] sm:$0x1]
  %v158 = vld [vmem:[%s0 + $0x89] sm:$0x1]
  %v159 = vld [vmem:[%s0 + $0x8a] sm:$0x1]
  %v160 = vld [vmem:[%s0 + $0x8b] sm:$0x1]
  %v161 = vld [vmem:[%s0 + $0x8c] sm:$0x1]
  %v162 = vld [vmem:[%s0 + $0x8d] sm:$0x1]
  %v163 = vld [vmem:[%s0 + $0x8e] sm:$0x1]
  %v164 = vld [vmem:[%s0 + $0x90] sm:$0x1]
  %v165 = vld [vmem:[%s0 + $0x91] sm:$0x1]
  %v166 = vld [vmem:[%s0 + $0x92] sm:$0x1]
  %v167 = vld [vmem:[%s0 + $0x93] sm:$0x1]
  %v168 = vld [vmem:[%s0 + $0x94] sm:$0x1]
  %v169 = vld [vmem:[%s0 + $0x95] sm:$0x1]
  %v170 = vld [vmem:[%s0 + $0x96] sm:$0x1]
  %v171 = vld [vmem:[%s0 + $0x97] sm:$0x1]
  %v172 = vld [vmem:[%s0 + $0x98] sm:$0x1]
  %v173 = vld [vmem:[%s0 + $0x99] sm:$0x1]
  %v174 = vld [vmem:[%s0 + $0x9a] sm:$0x1]
  %v175 = vld [vmem:[%s0 + $0x9b] sm:$0x1]
  %v176 = vld [vmem:[%s0 + $0x9c] sm:$0x1]
  %v177 = vld [vmem:[%s0 + $0x9d] sm:$0x1]
  %v178 = vld [vmem:[%s0 + $0x9e] sm:$0x1]
  %v179 = vld [vmem:[%s0 + $0xa0] sm:$0x1]
  %v180 = vld [vmem:[%s0 + $0xa1] sm:$0x1]
  %v181 = vld [vmem:[%s0 + $0xa2] sm:$0x1]
  %v182 = vld [vmem:[%s0 + $0xa3] sm:$0x1]
  %v183 = vld [vmem:[%s0 + $0xa4] sm:$0x1]
  %v184 = vld [vmem:[%s0 + $0xa5] sm:$0x1]
  %v185 = vld [vmem:[%s0 + $0xa6] sm:$0x1]
  %v186 = vld [vmem:[%s0 + $0xa7] sm:$0x1]
  %v187 = vld [vmem:[%s0 + $0xa8] sm:$0x1]
  %v188 = vld [vmem:[%s0 + $0xa9] sm:$0x1]
  %v189 = vld [vmem:[%s0 + $0xaa] sm:$0x1]
  %v190 = vld [vmem:[%s0 + $0xab] sm:$0x1]
  %v191 = vld [vmem:[%s0 + $0xac] sm:$0x1]
  %v192 = vld [vmem:[%s0 + $0xad] sm:$0x1]
  %v193 = vld [vmem:[%s0 + $0xae] sm:$0x1]
  %v194 = vld [vmem:[%s0 + $0xb0] sm:$0x1]
  %v195 = vld [vmem:[%s0 + $0xb1] sm:$0x1]
  %v196 = vld [vmem:[%s0 + $0xb2] sm:$0x1]
  %v197 = vld [vmem:[%s0 + $0xb3] sm:$0x1]
  %v198 = vld [vmem:[%s0 + $0xb4] sm:$0x1]
  %v199 = vld [vmem:[%s0 + $0xb5] sm:$0x1]
  %v200 = vld [vmem:[%s0 + $0xb6] sm:$0x1]
  %v201 = vld [vmem:[%s0 + $0xb7] sm:$0x1]
  %v202 = vld [vmem:[%s0 + $0xb8] sm:$0x1]
  %v203 = vld [vmem:[%s0 + $0xb9] sm:$0x1]
  %v204 = vld [vmem:[%s0 + $0xba] sm:$0x1]
  %v205 = vld [vmem:[%s0 + $0xbb] sm:$0x1]
  %v206 = vld [vmem:[%s0 + $0xbc] sm:$0x1]
  %v207 = vld [vmem:[%s0 + $0xbd] sm:$0x1]
  %v208 = vld [vmem:[%s0 + $0xbe] sm:$0x1]
  %v209 = vld [vmem:[%s0 + $0xc0] sm:$0x1]
  %v210 = vld [vmem:[%s0 + $0xc1] sm:$0x1]
  %v211 = vld [vmem:[%s0 + $0xc2] sm:$0x1]
  %v212 = vld [vmem:[%s0 + $0xc3] sm:$0x1]
  %v213 = vld [vmem:[%s0 + $0xc4] sm:$0x1]
  %v214 = vld [vmem:[%s0 + $0xc5] sm:$0x1]
  %v215 = vld [vmem:[%s0 + $0xc6] sm:$0x1]
  %v216 = vld [vmem:[%s0 + $0xc7] sm:$0x1]
  %v217 = vld [vmem:[%s0 + $0xc8] sm:$0x1]
  %v218 = vld [vmem:[%s0 + $0xc9] sm:$0x1]
  %v219 = vld [vmem:[%s0 + $0xca] sm:$0x1]
  %v220 = vld [vmem:[%s0 + $0xcb] sm:$0x1]
  %v221 = vld [vmem:[%s0 + $0xcc] sm:$0x1]
  %v222 = vld [vmem:[%s0 + $0xcd] sm:$0x1]
  %v223 = vld [vmem:[%s0 + $0xce] sm:$0x1]
  %v224 = vld [vmem:[%s0 + $0xd0] sm:$0x1]
  %v225 = vld [vmem:[%s0 + $0xd1] sm:$0x1]
  %v226 = vld [vmem:[%s0 + $0xd2] sm:$0x1]
  %v227 = vld [vmem:[%s0 + $0xd3] sm:$0x1]
  %v228 = vld [vmem:[%s0 + $0xd4] sm:$0x1]
  %v229 = vld [vmem:[%s0 + $0xd5] sm:$0x1]
  %v230 = vld [vmem:[%s0 + $0xd6] sm:$0x1]
  %v231 = vld [vmem:[%s0 + $0xd7] sm:$0x1]
  %v232 = vld [vmem:[%s0 + $0xd8] sm:$0x1]
  %v233 = vld [vmem:[%s0 + $0xd9] sm:$0x1]
  %v234 = vld [vmem:[%s0 + $0xda] sm:$0x1]
  %v235 = vld [vmem:[%s0 + $0xdb] sm:$0x1]
  %v236 = vld [vmem:[%s0 + $0xdc] sm:$0x1]
  %v237 = vld [vmem:[%s0 + $0xdd] sm:$0x1]
  %v238 = vld [vmem:[%s0 + $0xde] sm:$0x1]
  %v239 = vld [vmem:[%s0 + $0xe0] sm:$0x1]
  %v240 = vld [vmem:[%s0 + $0xe1] sm:$0x1]
  %v241 = vld [vmem:[%s0 + $0xe2] sm:$0x1]
  %v242 = vld [vmem:[%s0 + $0xe3] sm:$0x1]
  %v243 = vld [vmem:[%s0 + $0xe4] sm:$0x1]
  %v244 = vld [vmem:[%s0 + $0xe5] sm:$0x1]
  %v245 = vld [vmem:[%s0 + $0xe6] sm:$0x1]
  %v246 = vld [vmem:[%s0 + $0xe7] sm:$0x1]
  %v247 = vld [vmem:[%s0 + $0xe8] sm:$0x1]
  %v248 = vld [vmem:[%s0 + $0xe9] sm:$0x1]
  %v249 = vld [vmem:[%s0 + $0xea] sm:$0x1]
  %v250 = vld [vmem:[%s0 + $0xeb] sm:$0x1]
  %v251 = vld [vmem:[%s0 + $0xec] sm:$0x1]
  %v252 = vld [vmem:[%s0 + $0xed] sm:$0x1]
  %v253 = vld [vmem:[%s0 + $0xee] sm:$0x1]
  %v254 = vld [vmem:[%s0 + $0x100] sm:$0x1]
  %v255 = vld [vmem:[%s0 + $0x101] sm:$0x1]
  %v256 = vld [vmem:[%s0 + $0x102] sm:$0x1]
  %v257 = vld [vmem:[%s0 + $0x103] sm:$0x1]
  %v258 = vld [vmem:[%s0 + $0x104] sm:$0x1]
  %v259 = vld [vmem:[%s0 + $0x105] sm:$0x1]
  %v260 = vld [vmem:[%s0 + $0x106] sm:$0x1]
  %v261 = vld [vmem:[%s0 + $0x107] sm:$0x1]
  %v262 = vld [vmem:[%s0 + $0x108] sm:$0x1]
  %v263 = vld [vmem:[%s0 + $0x109] sm:$0x1]
  %v264 = vld [vmem:[%s0 + $0x10a] sm:$0x1]
  %v265 = vld [vmem:[%s0 + $0x10b] sm:$0x1]
  %v266 = vld [vmem:[%s0 + $0x10c] sm:$0x1]
  %v267 = vld [vmem:[%s0 + $0x10d] sm:$0x1]
  %v268 = vld [vmem:[%s0 + $0x10e] sm:$0x1]
  %v269 = vld [vmem:[%s0 + $0x110] sm:$0x1]
  %v270 = vld [vmem:[%s0 + $0x111] sm:$0x1]
  %v271 = vld [vmem:[%s0 + $0x112] sm:$0x1]
  %v272 = vld [vmem:[%s0 + $0x113] sm:$0x1]
  %v273 = vld [vmem:[%s0 + $0x114] sm:$0x1]
  %v274 = vld [vmem:[%s0 + $0x115] sm:$0x1]
  %v275 = vld [vmem:[%s0 + $0x116] sm:$0x1]
  %v276 = vld [vmem:[%s0 + $0x117] sm:$0x1]
  %v277 = vld [vmem:[%s0 + $0x118] sm:$0x1]
  %v278 = vld [vmem:[%s0 + $0x119] sm:$0x1]
  %v279 = vld [vmem:[%s0 + $0x11a] sm:$0x1]
  %v280 = vld [vmem:[%s0 + $0x11b] sm:$0x1]
  %v281 = vld [vmem:[%s0 + $0x11c] sm:$0x1]
  %v282 = vld [vmem:[%s0 + $0x11d] sm:$0x1]
  %v283 = vld [vmem:[%s0 + $0x11e] sm:$0x1]
  %v284 = vld [vmem:[%s0 + $0x120] sm:$0x1]
  %v285 = vld [vmem:[%s0 + $0x121] sm:$0x1]
  %v286 = vld [vmem:[%s0 + $0x122] sm:$0x1]
  %v287 = vld [vmem:[%s0 + $0x123] sm:$0x1]
  %v288 = vld [vmem:[%s0 + $0x124] sm:$0x1]
  %v289 = vld [vmem:[%s0 + $0x125] sm:$0x1]
  %v290 = vld [vmem:[%s0 + $0x126] sm:$0x1]
  %v291 = vld [vmem:[%s0 + $0x127] sm:$0x1]
  %v292 = vld [vmem:[%s0 + $0x128] sm:$0x1]
  %v293 = vld [vmem:[%s0 + $0x129] sm:$0x1]
  %v294 = vld [vmem:[%s0 + $0x12a] sm:$0x1]
  %v295 = vld [vmem:[%s0 + $0x12b] sm:$0x1]
  %v296 = vld [vmem:[%s0 + $0x12c] sm:$0x1]
  %v297 = vld [vmem:[%s0 + $0x12d] sm:$0x1]
  %v298 = vld [vmem:[%s0 + $0x12e] sm:$0x1]
  %v299 = vld [vmem:[%s0 + $0x130] sm:$0x1]
  %v300 = vld [vmem:[%s0 + $0x131] sm:$0x1]
  %v301 = vld [vmem:[%s0 + $0x132] sm:$0x1]
  %v302 = vld [vmem:[%s0 + $0x133] sm:$0x1]
  %v303 = vld [vmem:[%s0 + $0x134] sm:$0x1]
  %v304 = vld [vmem:[%s0 + $0x135] sm:$0x1]
  %v305 = vld [vmem:[%s0 + $0x136] sm:$0x1]
  %v306 = vld [vmem:[%s0 + $0x137] sm:$0x1]
  %v307 = vld [vmem:[%s0 + $0x138] sm:$0x1]
  %v308 = vld [vmem:[%s0 + $0x139] sm:$0x1]
  %v309 = vld [vmem:[%s0 + $0x13a] sm:$0x1]
  %v310 = vld [vmem:[%s0 + $0x13b] sm:$0x1]
  %v311 = vld [vmem:[%s0 + $0x13c] sm:$0x1]
  %v312 = vld [vmem:[%s0 + $0x13d] sm:$0x1]
  %v313 = vld [vmem:[%s0 + $0x13e] sm:$0x1]
  %v314 = vld [vmem:[%s0 + $0x140] sm:$0x1]
  %v315 = vld [vmem:[%s0 + $0x141] sm:$0x1]
  %v316 = vld [vmem:[%s0 + $0x142] sm:$0x1]
  %v317 = vld [vmem:[%s0 + $0x143] sm:$0x1]
  %v318 = vld [vmem:[%s0 + $0x144] sm:$0x1]
  %v319 = vld [vmem:[%s0 + $0x145] sm:$0x1]
  %v320 = vld [vmem:[%s0 + $0x146] sm:$0x1]
  %v321 = vld [vmem:[%s0 + $0x147] sm:$0x1]
  %v322 = vld [vmem:[%s0 + $0x148] sm:$0x1]
  %v323 = vld [vmem:[%s0 + $0x149] sm:$0x1]
  %v324 = vld [vmem:[%s0 + $0x14a] sm:$0x1]
  %v325 = vld [vmem:[%s0 + $0x14b] sm:$0x1]
  %v326 = vld [vmem:[%s0 + $0x14c] sm:$0x1]
  %v327 = vld [vmem:[%s0 + $0x14d] sm:$0x1]
  %v328 = vld [vmem:[%s0 + $0x14e] sm:$0x1]
  %v329 = vld [vmem:[%s0 + $0x150] sm:$0x1]
  %v330 = vld [vmem:[%s0 + $0x151] sm:$0x1]
  %v331 = vld [vmem:[%s0 + $0x152] sm:$0x1]
  %v332 = vld [vmem:[%s0 + $0x153] sm:$0x1]
  %v333 = vld [vmem:[%s0 + $0x154] sm:$0x1]
  %v334 = vld [vmem:[%s0 + $0x155] sm:$0x1]
  %v335 = vld [vmem:[%s0 + $0x156] sm:$0x1]
  %v336 = vld [vmem:[%s0 + $0x157] sm:$0x1]
  %v337 = vld [vmem:[%s0 + $0x158] sm:$0x1]
  %v338 = vld [vmem:[%s0 + $0x159] sm:$0x1]
  %v339 = vld [vmem:[%s0 + $0x15a] sm:$0x1]
  %v340 = vld [vmem:[%s0 + $0x15b] sm:$0x1]
  %v341 = vld [vmem:[%s0 + $0x15c] sm:$0x1]
  %v342 = vld [vmem:[%s0 + $0x15d] sm:$0x1]
  %v343 = vld [vmem:[%s0 + $0x15e] sm:$0x1]
  %v344 = vld [vmem:[%s0 + $0x160] sm:$0x1]
  %v345 = vld [vmem:[%s0 + $0x161] sm:$0x1]
  %v346 = vld [vmem:[%s0 + $0x162] sm:$0x1]
  %v347 = vld [vmem:[%s0 + $0x163] sm:$0x1]
  %v348 = vld [vmem:[%s0 + $0x164] sm:$0x1]
  %v349 = vld [vmem:[%s0 + $0x165] sm:$0x1]
  %v350 = vld [vmem:[%s0 + $0x166] sm:$0x1]
  %v351 = vld [vmem:[%s0 + $0x167] sm:$0x1]
  %v352 = vld [vmem:[%s0 + $0x168] sm:$0x1]
  %v353 = vld [vmem:[%s0 + $0x169] sm:$0x1]
  %v354 = vld [vmem:[%s0 + $0x16a] sm:$0x1]
  %v355 = vld [vmem:[%s0 + $0x16b] sm:$0x1]
  %v356 = vld [vmem:[%s0 + $0x16c] sm:$0x1]
  %v357 = vld [vmem:[%s0 + $0x16d] sm:$0x1]
  %v358 = vld [vmem:[%s0 + $0x16e] sm:$0x1]
  %v359 = vld [vmem:[%s0 + $0x170] sm:$0x1]
  %v360 = vld [vmem:[%s0 + $0x171] sm:$0x1]
  %v361 = vld [vmem:[%s0 + $0x172] sm:$0x1]
  %v362 = vld [vmem:[%s0 + $0x173] sm:$0x1]
  %v363 = vld [vmem:[%s0 + $0x174] sm:$0x1]
  %v364 = vld [vmem:[%s0 + $0x175] sm:$0x1]
  %v365 = vld [vmem:[%s0 + $0x176] sm:$0x1]
  %v366 = vld [vmem:[%s0 + $0x177] sm:$0x1]
  %v367 = vld [vmem:[%s0 + $0x178] sm:$0x1]
  %v368 = vld [vmem:[%s0 + $0x179] sm:$0x1]
  %v369 = vld [vmem:[%s0 + $0x17a] sm:$0x1]
  %v370 = vld [vmem:[%s0 + $0x17b] sm:$0x1]
  %v371 = vld [vmem:[%s0 + $0x17c] sm:$0x1]
  %v372 = vld [vmem:[%s0 + $0x17d] sm:$0x1]
  %v373 = vld [vmem:[%s0 + $0x17e] sm:$0x1]
  %v374 = vld [vmem:[%s0 + $0x180] sm:$0x1]
  %v375 = vld [vmem:[%s0 + $0x181] sm:$0x1]
  %v376 = vld [vmem:[%s0 + $0x182] sm:$0x1]
  %v377 = vld [vmem:[%s0 + $0x183] sm:$0x1]
  %v378 = vld [vmem:[%s0 + $0x184] sm:$0x1]
  %v379 = vld [vmem:[%s0 + $0x185] sm:$0x1]
  %v380 = vld [vmem:[%s0 + $0x186] sm:$0x1]
  %v381 = vld [vmem:[%s0 + $0x187] sm:$0x1]
  %v382 = vld [vmem:[%s0 + $0x188] sm:$0x1]
  %v383 = vld [vmem:[%s0 + $0x189] sm:$0x1]
  %v384 = vld [vmem:[%s0 + $0x18a] sm:$0x1]
  %v385 = vld [vmem:[%s0 + $0x18b] sm:$0x1]
  %v386 = vld [vmem:[%s0 + $0x18c] sm:$0x1]
  %v387 = vld [vmem:[%s0 + $0x18d] sm:$0x1]
  %v388 = vld [vmem:[%s0 + $0x18e] sm:$0x1]
  %v389 = vld [vmem:[%s0 + $0x190] sm:$0x1]
  %v390 = vld [vmem:[%s0 + $0x191] sm:$0x1]
  %v391 = vld [vmem:[%s0 + $0x192] sm:$0x1]
  %v392 = vld [vmem:[%s0 + $0x193] sm:$0x1]
  %v393 = vld [vmem:[%s0 + $0x194] sm:$0x1]
  %v394 = vld [vmem:[%s0 + $0x195] sm:$0x1]
  %v395 = vld [vmem:[%s0 + $0x196] sm:$0x1]
  %v396 = vld [vmem:[%s0 + $0x197] sm:$0x1]
  %v397 = vld [vmem:[%s0 + $0x198] sm:$0x1]
  %v398 = vld [vmem:[%s0 + $0x199] sm:$0x1]
  %v399 = vld [vmem:[%s0 + $0x19a] sm:$0x1]
  %v400 = vld [vmem:[%s0 + $0x19b] sm:$0x1]
  %v401 = vld [vmem:[%s0 + $0x19c] sm:$0x1]
  %v402 = vld [vmem:[%s0 + $0x19d] sm:$0x1]
  %v403 = vld [vmem:[%s0 + $0x19e] sm:$0x1]
  %v404 = vld [vmem:[%s0 + $0x1a0] sm:$0x1]
  %v405 = vld [vmem:[%s0 + $0x1a1] sm:$0x1]
  %v406 = vld [vmem:[%s0 + $0x1a2] sm:$0x1]
  %v407 = vld [vmem:[%s0 + $0x1a3] sm:$0x1]
  %v408 = vld [vmem:[%s0 + $0x1a4] sm:$0x1]
  %v409 = vld [vmem:[%s0 + $0x1a5] sm:$0x1]
  %v410 = vld [vmem:[%s0 + $0x1a6] sm:$0x1]
  %v411 = vld [vmem:[%s0 + $0x1a7] sm:$0x1]
  %v412 = vld [vmem:[%s0 + $0x1a8] sm:$0x1]
  %v413 = vld [vmem:[%s0 + $0x1a9] sm:$0x1]
  %v414 = vld [vmem:[%s0 + $0x1aa] sm:$0x1]
  %v415 = vld [vmem:[%s0 + $0x1ab] sm:$0x1]
  %v416 = vld [vmem:[%s0 + $0x1ac] sm:$0x1]
  %v417 = vld [vmem:[%s0 + $0x1ad] sm:$0x1]
  %v418 = vld [vmem:[%s0 + $0x1ae] sm:$0x1]
  %v419 = vld [vmem:[%s0 + $0x1b0] sm:$0x1]
  %v420 = vld [vmem:[%s0 + $0x1b1] sm:$0x1]
  %v421 = vld [vmem:[%s0 + $0x1b2] sm:$0x1]
  %v422 = vld [vmem:[%s0 + $0x1b3] sm:$0x1]
  %v423 = vld [vmem:[%s0 + $0x1b4] sm:$0x1]
  %v424 = vld [vmem:[%s0 + $0x1b5] sm:$0x1]
  %v425 = vld [vmem:[%s0 + $0x1b6] sm:$0x1]
  %v426 = vld [vmem:[%s0 + $0x1b7] sm:$0x1]
  %v427 = vld [vmem:[%s0 + $0x1b8] sm:$0x1]
  %v428 = vld [vmem:[%s0 + $0x1b9] sm:$0x1]
  %v429 = vld [vmem:[%s0 + $0x1ba] sm:$0x1]
  %v430 = vld [vmem:[%s0 + $0x1bb] sm:$0x1]
  %v431 = vld [vmem:[%s0 + $0x1bc] sm:$0x1]
  %v432 = vld [vmem:[%s0 + $0x1bd] sm:$0x1]
  %v433 = vld [vmem:[%s0 + $0x1be] sm:$0x1]
  %v434 = vld [vmem:[%s0 + $0x1c0] sm:$0x1]
  %v435 = vld [vmem:[%s0 + $0x1c1] sm:$0x1]
  %v436 = vld [vmem:[%s0 + $0x1c2] sm:$0x1]
  %v437 = vld [vmem:[%s0 + $0x1c3] sm:$0x1]
  %v438 = vld [vmem:[%s0 + $0x1c4] sm:$0x1]
  %v439 = vld [vmem:[%s0 + $0x1c5] sm:$0x1]
  %v440 = vld [vmem:[%s0 + $0x1c6] sm:$0x1]
  %v441 = vld [vmem:[%s0 + $0x1c7] sm:$0x1]
  %v442 = vld [vmem:[%s0 + $0x1c8] sm:$0x1]
  %v443 = vld [vmem:[%s0 + $0x1c9] sm:$0x1]
  %v444 = vld [vmem:[%s0 + $0x1ca] sm:$0x1]
  %v445 = vld [vmem:[%s0 + $0x1cb] sm:$0x1]
  %v446 = vld [vmem:[%s0 + $0x1cc] sm:$0x1]
  %v447 = vld [vmem:[%s0 + $0x1cd] sm:$0x1]
  %v448 = vld [vmem:[%s0 + $0x1ce] sm:$0x1]
  %v449 = vld [vmem:[%s0 + $0x1d0] sm:$0x1]
  %v450 = vld [vmem:[%s0 + $0x1d1] sm:$0x1]
  %v451 = vld [vmem:[%s0 + $0x1d2] sm:$0x1]
  %v452 = vld [vmem:[%s0 + $0x1d3] sm:$0x1]
  %v453 = vld [vmem:[%s0 + $0x1d4] sm:$0x1]
  %v454 = vld [vmem:[%s0 + $0x1d5] sm:$0x1]
  %v455 = vld [vmem:[%s0 + $0x1d6] sm:$0x1]
  %v456 = vld [vmem:[%s0 + $0x1d7] sm:$0x1]
  %v457 = vld [vmem:[%s0 + $0x1d8] sm:$0x1]
  %v458 = vld [vmem:[%s0 + $0x1d9] sm:$0x1]
  %v459 = vld [vmem:[%s0 + $0x1da] sm:$0x1]
  %v460 = vld [vmem:[%s0 + $0x1db] sm:$0x1]
  %v461 = vld [vmem:[%s0 + $0x1dc] sm:$0x1]
  %v462 = vld [vmem:[%s0 + $0x1dd] sm:$0x1]
  %v463 = vld [vmem:[%s0 + $0x1de] sm:$0x1]
  %v464 = vld [vmem:[%s0 + $0x1e0] sm:$0x1]
  %v465 = vld [vmem:[%s0 + $0x1e1] sm:$0x1]
  %v466 = vld [vmem:[%s0 + $0x1e2] sm:$0x1]
  %v467 = vld [vmem:[%s0 + $0x1e3] sm:$0x1]
  %v468 = vld [vmem:[%s0 + $0x1e4] sm:$0x1]
  %v469 = vld [vmem:[%s0 + $0x1e5] sm:$0x1]
  %v470 = vld [vmem:[%s0 + $0x1e6] sm:$0x1]
  %v471 = vld [vmem:[%s0 + $0x1e7] sm:$0x1]
  %v472 = vld [vmem:[%s0 + $0x1e8] sm:$0x1]
  %v473 = vld [vmem:[%s0 + $0x1e9] sm:$0x1]
  %v474 = vld [vmem:[%s0 + $0x1ea] sm:$0x1]
  %v475 = vld [vmem:[%s0 + $0x1eb] sm:$0x1]
  %v476 = vld [vmem:[%s0 + $0x1ec] sm:$0x1]
  %v477 = vld [vmem:[%s0 + $0x1ed] sm:$0x1]
  %v478 = vld [vmem:[%s0 + $0x1ee] sm:$0x1]
  %v479 = vld [vmem:[%s1] sm:$0xff]
  %v480 = vld [vmem:[%s1 + $0x8] sm:$0xff]
  %v481 = vld [vmem:[%s1 + $0x10] sm:$0xff]
  %v482 = vld [vmem:[%s1 + $0x18] sm:$0xff]
  %v483 = vld [vmem:[%s1 + $0x20] sm:$0xff]
  %v484 = vld [vmem:[%s1 + $0x28] sm:$0xff]
  %v485 = vld [vmem:[%s1 + $0x30] sm:$0xff]
  %v486 = vld [vmem:[%s1 + $0x38] sm:$0xff]
  %v487 = vld [vmem:[%s1 + $0x40] sm:$0xff]
  %v586 = vlaneseq
  %v587 = vshrl.u32 %v586, 7
  %v588 = vsub.s32 0, %v587
  %v589 = vrot.slane %v29, %v588
  %v590 = vlaneseq
  %v591 = vshrl.u32 %v590, 7
  %v592 = vsub.s32 0, %v591
  %v593 = vrot.slane %v31, %v592
  %v594 = vlaneseq
  %v595 = vshrl.u32 %v594, 7
  %v596 = vsub.s32 0, %v595
  %v597 = vrot.slane %v33, %v596
  %v598 = vlaneseq
  %v599 = vshrl.u32 %v598, 7
  %v600 = vsub.s32 0, %v599
  %v601 = vrot.slane %v35, %v600
  %v602 = vlaneseq
  %v603 = vshrl.u32 %v602, 7
  %v604 = vsub.s32 0, %v603
  %v605 = vrot.slane %v37, %v604
  %v606 = vlaneseq
  %v607 = vshrl.u32 %v606, 7
  %v608 = vsub.s32 0, %v607
  %v609 = vrot.slane %v39, %v608
  %v610 = vlaneseq
  %v611 = vshrl.u32 %v610, 7
  %v612 = vsub.s32 0, %v611
  %v613 = vrot.slane %v41, %v612
  %v614 = vlaneseq
  %v615 = vshrl.u32 %v614, 7
  %v616 = vsub.s32 0, %v615
  %v617 = vrot.slane %v59, %v616
  %v618 = vlaneseq
  %v619 = vshrl.u32 %v618, 7
  %v620 = vsub.s32 0, %v619
  %v621 = vrot.slane %v61, %v620
  %v622 = vlaneseq
  %v623 = vshrl.u32 %v622, 7
  %v624 = vsub.s32 0, %v623
  %v625 = vrot.slane %v63, %v624
  %v626 = vlaneseq
  %v627 = vshrl.u32 %v626, 7
  %v628 = vsub.s32 0, %v627
  %v629 = vrot.slane %v65, %v628
  %v630 = vlaneseq
  %v631 = vshrl.u32 %v630, 7
  %v632 = vsub.s32 0, %v631
  %v633 = vrot.slane %v67, %v632
  %v634 = vlaneseq
  %v635 = vshrl.u32 %v634, 7
  %v636 = vsub.s32 0, %v635
  %v637 = vrot.slane %v69, %v636
  %v638 = vlaneseq
  %v639 = vshrl.u32 %v638, 7
  %v640 = vsub.s32 0, %v639
  %v641 = vrot.slane %v71, %v640
  %v642 = vlaneseq
  %v643 = vshrl.u32 %v642, 7
  %v644 = vsub.s32 0, %v643
  %v645 = vrot.slane %v89, %v644
  %v646 = vlaneseq
  %v647 = vshrl.u32 %v646, 7
  %v648 = vsub.s32 0, %v647
  %v649 = vrot.slane %v91, %v648
  %v650 = vlaneseq
  %v651 = vshrl.u32 %v650, 7
  %v652 = vsub.s32 0, %v651
  %v653 = vrot.slane %v93, %v652
  %v654 = vlaneseq
  %v655 = vshrl.u32 %v654, 7
  %v656 = vsub.s32 0, %v655
  %v657 = vrot.slane %v95, %v656
  %v658 = vlaneseq
  %v659 = vshrl.u32 %v658, 7
  %v660 = vsub.s32 0, %v659
  %v661 = vrot.slane %v97, %v660
  %v662 = vlaneseq
  %v663 = vshrl.u32 %v662, 7
  %v664 = vsub.s32 0, %v663
  %v665 = vrot.slane %v99, %v664
  %v666 = vlaneseq
  %v667 = vshrl.u32 %v666, 7
  %v668 = vsub.s32 0, %v667
  %v669 = vrot.slane %v101, %v668
  %v670 = vlaneseq
  %v671 = vshrl.u32 %v670, 7
  %v672 = vsub.s32 0, %v671
  %v673 = vrot.slane %v119, %v672
  %v674 = vlaneseq
  %v675 = vshrl.u32 %v674, 7
  %v676 = vsub.s32 0, %v675
  %v677 = vrot.slane %v121, %v676
  %v678 = vlaneseq
  %v679 = vshrl.u32 %v678, 7
  %v680 = vsub.s32 0, %v679
  %v681 = vrot.slane %v123, %v680
  %v682 = vlaneseq
  %v683 = vshrl.u32 %v682, 7
  %v684 = vsub.s32 0, %v683
  %v685 = vrot.slane %v125, %v684
  %v686 = vlaneseq
  %v687 = vshrl.u32 %v686, 7
  %v688 = vsub.s32 0, %v687
  %v689 = vrot.slane %v127, %v688
  %v690 = vlaneseq
  %v691 = vshrl.u32 %v690, 7
  %v692 = vsub.s32 0, %v691
  %v693 = vrot.slane %v129, %v692
  %v694 = vlaneseq
  %v695 = vshrl.u32 %v694, 7
  %v696 = vsub.s32 0, %v695
  %v697 = vrot.slane %v131, %v696
  %v698 = vlaneseq
  %v699 = vshrl.u32 %v698, 7
  %v700 = vsub.s32 0, %v699
  %v701 = vrot.slane %v149, %v700
  %v702 = vlaneseq
  %v703 = vshrl.u32 %v702, 7
  %v704 = vsub.s32 0, %v703
  %v705 = vrot.slane %v151, %v704
  %v706 = vlaneseq
  %v707 = vshrl.u32 %v706, 7
  %v708 = vsub.s32 0, %v707
  %v709 = vrot.slane %v153, %v708
  %v710 = vlaneseq
  %v711 = vshrl.u32 %v710, 7
  %v712 = vsub.s32 0, %v711
  %v713 = vrot.slane %v155, %v712
  %v714 = vlaneseq
  %v715 = vshrl.u32 %v714, 7
  %v716 = vsub.s32 0, %v715
  %v717 = vrot.slane %v157, %v716
  %v718 = vlaneseq
  %v719 = vshrl.u32 %v718, 7
  %v720 = vsub.s32 0, %v719
  %v721 = vrot.slane %v159, %v720
  %v722 = vlaneseq
  %v723 = vshrl.u32 %v722, 7
  %v724 = vsub.s32 0, %v723
  %v725 = vrot.slane %v161, %v724
  %v726 = vlaneseq
  %v727 = vshrl.u32 %v726, 7
  %v728 = vsub.s32 0, %v727
  %v729 = vrot.slane %v179, %v728
  %v730 = vlaneseq
  %v731 = vshrl.u32 %v730, 7
  %v732 = vsub.s32 0, %v731
  %v733 = vrot.slane %v181, %v732
  %v734 = vlaneseq
  %v735 = vshrl.u32 %v734, 7
  %v736 = vsub.s32 0, %v735
  %v737 = vrot.slane %v183, %v736
  %v738 = vlaneseq
  %v739 = vshrl.u32 %v738, 7
  %v740 = vsub.s32 0, %v739
  %v741 = vrot.slane %v185, %v740
  %v742 = vlaneseq
  %v743 = vshrl.u32 %v742, 7
  %v744 = vsub.s32 0, %v743
  %v745 = vrot.slane %v187, %v744
  %v746 = vlaneseq
  %v747 = vshrl.u32 %v746, 7
  %v748 = vsub.s32 0, %v747
  %v749 = vrot.slane %v189, %v748
  %v750 = vlaneseq
  %v751 = vshrl.u32 %v750, 7
  %v752 = vsub.s32 0, %v751
  %v753 = vrot.slane %v191, %v752
  %v754 = vlaneseq
  %v755 = vshrl.u32 %v754, 7
  %v756 = vsub.s32 0, %v755
  %v757 = vrot.slane %v209, %v756
  %v758 = vlaneseq
  %v759 = vshrl.u32 %v758, 7
  %v760 = vsub.s32 0, %v759
  %v761 = vrot.slane %v211, %v760
  %v762 = vlaneseq
  %v763 = vshrl.u32 %v762, 7
  %v764 = vsub.s32 0, %v763
  %v765 = vrot.slane %v213, %v764
  %v766 = vlaneseq
  %v767 = vshrl.u32 %v766, 7
  %v768 = vsub.s32 0, %v767
  %v769 = vrot.slane %v215, %v768
  %v770 = vlaneseq
  %v771 = vshrl.u32 %v770, 7
  %v772 = vsub.s32 0, %v771
  %v773 = vrot.slane %v217, %v772
  %v774 = vlaneseq
  %v775 = vshrl.u32 %v774, 7
  %v776 = vsub.s32 0, %v775
  %v777 = vrot.slane %v219, %v776
  %v778 = vlaneseq
  %v779 = vshrl.u32 %v778, 7
  %v780 = vsub.s32 0, %v779
  %v781 = vrot.slane %v221, %v780
  %v782 = vlaneseq
  %v783 = vshrl.u32 %v782, 7
  %v784 = vsub.s32 0, %v783
  %v785 = vrot.slane %v254, %v784
  %v786 = vlaneseq
  %v787 = vshrl.u32 %v786, 7
  %v788 = vsub.s32 0, %v787
  %v789 = vrot.slane %v256, %v788
  %v790 = vlaneseq
  %v791 = vshrl.u32 %v790, 7
  %v792 = vsub.s32 0, %v791
  %v793 = vrot.slane %v258, %v792
  %v794 = vlaneseq
  %v795 = vshrl.u32 %v794, 7
  %v796 = vsub.s32 0, %v795
  %v797 = vrot.slane %v260, %v796
  %v798 = vlaneseq
  %v799 = vshrl.u32 %v798, 7
  %v800 = vsub.s32 0, %v799
  %v801 = vrot.slane %v262, %v800
  %v802 = vlaneseq
  %v803 = vshrl.u32 %v802, 7
  %v804 = vsub.s32 0, %v803
  %v805 = vrot.slane %v264, %v804
  %v806 = vlaneseq
  %v807 = vshrl.u32 %v806, 7
  %v808 = vsub.s32 0, %v807
  %v809 = vrot.slane %v266, %v808
  %v810 = vlaneseq
  %v811 = vshrl.u32 %v810, 7
  %v812 = vsub.s32 0, %v811
  %v813 = vrot.slane %v284, %v812
  %v814 = vlaneseq
  %v815 = vshrl.u32 %v814, 7
  %v816 = vsub.s32 0, %v815
  %v817 = vrot.slane %v286, %v816
  %v818 = vlaneseq
  %v819 = vshrl.u32 %v818, 7
  %v820 = vsub.s32 0, %v819
  %v821 = vrot.slane %v288, %v820
  %v822 = vlaneseq
  %v823 = vshrl.u32 %v822, 7
  %v824 = vsub.s32 0, %v823
  %v825 = vrot.slane %v290, %v824
  %v826 = vlaneseq
  %v827 = vshrl.u32 %v826, 7
  %v828 = vsub.s32 0, %v827
  %v829 = vrot.slane %v292, %v828
  %v830 = vlaneseq
  %v831 = vshrl.u32 %v830, 7
  %v832 = vsub.s32 0, %v831
  %v833 = vrot.slane %v294, %v832
  %v834 = vlaneseq
  %v835 = vshrl.u32 %v834, 7
  %v836 = vsub.s32 0, %v835
  %v837 = vrot.slane %v296, %v836
  %v838 = vlaneseq
  %v839 = vshrl.u32 %v838, 7
  %v840 = vsub.s32 0, %v839
  %v841 = vrot.slane %v314, %v840
  %v842 = vlaneseq
  %v843 = vshrl.u32 %v842, 7
  %v844 = vsub.s32 0, %v843
  %v845 = vrot.slane %v316, %v844
  %v846 = vlaneseq
  %v847 = vshrl.u32 %v846, 7
  %v848 = vsub.s32 0, %v847
  %v849 = vrot.slane %v318, %v848
  %v850 = vlaneseq
  %v851 = vshrl.u32 %v850, 7
  %v852 = vsub.s32 0, %v851
  %v853 = vrot.slane %v320, %v852
  %v854 = vlaneseq
  %v855 = vshrl.u32 %v854, 7
  %v856 = vsub.s32 0, %v855
  %v857 = vrot.slane %v322, %v856
  %v858 = vlaneseq
  %v859 = vshrl.u32 %v858, 7
  %v860 = vsub.s32 0, %v859
  %v861 = vrot.slane %v324, %v860
  %v862 = vlaneseq
  %v863 = vshrl.u32 %v862, 7
  %v864 = vsub.s32 0, %v863
  %v865 = vrot.slane %v326, %v864
  %v866 = vlaneseq
  %v867 = vshrl.u32 %v866, 7
  %v868 = vsub.s32 0, %v867
  %v869 = vrot.slane %v344, %v868
  %v870 = vlaneseq
  %v871 = vshrl.u32 %v870, 7
  %v872 = vsub.s32 0, %v871
  %v873 = vrot.slane %v346, %v872
  %v874 = vlaneseq
  %v875 = vshrl.u32 %v874, 7
  %v876 = vsub.s32 0, %v875
  %v877 = vrot.slane %v348, %v876
  %v878 = vlaneseq
  %v879 = vshrl.u32 %v878, 7
  %v880 = vsub.s32 0, %v879
  %v881 = vrot.slane %v350, %v880
  %v882 = vlaneseq
  %v883 = vshrl.u32 %v882, 7
  %v884 = vsub.s32 0, %v883
  %v885 = vrot.slane %v352, %v884
  %v886 = vlaneseq
  %v887 = vshrl.u32 %v886, 7
  %v888 = vsub.s32 0, %v887
  %v889 = vrot.slane %v354, %v888
  %v890 = vlaneseq
  %v891 = vshrl.u32 %v890, 7
  %v892 = vsub.s32 0, %v891
  %v893 = vrot.slane %v356, %v892
  %v894 = vlaneseq
  %v895 = vshrl.u32 %v894, 7
  %v896 = vsub.s32 0, %v895
  %v897 = vrot.slane %v374, %v896
  %v898 = vlaneseq
  %v899 = vshrl.u32 %v898, 7
  %v900 = vsub.s32 0, %v899
  %v901 = vrot.slane %v376, %v900
  %v902 = vlaneseq
  %v903 = vshrl.u32 %v902, 7
  %v904 = vsub.s32 0, %v903
  %v905 = vrot.slane %v378, %v904
  %v906 = vlaneseq
  %v907 = vshrl.u32 %v906, 7
  %v908 = vsub.s32 0, %v907
  %v909 = vrot.slane %v380, %v908
  %v910 = vlaneseq
  %v911 = vshrl.u32 %v910, 7
  %v912 = vsub.s32 0, %v911
  %v913 = vrot.slane %v382, %v912
  %v914 = vlaneseq
  %v915 = vshrl.u32 %v914, 7
  %v916 = vsub.s32 0, %v915
  %v917 = vrot.slane %v384, %v916
  %v918 = vlaneseq
  %v919 = vshrl.u32 %v918, 7
  %v920 = vsub.s32 0, %v919
  %v921 = vrot.slane %v386, %v920
  %v922 = vlaneseq
  %v923 = vshrl.u32 %v922, 7
  %v924 = vsub.s32 0, %v923
  %v925 = vrot.slane %v404, %v924
  %v926 = vlaneseq
  %v927 = vshrl.u32 %v926, 7
  %v928 = vsub.s32 0, %v927
  %v929 = vrot.slane %v406, %v928
  %v930 = vlaneseq
  %v931 = vshrl.u32 %v930, 7
  %v932 = vsub.s32 0, %v931
  %v933 = vrot.slane %v408, %v932
  %v934 = vlaneseq
  %v935 = vshrl.u32 %v934, 7
  %v936 = vsub.s32 0, %v935
  %v937 = vrot.slane %v410, %v936
  %v938 = vlaneseq
  %v939 = vshrl.u32 %v938, 7
  %v940 = vsub.s32 0, %v939
  %v941 = vrot.slane %v412, %v940
  %v942 = vlaneseq
  %v943 = vshrl.u32 %v942, 7
  %v944 = vsub.s32 0, %v943
  %v945 = vrot.slane %v414, %v944
  %v946 = vlaneseq
  %v947 = vshrl.u32 %v946, 7
  %v948 = vsub.s32 0, %v947
  %v949 = vrot.slane %v416, %v948
  %v950 = vlaneseq
  %v951 = vshrl.u32 %v950, 7
  %v952 = vsub.s32 0, %v951
  %v953 = vrot.slane %v434, %v952
  %v954 = vlaneseq
  %v955 = vshrl.u32 %v954, 7
  %v956 = vsub.s32 0, %v955
  %v957 = vrot.slane %v436, %v956
  %v958 = vlaneseq
  %v959 = vshrl.u32 %v958, 7
  %v960 = vsub.s32 0, %v959
  %v961 = vrot.slane %v438, %v960
  %v962 = vlaneseq
  %v963 = vshrl.u32 %v962, 7
  %v964 = vsub.s32 0, %v963
  %v965 = vrot.slane %v440, %v964
  %v966 = vlaneseq
  %v967 = vshrl.u32 %v966, 7
  %v968 = vsub.s32 0, %v967
  %v969 = vrot.slane %v442, %v968
  %v970 = vlaneseq
  %v971 = vshrl.u32 %v970, 7
  %v972 = vsub.s32 0, %v971
  %v973 = vrot.slane %v444, %v972
  %v974 = vlaneseq
  %v975 = vshrl.u32 %v974, 7
  %v976 = vsub.s32 0, %v975
  %v977 = vrot.slane %v446, %v976
  %v1076 = vmul.f32 %v589, %v479
  %v1077 = vmul.f32 %v593, %v479
  %v1078 = vmul.f32 %v597, %v479
  %v1079 = vmul.f32 %v601, %v479
  %v1080 = vmul.f32 %v605, %v479
  %v1081 = vmul.f32 %v609, %v479
  %v1082 = vmul.f32 %v613, %v479
  %v1083 = vmul.f32 %v617, %v479
  %v1084 = vmul.f32 %v621, %v479
  %v1085 = vmul.f32 %v625, %v479
  %v1086 = vmul.f32 %v629, %v479
  %v1087 = vmul.f32 %v633, %v479
  %v1088 = vmul.f32 %v637, %v479
  %v1089 = vmul.f32 %v641, %v479
  %v1090 = vmul.f32 %v645, %v479
  %v1091 = vmul.f32 %v649, %v479
  %v1092 = vmul.f32 %v653, %v479
  %v1093 = vmul.f32 %v657, %v479
  %v1094 = vmul.f32 %v661, %v479
  %v1095 = vmul.f32 %v665, %v479
  %v1096 = vmul.f32 %v669, %v479
  %v1097 = vmul.f32 %v673, %v479
  %v1098 = vmul.f32 %v677, %v479
  %v1099 = vmul.f32 %v681, %v479
  %v1100 = vmul.f32 %v685, %v479
  %v1101 = vmul.f32 %v689, %v479
  %v1102 = vmul.f32 %v693, %v479
  %v1103 = vmul.f32 %v697, %v479
  %v1104 = vmul.f32 %v701, %v479
  %v1105 = vmul.f32 %v705, %v479
  %v1106 = vmul.f32 %v709, %v479
  %v1107 = vmul.f32 %v713, %v479
  %v1108 = vmul.f32 %v717, %v479
  %v1109 = vmul.f32 %v721, %v479
  %v1110 = vmul.f32 %v725, %v479
  %v1111 = vmul.f32 %v729, %v479
  %v1112 = vmul.f32 %v733, %v479
  %v1113 = vmul.f32 %v737, %v479
  %v1114 = vmul.f32 %v741, %v479
  %v1115 = vmul.f32 %v745, %v479
  %v1116 = vmul.f32 %v749, %v479
  %v1117 = vmul.f32 %v753, %v479
  %v1118 = vmul.f32 %v757, %v479
  %v1119 = vmul.f32 %v761, %v479
  %v1120 = vmul.f32 %v765, %v479
  %v1121 = vmul.f32 %v769, %v479
  %v1122 = vmul.f32 %v773, %v479
  %v1123 = vmul.f32 %v777, %v479
  %v1124 = vmul.f32 %v781, %v479
  %v1125 = vmul.f32 %v785, %v479
  %v1126 = vmul.f32 %v789, %v479
  %v1127 = vmul.f32 %v793, %v479
  %v1128 = vmul.f32 %v797, %v479
  %v1129 = vmul.f32 %v801, %v479
  %v1130 = vmul.f32 %v805, %v479
  %v1131 = vmul.f32 %v809, %v479
  %v1132 = vmul.f32 %v813, %v479
  %v1133 = vmul.f32 %v817, %v479
  %v1134 = vmul.f32 %v821, %v479
  %v1135 = vmul.f32 %v825, %v479
  %v1136 = vmul.f32 %v829, %v479
  %v1137 = vmul.f32 %v833, %v479
  %v1138 = vmul.f32 %v837, %v479
  %v1139 = vmul.f32 %v841, %v479
  %v1140 = vmul.f32 %v845, %v479
  %v1141 = vmul.f32 %v849, %v479
  %v1142 = vmul.f32 %v853, %v479
  %v1143 = vmul.f32 %v857, %v479
  %v1144 = vmul.f32 %v861, %v479
  %v1145 = vmul.f32 %v865, %v479
  %v1146 = vmul.f32 %v869, %v479
  %v1147 = vmul.f32 %v873, %v479
  %v1148 = vmul.f32 %v877, %v479
  %v1149 = vmul.f32 %v881, %v479
  %v1150 = vmul.f32 %v885, %v479
  %v1151 = vmul.f32 %v889, %v479
  %v1152 = vmul.f32 %v893, %v479
  %v1153 = vmul.f32 %v897, %v479
  %v1154 = vmul.f32 %v901, %v479
  %v1155 = vmul.f32 %v905, %v479
  %v1156 = vmul.f32 %v909, %v479
  %v1157 = vmul.f32 %v913, %v479
  %v1158 = vmul.f32 %v917, %v479
  %v1159 = vmul.f32 %v921, %v479
  %v1160 = vmul.f32 %v925, %v479
  %v1161 = vmul.f32 %v929, %v479
  %v1162 = vmul.f32 %v933, %v479
  %v1163 = vmul.f32 %v937, %v479
  %v1164 = vmul.f32 %v941, %v479
  %v1165 = vmul.f32 %v945, %v479
  %v1166 = vmul.f32 %v949, %v479
  %v1167 = vmul.f32 %v953, %v479
  %v1168 = vmul.f32 %v957, %v479
  %v1169 = vmul.f32 %v961, %v479
  %v1170 = vmul.f32 %v965, %v479
  %v1171 = vmul.f32 %v969, %v479
  %v1172 = vmul.f32 %v973, %v479
  %v1173 = vmul.f32 %v977, %v479
  %v1272 = vlaneseq
  %v1273 = vshrl.u32 %v1272, 7
  %v1274 = vsub.s32 0, %v1273
  %v1275 = vrot.slane %v30, %v1274
  %v1276 = vlaneseq
  %v1277 = vshrl.u32 %v1276, 7
  %v1278 = vsub.s32 0, %v1277
  %v1279 = vrot.slane %v32, %v1278
  %v1280 = vlaneseq
  %v1281 = vshrl.u32 %v1280, 7
  %v1282 = vsub.s32 0, %v1281
  %v1283 = vrot.slane %v34, %v1282
  %v1284 = vlaneseq
  %v1285 = vshrl.u32 %v1284, 7
  %v1286 = vsub.s32 0, %v1285
  %v1287 = vrot.slane %v36, %v1286
  %v1288 = vlaneseq
  %v1289 = vshrl.u32 %v1288, 7
  %v1290 = vsub.s32 0, %v1289
  %v1291 = vrot.slane %v38, %v1290
  %v1292 = vlaneseq
  %v1293 = vshrl.u32 %v1292, 7
  %v1294 = vsub.s32 0, %v1293
  %v1295 = vrot.slane %v40, %v1294
  %v1296 = vlaneseq
  %v1297 = vshrl.u32 %v1296, 7
  %v1298 = vsub.s32 0, %v1297
  %v1299 = vrot.slane %v42, %v1298
  %v1300 = vlaneseq
  %v1301 = vshrl.u32 %v1300, 7
  %v1302 = vsub.s32 0, %v1301
  %v1303 = vrot.slane %v60, %v1302
  %v1304 = vlaneseq
  %v1305 = vshrl.u32 %v1304, 7
  %v1306 = vsub.s32 0, %v1305
  %v1307 = vrot.slane %v62, %v1306
  %v1308 = vlaneseq
  %v1309 = vshrl.u32 %v1308, 7
  %v1310 = vsub.s32 0, %v1309
  %v1311 = vrot.slane %v64, %v1310
  %v1312 = vlaneseq
  %v1313 = vshrl.u32 %v1312, 7
  %v1314 = vsub.s32 0, %v1313
  %v1315 = vrot.slane %v66, %v1314
  %v1316 = vlaneseq
  %v1317 = vshrl.u32 %v1316, 7
  %v1318 = vsub.s32 0, %v1317
  %v1319 = vrot.slane %v68, %v1318
  %v1320 = vlaneseq
  %v1321 = vshrl.u32 %v1320, 7
  %v1322 = vsub.s32 0, %v1321
  %v1323 = vrot.slane %v70, %v1322
  %v1324 = vlaneseq
  %v1325 = vshrl.u32 %v1324, 7
  %v1326 = vsub.s32 0, %v1325
  %v1327 = vrot.slane %v72, %v1326
  %v1328 = vlaneseq
  %v1329 = vshrl.u32 %v1328, 7
  %v1330 = vsub.s32 0, %v1329
  %v1331 = vrot.slane %v90, %v1330
  %v1332 = vlaneseq
  %v1333 = vshrl.u32 %v1332, 7
  %v1334 = vsub.s32 0, %v1333
  %v1335 = vrot.slane %v92, %v1334
  %v1336 = vlaneseq
  %v1337 = vshrl.u32 %v1336, 7
  %v1338 = vsub.s32 0, %v1337
  %v1339 = vrot.slane %v94, %v1338
  %v1340 = vlaneseq
  %v1341 = vshrl.u32 %v1340, 7
  %v1342 = vsub.s32 0, %v1341
  %v1343 = vrot.slane %v96, %v1342
  %v1344 = vlaneseq
  %v1345 = vshrl.u32 %v1344, 7
  %v1346 = vsub.s32 0, %v1345
  %v1347 = vrot.slane %v98, %v1346
  %v1348 = vlaneseq
  %v1349 = vshrl.u32 %v1348, 7
  %v1350 = vsub.s32 0, %v1349
  %v1351 = vrot.slane %v100, %v1350
  %v1352 = vlaneseq
  %v1353 = vshrl.u32 %v1352, 7
  %v1354 = vsub.s32 0, %v1353
  %v1355 = vrot.slane %v102, %v1354
  %v1356 = vlaneseq
  %v1357 = vshrl.u32 %v1356, 7
  %v1358 = vsub.s32 0, %v1357
  %v1359 = vrot.slane %v120, %v1358
  %v1360 = vlaneseq
  %v1361 = vshrl.u32 %v1360, 7
  %v1362 = vsub.s32 0, %v1361
  %v1363 = vrot.slane %v122, %v1362
  %v1364 = vlaneseq
  %v1365 = vshrl.u32 %v1364, 7
  %v1366 = vsub.s32 0, %v1365
  %v1367 = vrot.slane %v124, %v1366
  %v1368 = vlaneseq
  %v1369 = vshrl.u32 %v1368, 7
  %v1370 = vsub.s32 0, %v1369
  %v1371 = vrot.slane %v126, %v1370
  %v1372 = vlaneseq
  %v1373 = vshrl.u32 %v1372, 7
  %v1374 = vsub.s32 0, %v1373
  %v1375 = vrot.slane %v128, %v1374
  %v1376 = vlaneseq
  %v1377 = vshrl.u32 %v1376, 7
  %v1378 = vsub.s32 0, %v1377
  %v1379 = vrot.slane %v130, %v1378
  %v1380 = vlaneseq
  %v1381 = vshrl.u32 %v1380, 7
  %v1382 = vsub.s32 0, %v1381
  %v1383 = vrot.slane %v132, %v1382
  %v1384 = vlaneseq
  %v1385 = vshrl.u32 %v1384, 7
  %v1386 = vsub.s32 0, %v1385
  %v1387 = vrot.slane %v150, %v1386
  %v1388 = vlaneseq
  %v1389 = vshrl.u32 %v1388, 7
  %v1390 = vsub.s32 0, %v1389
  %v1391 = vrot.slane %v152, %v1390
  %v1392 = vlaneseq
  %v1393 = vshrl.u32 %v1392, 7
  %v1394 = vsub.s32 0, %v1393
  %v1395 = vrot.slane %v154, %v1394
  %v1396 = vlaneseq
  %v1397 = vshrl.u32 %v1396, 7
  %v1398 = vsub.s32 0, %v1397
  %v1399 = vrot.slane %v156, %v1398
  %v1400 = vlaneseq
  %v1401 = vshrl.u32 %v1400, 7
  %v1402 = vsub.s32 0, %v1401
  %v1403 = vrot.slane %v158, %v1402
  %v1404 = vlaneseq
  %v1405 = vshrl.u32 %v1404, 7
  %v1406 = vsub.s32 0, %v1405
  %v1407 = vrot.slane %v160, %v1406
  %v1408 = vlaneseq
  %v1409 = vshrl.u32 %v1408, 7
  %v1410 = vsub.s32 0, %v1409
  %v1411 = vrot.slane %v162, %v1410
  %v1412 = vlaneseq
  %v1413 = vshrl.u32 %v1412, 7
  %v1414 = vsub.s32 0, %v1413
  %v1415 = vrot.slane %v180, %v1414
  %v1416 = vlaneseq
  %v1417 = vshrl.u32 %v1416, 7
  %v1418 = vsub.s32 0, %v1417
  %v1419 = vrot.slane %v182, %v1418
  %v1420 = vlaneseq
  %v1421 = vshrl.u32 %v1420, 7
  %v1422 = vsub.s32 0, %v1421
  %v1423 = vrot.slane %v184, %v1422
  %v1424 = vlaneseq
  %v1425 = vshrl.u32 %v1424, 7
  %v1426 = vsub.s32 0, %v1425
  %v1427 = vrot.slane %v186, %v1426
  %v1428 = vlaneseq
  %v1429 = vshrl.u32 %v1428, 7
  %v1430 = vsub.s32 0, %v1429
  %v1431 = vrot.slane %v188, %v1430
  %v1432 = vlaneseq
  %v1433 = vshrl.u32 %v1432, 7
  %v1434 = vsub.s32 0, %v1433
  %v1435 = vrot.slane %v190, %v1434
  %v1436 = vlaneseq
  %v1437 = vshrl.u32 %v1436, 7
  %v1438 = vsub.s32 0, %v1437
  %v1439 = vrot.slane %v192, %v1438
  %v1440 = vlaneseq
  %v1441 = vshrl.u32 %v1440, 7
  %v1442 = vsub.s32 0, %v1441
  %v1443 = vrot.slane %v210, %v1442
  %v1444 = vlaneseq
  %v1445 = vshrl.u32 %v1444, 7
  %v1446 = vsub.s32 0, %v1445
  %v1447 = vrot.slane %v212, %v1446
  %v1448 = vlaneseq
  %v1449 = vshrl.u32 %v1448, 7
  %v1450 = vsub.s32 0, %v1449
  %v1451 = vrot.slane %v214, %v1450
  %v1452 = vlaneseq
  %v1453 = vshrl.u32 %v1452, 7
  %v1454 = vsub.s32 0, %v1453
  %v1455 = vrot.slane %v216, %v1454
  %v1456 = vlaneseq
  %v1457 = vshrl.u32 %v1456, 7
  %v1458 = vsub.s32 0, %v1457
  %v1459 = vrot.slane %v218, %v1458
  %v1460 = vlaneseq
  %v1461 = vshrl.u32 %v1460, 7
  %v1462 = vsub.s32 0, %v1461
  %v1463 = vrot.slane %v220, %v1462
  %v1464 = vlaneseq
  %v1465 = vshrl.u32 %v1464, 7
  %v1466 = vsub.s32 0, %v1465
  %v1467 = vrot.slane %v222, %v1466
  %v1468 = vlaneseq
  %v1469 = vshrl.u32 %v1468, 7
  %v1470 = vsub.s32 0, %v1469
  %v1471 = vrot.slane %v255, %v1470
  %v1472 = vlaneseq
  %v1473 = vshrl.u32 %v1472, 7
  %v1474 = vsub.s32 0, %v1473
  %v1475 = vrot.slane %v257, %v1474
  %v1476 = vlaneseq
  %v1477 = vshrl.u32 %v1476, 7
  %v1478 = vsub.s32 0, %v1477
  %v1479 = vrot.slane %v259, %v1478
  %v1480 = vlaneseq
  %v1481 = vshrl.u32 %v1480, 7
  %v1482 = vsub.s32 0, %v1481
  %v1483 = vrot.slane %v261, %v1482
  %v1484 = vlaneseq
  %v1485 = vshrl.u32 %v1484, 7
  %v1486 = vsub.s32 0, %v1485
  %v1487 = vrot.slane %v263, %v1486
  %v1488 = vlaneseq
  %v1489 = vshrl.u32 %v1488, 7
  %v1490 = vsub.s32 0, %v1489
  %v1491 = vrot.slane %v265, %v1490
  %v1492 = vlaneseq
  %v1493 = vshrl.u32 %v1492, 7
  %v1494 = vsub.s32 0, %v1493
  %v1495 = vrot.slane %v267, %v1494
  %v1496 = vlaneseq
  %v1497 = vshrl.u32 %v1496, 7
  %v1498 = vsub.s32 0, %v1497
  %v1499 = vrot.slane %v285, %v1498
  %v1500 = vlaneseq
  %v1501 = vshrl.u32 %v1500, 7
  %v1502 = vsub.s32 0, %v1501
  %v1503 = vrot.slane %v287, %v1502
  %v1504 = vlaneseq
  %v1505 = vshrl.u32 %v1504, 7
  %v1506 = vsub.s32 0, %v1505
  %v1507 = vrot.slane %v289, %v1506
  %v1508 = vlaneseq
  %v1509 = vshrl.u32 %v1508, 7
  %v1510 = vsub.s32 0, %v1509
  %v1511 = vrot.slane %v291, %v1510
  %v1512 = vlaneseq
  %v1513 = vshrl.u32 %v1512, 7
  %v1514 = vsub.s32 0, %v1513
  %v1515 = vrot.slane %v293, %v1514
  %v1516 = vlaneseq
  %v1517 = vshrl.u32 %v1516, 7
  %v1518 = vsub.s32 0, %v1517
  %v1519 = vrot.slane %v295, %v1518
  %v1520 = vlaneseq
  %v1521 = vshrl.u32 %v1520, 7
  %v1522 = vsub.s32 0, %v1521
  %v1523 = vrot.slane %v297, %v1522
  %v1524 = vlaneseq
  %v1525 = vshrl.u32 %v1524, 7
  %v1526 = vsub.s32 0, %v1525
  %v1527 = vrot.slane %v315, %v1526
  %v1528 = vlaneseq
  %v1529 = vshrl.u32 %v1528, 7
  %v1530 = vsub.s32 0, %v1529
  %v1531 = vrot.slane %v317, %v1530
  %v1532 = vlaneseq
  %v1533 = vshrl.u32 %v1532, 7
  %v1534 = vsub.s32 0, %v1533
  %v1535 = vrot.slane %v319, %v1534
  %v1536 = vlaneseq
  %v1537 = vshrl.u32 %v1536, 7
  %v1538 = vsub.s32 0, %v1537
  %v1539 = vrot.slane %v321, %v1538
  %v1540 = vlaneseq
  %v1541 = vshrl.u32 %v1540, 7
  %v1542 = vsub.s32 0, %v1541
  %v1543 = vrot.slane %v323, %v1542
  %v1544 = vlaneseq
  %v1545 = vshrl.u32 %v1544, 7
  %v1546 = vsub.s32 0, %v1545
  %v1547 = vrot.slane %v325, %v1546
  %v1548 = vlaneseq
  %v1549 = vshrl.u32 %v1548, 7
  %v1550 = vsub.s32 0, %v1549
  %v1551 = vrot.slane %v327, %v1550
  %v1552 = vlaneseq
  %v1553 = vshrl.u32 %v1552, 7
  %v1554 = vsub.s32 0, %v1553
  %v1555 = vrot.slane %v345, %v1554
  %v1556 = vlaneseq
  %v1557 = vshrl.u32 %v1556, 7
  %v1558 = vsub.s32 0, %v1557
  %v1559 = vrot.slane %v347, %v1558
  %v1560 = vlaneseq
  %v1561 = vshrl.u32 %v1560, 7
  %v1562 = vsub.s32 0, %v1561
  %v1563 = vrot.slane %v349, %v1562
  %v1564 = vlaneseq
  %v1565 = vshrl.u32 %v1564, 7
  %v1566 = vsub.s32 0, %v1565
  %v1567 = vrot.slane %v351, %v1566
  %v1568 = vlaneseq
  %v1569 = vshrl.u32 %v1568, 7
  %v1570 = vsub.s32 0, %v1569
  %v1571 = vrot.slane %v353, %v1570
  %v1572 = vlaneseq
  %v1573 = vshrl.u32 %v1572, 7
  %v1574 = vsub.s32 0, %v1573
  %v1575 = vrot.slane %v355, %v1574
  %v1576 = vlaneseq
  %v1577 = vshrl.u32 %v1576, 7
  %v1578 = vsub.s32 0, %v1577
  %v1579 = vrot.slane %v357, %v1578
  %v1580 = vlaneseq
  %v1581 = vshrl.u32 %v1580, 7
  %v1582 = vsub.s32 0, %v1581
  %v1583 = vrot.slane %v375, %v1582
  %v1584 = vlaneseq
  %v1585 = vshrl.u32 %v1584, 7
  %v1586 = vsub.s32 0, %v1585
  %v1587 = vrot.slane %v377, %v1586
  %v1588 = vlaneseq
  %v1589 = vshrl.u32 %v1588, 7
  %v1590 = vsub.s32 0, %v1589
  %v1591 = vrot.slane %v379, %v1590
  %v1592 = vlaneseq
  %v1593 = vshrl.u32 %v1592, 7
  %v1594 = vsub.s32 0, %v1593
  %v1595 = vrot.slane %v381, %v1594
  %v1596 = vlaneseq
  %v1597 = vshrl.u32 %v1596, 7
  %v1598 = vsub.s32 0, %v1597
  %v1599 = vrot.slane %v383, %v1598
  %v1600 = vlaneseq
  %v1601 = vshrl.u32 %v1600, 7
  %v1602 = vsub.s32 0, %v1601
  %v1603 = vrot.slane %v385, %v1602
  %v1604 = vlaneseq
  %v1605 = vshrl.u32 %v1604, 7
  %v1606 = vsub.s32 0, %v1605
  %v1607 = vrot.slane %v387, %v1606
  %v1608 = vlaneseq
  %v1609 = vshrl.u32 %v1608, 7
  %v1610 = vsub.s32 0, %v1609
  %v1611 = vrot.slane %v405, %v1610
  %v1612 = vlaneseq
  %v1613 = vshrl.u32 %v1612, 7
  %v1614 = vsub.s32 0, %v1613
  %v1615 = vrot.slane %v407, %v1614
  %v1616 = vlaneseq
  %v1617 = vshrl.u32 %v1616, 7
  %v1618 = vsub.s32 0, %v1617
  %v1619 = vrot.slane %v409, %v1618
  %v1620 = vlaneseq
  %v1621 = vshrl.u32 %v1620, 7
  %v1622 = vsub.s32 0, %v1621
  %v1623 = vrot.slane %v411, %v1622
  %v1624 = vlaneseq
  %v1625 = vshrl.u32 %v1624, 7
  %v1626 = vsub.s32 0, %v1625
  %v1627 = vrot.slane %v413, %v1626
  %v1628 = vlaneseq
  %v1629 = vshrl.u32 %v1628, 7
  %v1630 = vsub.s32 0, %v1629
  %v1631 = vrot.slane %v415, %v1630
  %v1632 = vlaneseq
  %v1633 = vshrl.u32 %v1632, 7
  %v1634 = vsub.s32 0, %v1633
  %v1635 = vrot.slane %v417, %v1634
  %v1636 = vlaneseq
  %v1637 = vshrl.u32 %v1636, 7
  %v1638 = vsub.s32 0, %v1637
  %v1639 = vrot.slane %v435, %v1638
  %v1640 = vlaneseq
  %v1641 = vshrl.u32 %v1640, 7
  %v1642 = vsub.s32 0, %v1641
  %v1643 = vrot.slane %v437, %v1642
  %v1644 = vlaneseq
  %v1645 = vshrl.u32 %v1644, 7
  %v1646 = vsub.s32 0, %v1645
  %v1647 = vrot.slane %v439, %v1646
  %v1648 = vlaneseq
  %v1649 = vshrl.u32 %v1648, 7
  %v1650 = vsub.s32 0, %v1649
  %v1651 = vrot.slane %v441, %v1650
  %v1652 = vlaneseq
  %v1653 = vshrl.u32 %v1652, 7
  %v1654 = vsub.s32 0, %v1653
  %v1655 = vrot.slane %v443, %v1654
  %v1656 = vlaneseq
  %v1657 = vshrl.u32 %v1656, 7
  %v1658 = vsub.s32 0, %v1657
  %v1659 = vrot.slane %v445, %v1658
  %v1660 = vlaneseq
  %v1661 = vshrl.u32 %v1660, 7
  %v1662 = vsub.s32 0, %v1661
  %v1663 = vrot.slane %v447, %v1662
  %v1762 = vmul.f32 %v1275, %v480
  %v1763 = vmul.f32 %v1279, %v480
  %v1764 = vmul.f32 %v1283, %v480
  %v1765 = vmul.f32 %v1287, %v480
  %v1766 = vmul.f32 %v1291, %v480
  %v1767 = vmul.f32 %v1295, %v480
  %v1768 = vmul.f32 %v1299, %v480
  %v1769 = vmul.f32 %v1303, %v480
  %v1770 = vmul.f32 %v1307, %v480
  %v1771 = vmul.f32 %v1311, %v480
  %v1772 = vmul.f32 %v1315, %v480
  %v1773 = vmul.f32 %v1319, %v480
  %v1774 = vmul.f32 %v1323, %v480
  %v1775 = vmul.f32 %v1327, %v480
  %v1776 = vmul.f32 %v1331, %v480
  %v1777 = vmul.f32 %v1335, %v480
  %v1778 = vmul.f32 %v1339, %v480
  %v1779 = vmul.f32 %v1343, %v480
  %v1780 = vmul.f32 %v1347, %v480
  %v1781 = vmul.f32 %v1351, %v480
  %v1782 = vmul.f32 %v1355, %v480
  %v1783 = vmul.f32 %v1359, %v480
  %v1784 = vmul.f32 %v1363, %v480
  %v1785 = vmul.f32 %v1367, %v480
  %v1786 = vmul.f32 %v1371, %v480
  %v1787 = vmul.f32 %v1375, %v480
  %v1788 = vmul.f32 %v1379, %v480
  %v1789 = vmul.f32 %v1383, %v480
  %v1790 = vmul.f32 %v1387, %v480
  %v1791 = vmul.f32 %v1391, %v480
  %v1792 = vmul.f32 %v1395, %v480
  %v1793 = vmul.f32 %v1399, %v480
  %v1794 = vmul.f32 %v1403, %v480
  %v1795 = vmul.f32 %v1407, %v480
  %v1796 = vmul.f32 %v1411, %v480
  %v1797 = vmul.f32 %v1415, %v480
  %v1798 = vmul.f32 %v1419, %v480
  %v1799 = vmul.f32 %v1423, %v480
  %v1800 = vmul.f32 %v1427, %v480
  %v1801 = vmul.f32 %v1431, %v480
  %v1802 = vmul.f32 %v1435, %v480
  %v1803 = vmul.f32 %v1439, %v480
  %v1804 = vmul.f32 %v1443, %v480
  %v1805 = vmul.f32 %v1447, %v480
  %v1806 = vmul.f32 %v1451, %v480
  %v1807 = vmul.f32 %v1455, %v480
  %v1808 = vmul.f32 %v1459, %v480
  %v1809 = vmul.f32 %v1463, %v480
  %v1810 = vmul.f32 %v1467, %v480
  %v1811 = vmul.f32 %v1471, %v480
  %v1812 = vmul.f32 %v1475, %v480
  %v1813 = vmul.f32 %v1479, %v480
  %v1814 = vmul.f32 %v1483, %v480
  %v1815 = vmul.f32 %v1487, %v480
  %v1816 = vmul.f32 %v1491, %v480
  %v1817 = vmul.f32 %v1495, %v480
  %v1818 = vmul.f32 %v1499, %v480
  %v1819 = vmul.f32 %v1503, %v480
  %v1820 = vmul.f32 %v1507, %v480
  %v1821 = vmul.f32 %v1511, %v480
  %v1822 = vmul.f32 %v1515, %v480
  %v1823 = vmul.f32 %v1519, %v480
  %v1824 = vmul.f32 %v1523, %v480
  %v1825 = vmul.f32 %v1527, %v480
  %v1826 = vmul.f32 %v1531, %v480
  %v1827 = vmul.f32 %v1535, %v480
  %v1828 = vmul.f32 %v1539, %v480
  %v1829 = vmul.f32 %v1543, %v480
  %v1830 = vmul.f32 %v1547, %v480
  %v1831 = vmul.f32 %v1551, %v480
  %v1832 = vmul.f32 %v1555, %v480
  %v1833 = vmul.f32 %v1559, %v480
  %v1834 = vmul.f32 %v1563, %v480
  %v1835 = vmul.f32 %v1567, %v480
  %v1836 = vmul.f32 %v1571, %v480
  %v1837 = vmul.f32 %v1575, %v480
  %v1838 = vmul.f32 %v1579, %v480
  %v1839 = vmul.f32 %v1583, %v480
  %v1840 = vmul.f32 %v1587, %v480
  %v1841 = vmul.f32 %v1591, %v480
  %v1842 = vmul.f32 %v1595, %v480
  %v1843 = vmul.f32 %v1599, %v480
  %v1844 = vmul.f32 %v1603, %v480
  %v1845 = vmul.f32 %v1607, %v480
  %v1846 = vmul.f32 %v1611, %v480
  %v1847 = vmul.f32 %v1615, %v480
  %v1848 = vmul.f32 %v1619, %v480
  %v1849 = vmul.f32 %v1623, %v480
  %v1850 = vmul.f32 %v1627, %v480
  %v1851 = vmul.f32 %v1631, %v480
  %v1852 = vmul.f32 %v1635, %v480
  %v1853 = vmul.f32 %v1639, %v480
  %v1854 = vmul.f32 %v1643, %v480
  %v1855 = vmul.f32 %v1647, %v480
  %v1856 = vmul.f32 %v1651, %v480
  %v1857 = vmul.f32 %v1655, %v480
  %v1858 = vmul.f32 %v1659, %v480
  %v1859 = vmul.f32 %v1663, %v480
  %v1860 = vadd.f32 %v1076, %v1762
  %v1861 = vadd.f32 %v1077, %v1763
  %v1862 = vadd.f32 %v1078, %v1764
  %v1863 = vadd.f32 %v1079, %v1765
  %v1864 = vadd.f32 %v1080, %v1766
  %v1865 = vadd.f32 %v1081, %v1767
  %v1866 = vadd.f32 %v1082, %v1768
  %v1867 = vadd.f32 %v1083, %v1769
  %v1868 = vadd.f32 %v1084, %v1770
  %v1869 = vadd.f32 %v1085, %v1771
  %v1870 = vadd.f32 %v1086, %v1772
  %v1871 = vadd.f32 %v1087, %v1773
  %v1872 = vadd.f32 %v1088, %v1774
  %v1873 = vadd.f32 %v1089, %v1775
  %v1874 = vadd.f32 %v1090, %v1776
  %v1875 = vadd.f32 %v1091, %v1777
  %v1876 = vadd.f32 %v1092, %v1778
  %v1877 = vadd.f32 %v1093, %v1779
  %v1878 = vadd.f32 %v1094, %v1780
  %v1879 = vadd.f32 %v1095, %v1781
  %v1880 = vadd.f32 %v1096, %v1782
  %v1881 = vadd.f32 %v1097, %v1783
  %v1882 = vadd.f32 %v1098, %v1784
  %v1883 = vadd.f32 %v1099, %v1785
  %v1884 = vadd.f32 %v1100, %v1786
  %v1885 = vadd.f32 %v1101, %v1787
  %v1886 = vadd.f32 %v1102, %v1788
  %v1887 = vadd.f32 %v1103, %v1789
  %v1888 = vadd.f32 %v1104, %v1790
  %v1889 = vadd.f32 %v1105, %v1791
  %v1890 = vadd.f32 %v1106, %v1792
  %v1891 = vadd.f32 %v1107, %v1793
  %v1892 = vadd.f32 %v1108, %v1794
  %v1893 = vadd.f32 %v1109, %v1795
  %v1894 = vadd.f32 %v1110, %v1796
  %v1895 = vadd.f32 %v1111, %v1797
  %v1896 = vadd.f32 %v1112, %v1798
  %v1897 = vadd.f32 %v1113, %v1799
  %v1898 = vadd.f32 %v1114, %v1800
  %v1899 = vadd.f32 %v1115, %v1801
  %v1900 = vadd.f32 %v1116, %v1802
  %v1901 = vadd.f32 %v1117, %v1803
  %v1902 = vadd.f32 %v1118, %v1804
  %v1903 = vadd.f32 %v1119, %v1805
  %v1904 = vadd.f32 %v1120, %v1806
  %v1905 = vadd.f32 %v1121, %v1807
  %v1906 = vadd.f32 %v1122, %v1808
  %v1907 = vadd.f32 %v1123, %v1809
  %v1908 = vadd.f32 %v1124, %v1810
  %v1909 = vadd.f32 %v1125, %v1811
  %v1910 = vadd.f32 %v1126, %v1812
  %v1911 = vadd.f32 %v1127, %v1813
  %v1912 = vadd.f32 %v1128, %v1814
  %v1913 = vadd.f32 %v1129, %v1815
  %v1914 = vadd.f32 %v1130, %v1816
  %v1915 = vadd.f32 %v1131, %v1817
  %v1916 = vadd.f32 %v1132, %v1818
  %v1917 = vadd.f32 %v1133, %v1819
  %v1918 = vadd.f32 %v1134, %v1820
  %v1919 = vadd.f32 %v1135, %v1821
  %v1920 = vadd.f32 %v1136, %v1822
  %v1921 = vadd.f32 %v1137, %v1823
  %v1922 = vadd.f32 %v1138, %v1824
  %v1923 = vadd.f32 %v1139, %v1825
  %v1924 = vadd.f32 %v1140, %v1826
  %v1925 = vadd.f32 %v1141, %v1827
  %v1926 = vadd.f32 %v1142, %v1828
  %v1927 = vadd.f32 %v1143, %v1829
  %v1928 = vadd.f32 %v1144, %v1830
  %v1929 = vadd.f32 %v1145, %v1831
  %v1930 = vadd.f32 %v1146, %v1832
  %v1931 = vadd.f32 %v1147, %v1833
  %v1932 = vadd.f32 %v1148, %v1834
  %v1933 = vadd.f32 %v1149, %v1835
  %v1934 = vadd.f32 %v1150, %v1836
  %v1935 = vadd.f32 %v1151, %v1837
  %v1936 = vadd.f32 %v1152, %v1838
  %v1937 = vadd.f32 %v1153, %v1839
  %v1938 = vadd.f32 %v1154, %v1840
  %v1939 = vadd.f32 %v1155, %v1841
  %v1940 = vadd.f32 %v1156, %v1842
  %v1941 = vadd.f32 %v1157, %v1843
  %v1942 = vadd.f32 %v1158, %v1844
  %v1943 = vadd.f32 %v1159, %v1845
  %v1944 = vadd.f32 %v1160, %v1846
  %v1945 = vadd.f32 %v1161, %v1847
  %v1946 = vadd.f32 %v1162, %v1848
  %v1947 = vadd.f32 %v1163, %v1849
  %v1948 = vadd.f32 %v1164, %v1850
  %v1949 = vadd.f32 %v1165, %v1851
  %v1950 = vadd.f32 %v1166, %v1852
  %v1951 = vadd.f32 %v1167, %v1853
  %v1952 = vadd.f32 %v1168, %v1854
  %v1953 = vadd.f32 %v1169, %v1855
  %v1954 = vadd.f32 %v1170, %v1856
  %v1955 = vadd.f32 %v1171, %v1857
  %v1956 = vadd.f32 %v1172, %v1858
  %v1957 = vadd.f32 %v1173, %v1859
  %v1972 = vlaneseq
  %v1973 = vshrl.u32 %v1972, 7
  %v1974 = vsub.s32 0, %v1973
  %v1975 = vrot.slane %v43, %v1974
  %v1976 = vlaneseq
  %v1977 = vshrl.u32 %v1976, 7
  %v1978 = vsub.s32 0, %v1977
  %v1979 = vrot.slane %v73, %v1978
  %v1980 = vlaneseq
  %v1981 = vshrl.u32 %v1980, 7
  %v1982 = vsub.s32 0, %v1981
  %v1983 = vrot.slane %v103, %v1982
  %v1984 = vlaneseq
  %v1985 = vshrl.u32 %v1984, 7
  %v1986 = vsub.s32 0, %v1985
  %v1987 = vrot.slane %v133, %v1986
  %v1988 = vlaneseq
  %v1989 = vshrl.u32 %v1988, 7
  %v1990 = vsub.s32 0, %v1989
  %v1991 = vrot.slane %v163, %v1990
  %v1992 = vlaneseq
  %v1993 = vshrl.u32 %v1992, 7
  %v1994 = vsub.s32 0, %v1993
  %v1995 = vrot.slane %v193, %v1994
  %v1996 = vlaneseq
  %v1997 = vshrl.u32 %v1996, 7
  %v1998 = vsub.s32 0, %v1997
  %v1999 = vrot.slane %v223, %v1998
  %v2000 = vlaneseq
  %v2001 = vshrl.u32 %v2000, 7
  %v2002 = vsub.s32 0, %v2001
  %v2003 = vrot.slane %v268, %v2002
  %v2004 = vlaneseq
  %v2005 = vshrl.u32 %v2004, 7
  %v2006 = vsub.s32 0, %v2005
  %v2007 = vrot.slane %v298, %v2006
  %v2008 = vlaneseq
  %v2009 = vshrl.u32 %v2008, 7
  %v2010 = vsub.s32 0, %v2009
  %v2011 = vrot.slane %v328, %v2010
  %v2012 = vlaneseq
  %v2013 = vshrl.u32 %v2012, 7
  %v2014 = vsub.s32 0, %v2013
  %v2015 = vrot.slane %v358, %v2014
  %v2016 = vlaneseq
  %v2017 = vshrl.u32 %v2016, 7
  %v2018 = vsub.s32 0, %v2017
  %v2019 = vrot.slane %v388, %v2018
  %v2020 = vlaneseq
  %v2021 = vshrl.u32 %v2020, 7
  %v2022 = vsub.s32 0, %v2021
  %v2023 = vrot.slane %v418, %v2022
  %v2024 = vlaneseq
  %v2025 = vshrl.u32 %v2024, 7
  %v2026 = vsub.s32 0, %v2025
  %v2027 = vrot.slane %v448, %v2026
  %v2042 = vmul.f32 %v593, %v481
  %v2043 = vmul.f32 %v597, %v481
  %v2044 = vmul.f32 %v601, %v481
  %v2045 = vmul.f32 %v605, %v481
  %v2046 = vmul.f32 %v609, %v481
  %v2047 = vmul.f32 %v613, %v481
  %v2048 = vmul.f32 %v1975, %v481
  %v2049 = vmul.f32 %v621, %v481
  %v2050 = vmul.f32 %v625, %v481
  %v2051 = vmul.f32 %v629, %v481
  %v2052 = vmul.f32 %v633, %v481
  %v2053 = vmul.f32 %v637, %v481
  %v2054 = vmul.f32 %v641, %v481
  %v2055 = vmul.f32 %v1979, %v481
  %v2056 = vmul.f32 %v649, %v481
  %v2057 = vmul.f32 %v653, %v481
  %v2058 = vmul.f32 %v657, %v481
  %v2059 = vmul.f32 %v661, %v481
  %v2060 = vmul.f32 %v665, %v481
  %v2061 = vmul.f32 %v669, %v481
  %v2062 = vmul.f32 %v1983, %v481
  %v2063 = vmul.f32 %v677, %v481
  %v2064 = vmul.f32 %v681, %v481
  %v2065 = vmul.f32 %v685, %v481
  %v2066 = vmul.f32 %v689, %v481
  %v2067 = vmul.f32 %v693, %v481
  %v2068 = vmul.f32 %v697, %v481
  %v2069 = vmul.f32 %v1987, %v481
  %v2070 = vmul.f32 %v705, %v481
  %v2071 = vmul.f32 %v709, %v481
  %v2072 = vmul.f32 %v713, %v481
  %v2073 = vmul.f32 %v717, %v481
  %v2074 = vmul.f32 %v721, %v481
  %v2075 = vmul.f32 %v725, %v481
  %v2076 = vmul.f32 %v1991, %v481
  %v2077 = vmul.f32 %v733, %v481
  %v2078 = vmul.f32 %v737, %v481
  %v2079 = vmul.f32 %v741, %v481
  %v2080 = vmul.f32 %v745, %v481
  %v2081 = vmul.f32 %v749, %v481
  %v2082 = vmul.f32 %v753, %v481
  %v2083 = vmul.f32 %v1995, %v481
  %v2084 = vmul.f32 %v761, %v481
  %v2085 = vmul.f32 %v765, %v481
  %v2086 = vmul.f32 %v769, %v481
  %v2087 = vmul.f32 %v773, %v481
  %v2088 = vmul.f32 %v777, %v481
  %v2089 = vmul.f32 %v781, %v481
  %v2090 = vmul.f32 %v1999, %v481
  %v2091 = vmul.f32 %v789, %v481
  %v2092 = vmul.f32 %v793, %v481
  %v2093 = vmul.f32 %v797, %v481
  %v2094 = vmul.f32 %v801, %v481
  %v2095 = vmul.f32 %v805, %v481
  %v2096 = vmul.f32 %v809, %v481
  %v2097 = vmul.f32 %v2003, %v481
  %v2098 = vmul.f32 %v817, %v481
  %v2099 = vmul.f32 %v821, %v481
  %v2100 = vmul.f32 %v825, %v481
  %v2101 = vmul.f32 %v829, %v481
  %v2102 = vmul.f32 %v833, %v481
  %v2103 = vmul.f32 %v837, %v481
  %v2104 = vmul.f32 %v2007, %v481
  %v2105 = vmul.f32 %v845, %v481
  %v2106 = vmul.f32 %v849, %v481
  %v2107 = vmul.f32 %v853, %v481
  %v2108 = vmul.f32 %v857, %v481
  %v2109 = vmul.f32 %v861, %v481
  %v2110 = vmul.f32 %v865, %v481
  %v2111 = vmul.f32 %v2011, %v481
  %v2112 = vmul.f32 %v873, %v481
  %v2113 = vmul.f32 %v877, %v481
  %v2114 = vmul.f32 %v881, %v481
  %v2115 = vmul.f32 %v885, %v481
  %v2116 = vmul.f32 %v889, %v481
  %v2117 = vmul.f32 %v893, %v481
  %v2118 = vmul.f32 %v2015, %v481
  %v2119 = vmul.f32 %v901, %v481
  %v2120 = vmul.f32 %v905, %v481
  %v2121 = vmul.f32 %v909, %v481
  %v2122 = vmul.f32 %v913, %v481
  %v2123 = vmul.f32 %v917, %v481
  %v2124 = vmul.f32 %v921, %v481
  %v2125 = vmul.f32 %v2019, %v481
  %v2126 = vmul.f32 %v929, %v481
  %v2127 = vmul.f32 %v933, %v481
  %v2128 = vmul.f32 %v937, %v481
  %v2129 = vmul.f32 %v941, %v481
  %v2130 = vmul.f32 %v945, %v481
  %v2131 = vmul.f32 %v949, %v481
  %v2132 = vmul.f32 %v2023, %v481
  %v2133 = vmul.f32 %v957, %v481
  %v2134 = vmul.f32 %v961, %v481
  %v2135 = vmul.f32 %v965, %v481
  %v2136 = vmul.f32 %v969, %v481
  %v2137 = vmul.f32 %v973, %v481
  %v2138 = vmul.f32 %v977, %v481
  %v2139 = vmul.f32 %v2027, %v481
  %v2140 = vadd.f32 %v1860, %v2042
  %v2141 = vadd.f32 %v1861, %v2043
  %v2142 = vadd.f32 %v1862, %v2044
  %v2143 = vadd.f32 %v1863, %v2045
  %v2144 = vadd.f32 %v1864, %v2046
  %v2145 = vadd.f32 %v1865, %v2047
  %v2146 = vadd.f32 %v1866, %v2048
  %v2147 = vadd.f32 %v1867, %v2049
  %v2148 = vadd.f32 %v1868, %v2050
  %v2149 = vadd.f32 %v1869, %v2051
  %v2150 = vadd.f32 %v1870, %v2052
  %v2151 = vadd.f32 %v1871, %v2053
  %v2152 = vadd.f32 %v1872, %v2054
  %v2153 = vadd.f32 %v1873, %v2055
  %v2154 = vadd.f32 %v1874, %v2056
  %v2155 = vadd.f32 %v1875, %v2057
  %v2156 = vadd.f32 %v1876, %v2058
  %v2157 = vadd.f32 %v1877, %v2059
  %v2158 = vadd.f32 %v1878, %v2060
  %v2159 = vadd.f32 %v1879, %v2061
  %v2160 = vadd.f32 %v1880, %v2062
  %v2161 = vadd.f32 %v1881, %v2063
  %v2162 = vadd.f32 %v1882, %v2064
  %v2163 = vadd.f32 %v1883, %v2065
  %v2164 = vadd.f32 %v1884, %v2066
  %v2165 = vadd.f32 %v1885, %v2067
  %v2166 = vadd.f32 %v1886, %v2068
  %v2167 = vadd.f32 %v1887, %v2069
  %v2168 = vadd.f32 %v1888, %v2070
  %v2169 = vadd.f32 %v1889, %v2071
  %v2170 = vadd.f32 %v1890, %v2072
  %v2171 = vadd.f32 %v1891, %v2073
  %v2172 = vadd.f32 %v1892, %v2074
  %v2173 = vadd.f32 %v1893, %v2075
  %v2174 = vadd.f32 %v1894, %v2076
  %v2175 = vadd.f32 %v1895, %v2077
  %v2176 = vadd.f32 %v1896, %v2078
  %v2177 = vadd.f32 %v1897, %v2079
  %v2178 = vadd.f32 %v1898, %v2080
  %v2179 = vadd.f32 %v1899, %v2081
  %v2180 = vadd.f32 %v1900, %v2082
  %v2181 = vadd.f32 %v1901, %v2083
  %v2182 = vadd.f32 %v1902, %v2084
  %v2183 = vadd.f32 %v1903, %v2085
  %v2184 = vadd.f32 %v1904, %v2086
  %v2185 = vadd.f32 %v1905, %v2087
  %v2186 = vadd.f32 %v1906, %v2088
  %v2187 = vadd.f32 %v1907, %v2089
  %v2188 = vadd.f32 %v1908, %v2090
  %v2189 = vadd.f32 %v1909, %v2091
  %v2190 = vadd.f32 %v1910, %v2092
  %v2191 = vadd.f32 %v1911, %v2093
  %v2192 = vadd.f32 %v1912, %v2094
  %v2193 = vadd.f32 %v1913, %v2095
  %v2194 = vadd.f32 %v1914, %v2096
  %v2195 = vadd.f32 %v1915, %v2097
  %v2196 = vadd.f32 %v1916, %v2098
  %v2197 = vadd.f32 %v1917, %v2099
  %v2198 = vadd.f32 %v1918, %v2100
  %v2199 = vadd.f32 %v1919, %v2101
  %v2200 = vadd.f32 %v1920, %v2102
  %v2201 = vadd.f32 %v1921, %v2103
  %v2202 = vadd.f32 %v1922, %v2104
  %v2203 = vadd.f32 %v1923, %v2105
  %v2204 = vadd.f32 %v1924, %v2106
  %v2205 = vadd.f32 %v1925, %v2107
  %v2206 = vadd.f32 %v1926, %v2108
  %v2207 = vadd.f32 %v1927, %v2109
  %v2208 = vadd.f32 %v1928, %v2110
  %v2209 = vadd.f32 %v1929, %v2111
  %v2210 = vadd.f32 %v1930, %v2112
  %v2211 = vadd.f32 %v1931, %v2113
  %v2212 = vadd.f32 %v1932, %v2114
  %v2213 = vadd.f32 %v1933, %v2115
  %v2214 = vadd.f32 %v1934, %v2116
  %v2215 = vadd.f32 %v1935, %v2117
  %v2216 = vadd.f32 %v1936, %v2118
  %v2217 = vadd.f32 %v1937, %v2119
  %v2218 = vadd.f32 %v1938, %v2120
  %v2219 = vadd.f32 %v1939, %v2121
  %v2220 = vadd.f32 %v1940, %v2122
  %v2221 = vadd.f32 %v1941, %v2123
  %v2222 = vadd.f32 %v1942, %v2124
  %v2223 = vadd.f32 %v1943, %v2125
  %v2224 = vadd.f32 %v1944, %v2126
  %v2225 = vadd.f32 %v1945, %v2127
  %v2226 = vadd.f32 %v1946, %v2128
  %v2227 = vadd.f32 %v1947, %v2129
  %v2228 = vadd.f32 %v1948, %v2130
  %v2229 = vadd.f32 %v1949, %v2131
  %v2230 = vadd.f32 %v1950, %v2132
  %v2231 = vadd.f32 %v1951, %v2133
  %v2232 = vadd.f32 %v1952, %v2134
  %v2233 = vadd.f32 %v1953, %v2135
  %v2234 = vadd.f32 %v1954, %v2136
  %v2235 = vadd.f32 %v1955, %v2137
  %v2236 = vadd.f32 %v1956, %v2138
  %v2237 = vadd.f32 %v1957, %v2139
  %v2336 = vlaneseq
  %v2337 = vshrl.u32 %v2336, 7
  %v2338 = vsub.s32 0, %v2337
  %v2339 = vrot.slane %v44, %v2338
  %v2340 = vlaneseq
  %v2341 = vshrl.u32 %v2340, 7
  %v2342 = vsub.s32 0, %v2341
  %v2343 = vrot.slane %v46, %v2342
  %v2344 = vlaneseq
  %v2345 = vshrl.u32 %v2344, 7
  %v2346 = vsub.s32 0, %v2345
  %v2347 = vrot.slane %v48, %v2346
  %v2348 = vlaneseq
  %v2349 = vshrl.u32 %v2348, 7
  %v2350 = vsub.s32 0, %v2349
  %v2351 = vrot.slane %v50, %v2350
  %v2352 = vlaneseq
  %v2353 = vshrl.u32 %v2352, 7
  %v2354 = vsub.s32 0, %v2353
  %v2355 = vrot.slane %v52, %v2354
  %v2356 = vlaneseq
  %v2357 = vshrl.u32 %v2356, 7
  %v2358 = vsub.s32 0, %v2357
  %v2359 = vrot.slane %v54, %v2358
  %v2360 = vlaneseq
  %v2361 = vshrl.u32 %v2360, 7
  %v2362 = vsub.s32 0, %v2361
  %v2363 = vrot.slane %v56, %v2362
  %v2364 = vlaneseq
  %v2365 = vshrl.u32 %v2364, 7
  %v2366 = vsub.s32 0, %v2365
  %v2367 = vrot.slane %v74, %v2366
  %v2368 = vlaneseq
  %v2369 = vshrl.u32 %v2368, 7
  %v2370 = vsub.s32 0, %v2369
  %v2371 = vrot.slane %v76, %v2370
  %v2372 = vlaneseq
  %v2373 = vshrl.u32 %v2372, 7
  %v2374 = vsub.s32 0, %v2373
  %v2375 = vrot.slane %v78, %v2374
  %v2376 = vlaneseq
  %v2377 = vshrl.u32 %v2376, 7
  %v2378 = vsub.s32 0, %v2377
  %v2379 = vrot.slane %v80, %v2378
  %v2380 = vlaneseq
  %v2381 = vshrl.u32 %v2380, 7
  %v2382 = vsub.s32 0, %v2381
  %v2383 = vrot.slane %v82, %v2382
  %v2384 = vlaneseq
  %v2385 = vshrl.u32 %v2384, 7
  %v2386 = vsub.s32 0, %v2385
  %v2387 = vrot.slane %v84, %v2386
  %v2388 = vlaneseq
  %v2389 = vshrl.u32 %v2388, 7
  %v2390 = vsub.s32 0, %v2389
  %v2391 = vrot.slane %v86, %v2390
  %v2392 = vlaneseq
  %v2393 = vshrl.u32 %v2392, 7
  %v2394 = vsub.s32 0, %v2393
  %v2395 = vrot.slane %v104, %v2394
  %v2396 = vlaneseq
  %v2397 = vshrl.u32 %v2396, 7
  %v2398 = vsub.s32 0, %v2397
  %v2399 = vrot.slane %v106, %v2398
  %v2400 = vlaneseq
  %v2401 = vshrl.u32 %v2400, 7
  %v2402 = vsub.s32 0, %v2401
  %v2403 = vrot.slane %v108, %v2402
  %v2404 = vlaneseq
  %v2405 = vshrl.u32 %v2404, 7
  %v2406 = vsub.s32 0, %v2405
  %v2407 = vrot.slane %v110, %v2406
  %v2408 = vlaneseq
  %v2409 = vshrl.u32 %v2408, 7
  %v2410 = vsub.s32 0, %v2409
  %v2411 = vrot.slane %v112, %v2410
  %v2412 = vlaneseq
  %v2413 = vshrl.u32 %v2412, 7
  %v2414 = vsub.s32 0, %v2413
  %v2415 = vrot.slane %v114, %v2414
  %v2416 = vlaneseq
  %v2417 = vshrl.u32 %v2416, 7
  %v2418 = vsub.s32 0, %v2417
  %v2419 = vrot.slane %v116, %v2418
  %v2420 = vlaneseq
  %v2421 = vshrl.u32 %v2420, 7
  %v2422 = vsub.s32 0, %v2421
  %v2423 = vrot.slane %v134, %v2422
  %v2424 = vlaneseq
  %v2425 = vshrl.u32 %v2424, 7
  %v2426 = vsub.s32 0, %v2425
  %v2427 = vrot.slane %v136, %v2426
  %v2428 = vlaneseq
  %v2429 = vshrl.u32 %v2428, 7
  %v2430 = vsub.s32 0, %v2429
  %v2431 = vrot.slane %v138, %v2430
  %v2432 = vlaneseq
  %v2433 = vshrl.u32 %v2432, 7
  %v2434 = vsub.s32 0, %v2433
  %v2435 = vrot.slane %v140, %v2434
  %v2436 = vlaneseq
  %v2437 = vshrl.u32 %v2436, 7
  %v2438 = vsub.s32 0, %v2437
  %v2439 = vrot.slane %v142, %v2438
  %v2440 = vlaneseq
  %v2441 = vshrl.u32 %v2440, 7
  %v2442 = vsub.s32 0, %v2441
  %v2443 = vrot.slane %v144, %v2442
  %v2444 = vlaneseq
  %v2445 = vshrl.u32 %v2444, 7
  %v2446 = vsub.s32 0, %v2445
  %v2447 = vrot.slane %v146, %v2446
  %v2448 = vlaneseq
  %v2449 = vshrl.u32 %v2448, 7
  %v2450 = vsub.s32 0, %v2449
  %v2451 = vrot.slane %v164, %v2450
  %v2452 = vlaneseq
  %v2453 = vshrl.u32 %v2452, 7
  %v2454 = vsub.s32 0, %v2453
  %v2455 = vrot.slane %v166, %v2454
  %v2456 = vlaneseq
  %v2457 = vshrl.u32 %v2456, 7
  %v2458 = vsub.s32 0, %v2457
  %v2459 = vrot.slane %v168, %v2458
  %v2460 = vlaneseq
  %v2461 = vshrl.u32 %v2460, 7
  %v2462 = vsub.s32 0, %v2461
  %v2463 = vrot.slane %v170, %v2462
  %v2464 = vlaneseq
  %v2465 = vshrl.u32 %v2464, 7
  %v2466 = vsub.s32 0, %v2465
  %v2467 = vrot.slane %v172, %v2466
  %v2468 = vlaneseq
  %v2469 = vshrl.u32 %v2468, 7
  %v2470 = vsub.s32 0, %v2469
  %v2471 = vrot.slane %v174, %v2470
  %v2472 = vlaneseq
  %v2473 = vshrl.u32 %v2472, 7
  %v2474 = vsub.s32 0, %v2473
  %v2475 = vrot.slane %v176, %v2474
  %v2476 = vlaneseq
  %v2477 = vshrl.u32 %v2476, 7
  %v2478 = vsub.s32 0, %v2477
  %v2479 = vrot.slane %v194, %v2478
  %v2480 = vlaneseq
  %v2481 = vshrl.u32 %v2480, 7
  %v2482 = vsub.s32 0, %v2481
  %v2483 = vrot.slane %v196, %v2482
  %v2484 = vlaneseq
  %v2485 = vshrl.u32 %v2484, 7
  %v2486 = vsub.s32 0, %v2485
  %v2487 = vrot.slane %v198, %v2486
  %v2488 = vlaneseq
  %v2489 = vshrl.u32 %v2488, 7
  %v2490 = vsub.s32 0, %v2489
  %v2491 = vrot.slane %v200, %v2490
  %v2492 = vlaneseq
  %v2493 = vshrl.u32 %v2492, 7
  %v2494 = vsub.s32 0, %v2493
  %v2495 = vrot.slane %v202, %v2494
  %v2496 = vlaneseq
  %v2497 = vshrl.u32 %v2496, 7
  %v2498 = vsub.s32 0, %v2497
  %v2499 = vrot.slane %v204, %v2498
  %v2500 = vlaneseq
  %v2501 = vshrl.u32 %v2500, 7
  %v2502 = vsub.s32 0, %v2501
  %v2503 = vrot.slane %v206, %v2502
  %v2504 = vlaneseq
  %v2505 = vshrl.u32 %v2504, 7
  %v2506 = vsub.s32 0, %v2505
  %v2507 = vrot.slane %v224, %v2506
  %v2508 = vlaneseq
  %v2509 = vshrl.u32 %v2508, 7
  %v2510 = vsub.s32 0, %v2509
  %v2511 = vrot.slane %v226, %v2510
  %v2512 = vlaneseq
  %v2513 = vshrl.u32 %v2512, 7
  %v2514 = vsub.s32 0, %v2513
  %v2515 = vrot.slane %v228, %v2514
  %v2516 = vlaneseq
  %v2517 = vshrl.u32 %v2516, 7
  %v2518 = vsub.s32 0, %v2517
  %v2519 = vrot.slane %v230, %v2518
  %v2520 = vlaneseq
  %v2521 = vshrl.u32 %v2520, 7
  %v2522 = vsub.s32 0, %v2521
  %v2523 = vrot.slane %v232, %v2522
  %v2524 = vlaneseq
  %v2525 = vshrl.u32 %v2524, 7
  %v2526 = vsub.s32 0, %v2525
  %v2527 = vrot.slane %v234, %v2526
  %v2528 = vlaneseq
  %v2529 = vshrl.u32 %v2528, 7
  %v2530 = vsub.s32 0, %v2529
  %v2531 = vrot.slane %v236, %v2530
  %v2532 = vlaneseq
  %v2533 = vshrl.u32 %v2532, 7
  %v2534 = vsub.s32 0, %v2533
  %v2535 = vrot.slane %v269, %v2534
  %v2536 = vlaneseq
  %v2537 = vshrl.u32 %v2536, 7
  %v2538 = vsub.s32 0, %v2537
  %v2539 = vrot.slane %v271, %v2538
  %v2540 = vlaneseq
  %v2541 = vshrl.u32 %v2540, 7
  %v2542 = vsub.s32 0, %v2541
  %v2543 = vrot.slane %v273, %v2542
  %v2544 = vlaneseq
  %v2545 = vshrl.u32 %v2544, 7
  %v2546 = vsub.s32 0, %v2545
  %v2547 = vrot.slane %v275, %v2546
  %v2548 = vlaneseq
  %v2549 = vshrl.u32 %v2548, 7
  %v2550 = vsub.s32 0, %v2549
  %v2551 = vrot.slane %v277, %v2550
  %v2552 = vlaneseq
  %v2553 = vshrl.u32 %v2552, 7
  %v2554 = vsub.s32 0, %v2553
  %v2555 = vrot.slane %v279, %v2554
  %v2556 = vlaneseq
  %v2557 = vshrl.u32 %v2556, 7
  %v2558 = vsub.s32 0, %v2557
  %v2559 = vrot.slane %v281, %v2558
  %v2560 = vlaneseq
  %v2561 = vshrl.u32 %v2560, 7
  %v2562 = vsub.s32 0, %v2561
  %v2563 = vrot.slane %v299, %v2562
  %v2564 = vlaneseq
  %v2565 = vshrl.u32 %v2564, 7
  %v2566 = vsub.s32 0, %v2565
  %v2567 = vrot.slane %v301, %v2566
  %v2568 = vlaneseq
  %v2569 = vshrl.u32 %v2568, 7
  %v2570 = vsub.s32 0, %v2569
  %v2571 = vrot.slane %v303, %v2570
  %v2572 = vlaneseq
  %v2573 = vshrl.u32 %v2572, 7
  %v2574 = vsub.s32 0, %v2573
  %v2575 = vrot.slane %v305, %v2574
  %v2576 = vlaneseq
  %v2577 = vshrl.u32 %v2576, 7
  %v2578 = vsub.s32 0, %v2577
  %v2579 = vrot.slane %v307, %v2578
  %v2580 = vlaneseq
  %v2581 = vshrl.u32 %v2580, 7
  %v2582 = vsub.s32 0, %v2581
  %v2583 = vrot.slane %v309, %v2582
  %v2584 = vlaneseq
  %v2585 = vshrl.u32 %v2584, 7
  %v2586 = vsub.s32 0, %v2585
  %v2587 = vrot.slane %v311, %v2586
  %v2588 = vlaneseq
  %v2589 = vshrl.u32 %v2588, 7
  %v2590 = vsub.s32 0, %v2589
  %v2591 = vrot.slane %v329, %v2590
  %v2592 = vlaneseq
  %v2593 = vshrl.u32 %v2592, 7
  %v2594 = vsub.s32 0, %v2593
  %v2595 = vrot.slane %v331, %v2594
  %v2596 = vlaneseq
  %v2597 = vshrl.u32 %v2596, 7
  %v2598 = vsub.s32 0, %v2597
  %v2599 = vrot.slane %v333, %v2598
  %v2600 = vlaneseq
  %v2601 = vshrl.u32 %v2600, 7
  %v2602 = vsub.s32 0, %v2601
  %v2603 = vrot.slane %v335, %v2602
  %v2604 = vlaneseq
  %v2605 = vshrl.u32 %v2604, 7
  %v2606 = vsub.s32 0, %v2605
  %v2607 = vrot.slane %v337, %v2606
  %v2608 = vlaneseq
  %v2609 = vshrl.u32 %v2608, 7
  %v2610 = vsub.s32 0, %v2609
  %v2611 = vrot.slane %v339, %v2610
  %v2612 = vlaneseq
  %v2613 = vshrl.u32 %v2612, 7
  %v2614 = vsub.s32 0, %v2613
  %v2615 = vrot.slane %v341, %v2614
  %v2616 = vlaneseq
  %v2617 = vshrl.u32 %v2616, 7
  %v2618 = vsub.s32 0, %v2617
  %v2619 = vrot.slane %v359, %v2618
  %v2620 = vlaneseq
  %v2621 = vshrl.u32 %v2620, 7
  %v2622 = vsub.s32 0, %v2621
  %v2623 = vrot.slane %v361, %v2622
  %v2624 = vlaneseq
  %v2625 = vshrl.u32 %v2624, 7
  %v2626 = vsub.s32 0, %v2625
  %v2627 = vrot.slane %v363, %v2626
  %v2628 = vlaneseq
  %v2629 = vshrl.u32 %v2628, 7
  %v2630 = vsub.s32 0, %v2629
  %v2631 = vrot.slane %v365, %v2630
  %v2632 = vlaneseq
  %v2633 = vshrl.u32 %v2632, 7
  %v2634 = vsub.s32 0, %v2633
  %v2635 = vrot.slane %v367, %v2634
  %v2636 = vlaneseq
  %v2637 = vshrl.u32 %v2636, 7
  %v2638 = vsub.s32 0, %v2637
  %v2639 = vrot.slane %v369, %v2638
  %v2640 = vlaneseq
  %v2641 = vshrl.u32 %v2640, 7
  %v2642 = vsub.s32 0, %v2641
  %v2643 = vrot.slane %v371, %v2642
  %v2644 = vlaneseq
  %v2645 = vshrl.u32 %v2644, 7
  %v2646 = vsub.s32 0, %v2645
  %v2647 = vrot.slane %v389, %v2646
  %v2648 = vlaneseq
  %v2649 = vshrl.u32 %v2648, 7
  %v2650 = vsub.s32 0, %v2649
  %v2651 = vrot.slane %v391, %v2650
  %v2652 = vlaneseq
  %v2653 = vshrl.u32 %v2652, 7
  %v2654 = vsub.s32 0, %v2653
  %v2655 = vrot.slane %v393, %v2654
  %v2656 = vlaneseq
  %v2657 = vshrl.u32 %v2656, 7
  %v2658 = vsub.s32 0, %v2657
  %v2659 = vrot.slane %v395, %v2658
  %v2660 = vlaneseq
  %v2661 = vshrl.u32 %v2660, 7
  %v2662 = vsub.s32 0, %v2661
  %v2663 = vrot.slane %v397, %v2662
  %v2664 = vlaneseq
  %v2665 = vshrl.u32 %v2664, 7
  %v2666 = vsub.s32 0, %v2665
  %v2667 = vrot.slane %v399, %v2666
  %v2668 = vlaneseq
  %v2669 = vshrl.u32 %v2668, 7
  %v2670 = vsub.s32 0, %v2669
  %v2671 = vrot.slane %v401, %v2670
  %v2672 = vlaneseq
  %v2673 = vshrl.u32 %v2672, 7
  %v2674 = vsub.s32 0, %v2673
  %v2675 = vrot.slane %v419, %v2674
  %v2676 = vlaneseq
  %v2677 = vshrl.u32 %v2676, 7
  %v2678 = vsub.s32 0, %v2677
  %v2679 = vrot.slane %v421, %v2678
  %v2680 = vlaneseq
  %v2681 = vshrl.u32 %v2680, 7
  %v2682 = vsub.s32 0, %v2681
  %v2683 = vrot.slane %v423, %v2682
  %v2684 = vlaneseq
  %v2685 = vshrl.u32 %v2684, 7
  %v2686 = vsub.s32 0, %v2685
  %v2687 = vrot.slane %v425, %v2686
  %v2688 = vlaneseq
  %v2689 = vshrl.u32 %v2688, 7
  %v2690 = vsub.s32 0, %v2689
  %v2691 = vrot.slane %v427, %v2690
  %v2692 = vlaneseq
  %v2693 = vshrl.u32 %v2692, 7
  %v2694 = vsub.s32 0, %v2693
  %v2695 = vrot.slane %v429, %v2694
  %v2696 = vlaneseq
  %v2697 = vshrl.u32 %v2696, 7
  %v2698 = vsub.s32 0, %v2697
  %v2699 = vrot.slane %v431, %v2698
  %v2700 = vlaneseq
  %v2701 = vshrl.u32 %v2700, 7
  %v2702 = vsub.s32 0, %v2701
  %v2703 = vrot.slane %v449, %v2702
  %v2704 = vlaneseq
  %v2705 = vshrl.u32 %v2704, 7
  %v2706 = vsub.s32 0, %v2705
  %v2707 = vrot.slane %v451, %v2706
  %v2708 = vlaneseq
  %v2709 = vshrl.u32 %v2708, 7
  %v2710 = vsub.s32 0, %v2709
  %v2711 = vrot.slane %v453, %v2710
  %v2712 = vlaneseq
  %v2713 = vshrl.u32 %v2712, 7
  %v2714 = vsub.s32 0, %v2713
  %v2715 = vrot.slane %v455, %v2714
  %v2716 = vlaneseq
  %v2717 = vshrl.u32 %v2716, 7
  %v2718 = vsub.s32 0, %v2717
  %v2719 = vrot.slane %v457, %v2718
  %v2720 = vlaneseq
  %v2721 = vshrl.u32 %v2720, 7
  %v2722 = vsub.s32 0, %v2721
  %v2723 = vrot.slane %v459, %v2722
  %v2724 = vlaneseq
  %v2725 = vshrl.u32 %v2724, 7
  %v2726 = vsub.s32 0, %v2725
  %v2727 = vrot.slane %v461, %v2726
  %v2826 = vmul.f32 %v2339, %v482
  %v2827 = vmul.f32 %v2343, %v482
  %v2828 = vmul.f32 %v2347, %v482
  %v2829 = vmul.f32 %v2351, %v482
  %v2830 = vmul.f32 %v2355, %v482
  %v2831 = vmul.f32 %v2359, %v482
  %v2832 = vmul.f32 %v2363, %v482
  %v2833 = vmul.f32 %v2367, %v482
  %v2834 = vmul.f32 %v2371, %v482
  %v2835 = vmul.f32 %v2375, %v482
  %v2836 = vmul.f32 %v2379, %v482
  %v2837 = vmul.f32 %v2383, %v482
  %v2838 = vmul.f32 %v2387, %v482
  %v2839 = vmul.f32 %v2391, %v482
  %v2840 = vmul.f32 %v2395, %v482
  %v2841 = vmul.f32 %v2399, %v482
  %v2842 = vmul.f32 %v2403, %v482
  %v2843 = vmul.f32 %v2407, %v482
  %v2844 = vmul.f32 %v2411, %v482
  %v2845 = vmul.f32 %v2415, %v482
  %v2846 = vmul.f32 %v2419, %v482
  %v2847 = vmul.f32 %v2423, %v482
  %v2848 = vmul.f32 %v2427, %v482
  %v2849 = vmul.f32 %v2431, %v482
  %v2850 = vmul.f32 %v2435, %v482
  %v2851 = vmul.f32 %v2439, %v482
  %v2852 = vmul.f32 %v2443, %v482
  %v2853 = vmul.f32 %v2447, %v482
  %v2854 = vmul.f32 %v2451, %v482
  %v2855 = vmul.f32 %v2455, %v482
  %v2856 = vmul.f32 %v2459, %v482
  %v2857 = vmul.f32 %v2463, %v482
  %v2858 = vmul.f32 %v2467, %v482
  %v2859 = vmul.f32 %v2471, %v482
  %v2860 = vmul.f32 %v2475, %v482
  %v2861 = vmul.f32 %v2479, %v482
  %v2862 = vmul.f32 %v2483, %v482
  %v2863 = vmul.f32 %v2487, %v482
  %v2864 = vmul.f32 %v2491, %v482
  %v2865 = vmul.f32 %v2495, %v482
  %v2866 = vmul.f32 %v2499, %v482
  %v2867 = vmul.f32 %v2503, %v482
  %v2868 = vmul.f32 %v2507, %v482
  %v2869 = vmul.f32 %v2511, %v482
  %v2870 = vmul.f32 %v2515, %v482
  %v2871 = vmul.f32 %v2519, %v482
  %v2872 = vmul.f32 %v2523, %v482
  %v2873 = vmul.f32 %v2527, %v482
  %v2874 = vmul.f32 %v2531, %v482
  %v2875 = vmul.f32 %v2535, %v482
  %v2876 = vmul.f32 %v2539, %v482
  %v2877 = vmul.f32 %v2543, %v482
  %v2878 = vmul.f32 %v2547, %v482
  %v2879 = vmul.f32 %v2551, %v482
  %v2880 = vmul.f32 %v2555, %v482
  %v2881 = vmul.f32 %v2559, %v482
  %v2882 = vmul.f32 %v2563, %v482
  %v2883 = vmul.f32 %v2567, %v482
  %v2884 = vmul.f32 %v2571, %v482
  %v2885 = vmul.f32 %v2575, %v482
  %v2886 = vmul.f32 %v2579, %v482
  %v2887 = vmul.f32 %v2583, %v482
  %v2888 = vmul.f32 %v2587, %v482
  %v2889 = vmul.f32 %v2591, %v482
  %v2890 = vmul.f32 %v2595, %v482
  %v2891 = vmul.f32 %v2599, %v482
  %v2892 = vmul.f32 %v2603, %v482
  %v2893 = vmul.f32 %v2607, %v482
  %v2894 = vmul.f32 %v2611, %v482
  %v2895 = vmul.f32 %v2615, %v482
  %v2896 = vmul.f32 %v2619, %v482
  %v2897 = vmul.f32 %v2623, %v482
  %v2898 = vmul.f32 %v2627, %v482
  %v2899 = vmul.f32 %v2631, %v482
  %v2900 = vmul.f32 %v2635, %v482
  %v2901 = vmul.f32 %v2639, %v482
  %v2902 = vmul.f32 %v2643, %v482
  %v2903 = vmul.f32 %v2647, %v482
  %v2904 = vmul.f32 %v2651, %v482
  %v2905 = vmul.f32 %v2655, %v482
  %v2906 = vmul.f32 %v2659, %v482
  %v2907 = vmul.f32 %v2663, %v482
  %v2908 = vmul.f32 %v2667, %v482
  %v2909 = vmul.f32 %v2671, %v482
  %v2910 = vmul.f32 %v2675, %v482
  %v2911 = vmul.f32 %v2679, %v482
  %v2912 = vmul.f32 %v2683, %v482
  %v2913 = vmul.f32 %v2687, %v482
  %v2914 = vmul.f32 %v2691, %v482
  %v2915 = vmul.f32 %v2695, %v482
  %v2916 = vmul.f32 %v2699, %v482
  %v2917 = vmul.f32 %v2703, %v482
  %v2918 = vmul.f32 %v2707, %v482
  %v2919 = vmul.f32 %v2711, %v482
  %v2920 = vmul.f32 %v2715, %v482
  %v2921 = vmul.f32 %v2719, %v482
  %v2922 = vmul.f32 %v2723, %v482
  %v2923 = vmul.f32 %v2727, %v482
  %v2924 = vadd.f32 %v2140, %v2826
  %v2925 = vadd.f32 %v2141, %v2827
  %v2926 = vadd.f32 %v2142, %v2828
  %v2927 = vadd.f32 %v2143, %v2829
  %v2928 = vadd.f32 %v2144, %v2830
  %v2929 = vadd.f32 %v2145, %v2831
  %v2930 = vadd.f32 %v2146, %v2832
  %v2931 = vadd.f32 %v2147, %v2833
  %v2932 = vadd.f32 %v2148, %v2834
  %v2933 = vadd.f32 %v2149, %v2835
  %v2934 = vadd.f32 %v2150, %v2836
  %v2935 = vadd.f32 %v2151, %v2837
  %v2936 = vadd.f32 %v2152, %v2838
  %v2937 = vadd.f32 %v2153, %v2839
  %v2938 = vadd.f32 %v2154, %v2840
  %v2939 = vadd.f32 %v2155, %v2841
  %v2940 = vadd.f32 %v2156, %v2842
  %v2941 = vadd.f32 %v2157, %v2843
  %v2942 = vadd.f32 %v2158, %v2844
  %v2943 = vadd.f32 %v2159, %v2845
  %v2944 = vadd.f32 %v2160, %v2846
  %v2945 = vadd.f32 %v2161, %v2847
  %v2946 = vadd.f32 %v2162, %v2848
  %v2947 = vadd.f32 %v2163, %v2849
  %v2948 = vadd.f32 %v2164, %v2850
  %v2949 = vadd.f32 %v2165, %v2851
  %v2950 = vadd.f32 %v2166, %v2852
  %v2951 = vadd.f32 %v2167, %v2853
  %v2952 = vadd.f32 %v2168, %v2854
  %v2953 = vadd.f32 %v2169, %v2855
  %v2954 = vadd.f32 %v2170, %v2856
  %v2955 = vadd.f32 %v2171, %v2857
  %v2956 = vadd.f32 %v2172, %v2858
  %v2957 = vadd.f32 %v2173, %v2859
  %v2958 = vadd.f32 %v2174, %v2860
  %v2959 = vadd.f32 %v2175, %v2861
  %v2960 = vadd.f32 %v2176, %v2862
  %v2961 = vadd.f32 %v2177, %v2863
  %v2962 = vadd.f32 %v2178, %v2864
  %v2963 = vadd.f32 %v2179, %v2865
  %v2964 = vadd.f32 %v2180, %v2866
  %v2965 = vadd.f32 %v2181, %v2867
  %v2966 = vadd.f32 %v2182, %v2868
  %v2967 = vadd.f32 %v2183, %v2869
  %v2968 = vadd.f32 %v2184, %v2870
  %v2969 = vadd.f32 %v2185, %v2871
  %v2970 = vadd.f32 %v2186, %v2872
  %v2971 = vadd.f32 %v2187, %v2873
  %v2972 = vadd.f32 %v2188, %v2874
  %v2973 = vadd.f32 %v2189, %v2875
  %v2974 = vadd.f32 %v2190, %v2876
  %v2975 = vadd.f32 %v2191, %v2877
  %v2976 = vadd.f32 %v2192, %v2878
  %v2977 = vadd.f32 %v2193, %v2879
  %v2978 = vadd.f32 %v2194, %v2880
  %v2979 = vadd.f32 %v2195, %v2881
  %v2980 = vadd.f32 %v2196, %v2882
  %v2981 = vadd.f32 %v2197, %v2883
  %v2982 = vadd.f32 %v2198, %v2884
  %v2983 = vadd.f32 %v2199, %v2885
  %v2984 = vadd.f32 %v2200, %v2886
  %v2985 = vadd.f32 %v2201, %v2887
  %v2986 = vadd.f32 %v2202, %v2888
  %v2987 = vadd.f32 %v2203, %v2889
  %v2988 = vadd.f32 %v2204, %v2890
  %v2989 = vadd.f32 %v2205, %v2891
  %v2990 = vadd.f32 %v2206, %v2892
  %v2991 = vadd.f32 %v2207, %v2893
  %v2992 = vadd.f32 %v2208, %v2894
  %v2993 = vadd.f32 %v2209, %v2895
  %v2994 = vadd.f32 %v2210, %v2896
  %v2995 = vadd.f32 %v2211, %v2897
  %v2996 = vadd.f32 %v2212, %v2898
  %v2997 = vadd.f32 %v2213, %v2899
  %v2998 = vadd.f32 %v2214, %v2900
  %v2999 = vadd.f32 %v2215, %v2901
  %v3000 = vadd.f32 %v2216, %v2902
  %v3001 = vadd.f32 %v2217, %v2903
  %v3002 = vadd.f32 %v2218, %v2904
  %v3003 = vadd.f32 %v2219, %v2905
  %v3004 = vadd.f32 %v2220, %v2906
  %v3005 = vadd.f32 %v2221, %v2907
  %v3006 = vadd.f32 %v2222, %v2908
  %v3007 = vadd.f32 %v2223, %v2909
  %v3008 = vadd.f32 %v2224, %v2910
  %v3009 = vadd.f32 %v2225, %v2911
  %v3010 = vadd.f32 %v2226, %v2912
  %v3011 = vadd.f32 %v2227, %v2913
  %v3012 = vadd.f32 %v2228, %v2914
  %v3013 = vadd.f32 %v2229, %v2915
  %v3014 = vadd.f32 %v2230, %v2916
  %v3015 = vadd.f32 %v2231, %v2917
  %v3016 = vadd.f32 %v2232, %v2918
  %v3017 = vadd.f32 %v2233, %v2919
  %v3018 = vadd.f32 %v2234, %v2920
  %v3019 = vadd.f32 %v2235, %v2921
  %v3020 = vadd.f32 %v2236, %v2922
  %v3021 = vadd.f32 %v2237, %v2923
  %v3120 = vlaneseq
  %v3121 = vshrl.u32 %v3120, 7
  %v3122 = vsub.s32 0, %v3121
  %v3123 = vrot.slane %v45, %v3122
  %v3124 = vlaneseq
  %v3125 = vshrl.u32 %v3124, 7
  %v3126 = vsub.s32 0, %v3125
  %v3127 = vrot.slane %v47, %v3126
  %v3128 = vlaneseq
  %v3129 = vshrl.u32 %v3128, 7
  %v3130 = vsub.s32 0, %v3129
  %v3131 = vrot.slane %v49, %v3130
  %v3132 = vlaneseq
  %v3133 = vshrl.u32 %v3132, 7
  %v3134 = vsub.s32 0, %v3133
  %v3135 = vrot.slane %v51, %v3134
  %v3136 = vlaneseq
  %v3137 = vshrl.u32 %v3136, 7
  %v3138 = vsub.s32 0, %v3137
  %v3139 = vrot.slane %v53, %v3138
  %v3140 = vlaneseq
  %v3141 = vshrl.u32 %v3140, 7
  %v3142 = vsub.s32 0, %v3141
  %v3143 = vrot.slane %v55, %v3142
  %v3144 = vlaneseq
  %v3145 = vshrl.u32 %v3144, 7
  %v3146 = vsub.s32 0, %v3145
  %v3147 = vrot.slane %v57, %v3146
  %v3148 = vlaneseq
  %v3149 = vshrl.u32 %v3148, 7
  %v3150 = vsub.s32 0, %v3149
  %v3151 = vrot.slane %v75, %v3150
  %v3152 = vlaneseq
  %v3153 = vshrl.u32 %v3152, 7
  %v3154 = vsub.s32 0, %v3153
  %v3155 = vrot.slane %v77, %v3154
  %v3156 = vlaneseq
  %v3157 = vshrl.u32 %v3156, 7
  %v3158 = vsub.s32 0, %v3157
  %v3159 = vrot.slane %v79, %v3158
  %v3160 = vlaneseq
  %v3161 = vshrl.u32 %v3160, 7
  %v3162 = vsub.s32 0, %v3161
  %v3163 = vrot.slane %v81, %v3162
  %v3164 = vlaneseq
  %v3165 = vshrl.u32 %v3164, 7
  %v3166 = vsub.s32 0, %v3165
  %v3167 = vrot.slane %v83, %v3166
  %v3168 = vlaneseq
  %v3169 = vshrl.u32 %v3168, 7
  %v3170 = vsub.s32 0, %v3169
  %v3171 = vrot.slane %v85, %v3170
  %v3172 = vlaneseq
  %v3173 = vshrl.u32 %v3172, 7
  %v3174 = vsub.s32 0, %v3173
  %v3175 = vrot.slane %v87, %v3174
  %v3176 = vlaneseq
  %v3177 = vshrl.u32 %v3176, 7
  %v3178 = vsub.s32 0, %v3177
  %v3179 = vrot.slane %v105, %v3178
  %v3180 = vlaneseq
  %v3181 = vshrl.u32 %v3180, 7
  %v3182 = vsub.s32 0, %v3181
  %v3183 = vrot.slane %v107, %v3182
  %v3184 = vlaneseq
  %v3185 = vshrl.u32 %v3184, 7
  %v3186 = vsub.s32 0, %v3185
  %v3187 = vrot.slane %v109, %v3186
  %v3188 = vlaneseq
  %v3189 = vshrl.u32 %v3188, 7
  %v3190 = vsub.s32 0, %v3189
  %v3191 = vrot.slane %v111, %v3190
  %v3192 = vlaneseq
  %v3193 = vshrl.u32 %v3192, 7
  %v3194 = vsub.s32 0, %v3193
  %v3195 = vrot.slane %v113, %v3194
  %v3196 = vlaneseq
  %v3197 = vshrl.u32 %v3196, 7
  %v3198 = vsub.s32 0, %v3197
  %v3199 = vrot.slane %v115, %v3198
  %v3200 = vlaneseq
  %v3201 = vshrl.u32 %v3200, 7
  %v3202 = vsub.s32 0, %v3201
  %v3203 = vrot.slane %v117, %v3202
  %v3204 = vlaneseq
  %v3205 = vshrl.u32 %v3204, 7
  %v3206 = vsub.s32 0, %v3205
  %v3207 = vrot.slane %v135, %v3206
  %v3208 = vlaneseq
  %v3209 = vshrl.u32 %v3208, 7
  %v3210 = vsub.s32 0, %v3209
  %v3211 = vrot.slane %v137, %v3210
  %v3212 = vlaneseq
  %v3213 = vshrl.u32 %v3212, 7
  %v3214 = vsub.s32 0, %v3213
  %v3215 = vrot.slane %v139, %v3214
  %v3216 = vlaneseq
  %v3217 = vshrl.u32 %v3216, 7
  %v3218 = vsub.s32 0, %v3217
  %v3219 = vrot.slane %v141, %v3218
  %v3220 = vlaneseq
  %v3221 = vshrl.u32 %v3220, 7
  %v3222 = vsub.s32 0, %v3221
  %v3223 = vrot.slane %v143, %v3222
  %v3224 = vlaneseq
  %v3225 = vshrl.u32 %v3224, 7
  %v3226 = vsub.s32 0, %v3225
  %v3227 = vrot.slane %v145, %v3226
  %v3228 = vlaneseq
  %v3229 = vshrl.u32 %v3228, 7
  %v3230 = vsub.s32 0, %v3229
  %v3231 = vrot.slane %v147, %v3230
  %v3232 = vlaneseq
  %v3233 = vshrl.u32 %v3232, 7
  %v3234 = vsub.s32 0, %v3233
  %v3235 = vrot.slane %v165, %v3234
  %v3236 = vlaneseq
  %v3237 = vshrl.u32 %v3236, 7
  %v3238 = vsub.s32 0, %v3237
  %v3239 = vrot.slane %v167, %v3238
  %v3240 = vlaneseq
  %v3241 = vshrl.u32 %v3240, 7
  %v3242 = vsub.s32 0, %v3241
  %v3243 = vrot.slane %v169, %v3242
  %v3244 = vlaneseq
  %v3245 = vshrl.u32 %v3244, 7
  %v3246 = vsub.s32 0, %v3245
  %v3247 = vrot.slane %v171, %v3246
  %v3248 = vlaneseq
  %v3249 = vshrl.u32 %v3248, 7
  %v3250 = vsub.s32 0, %v3249
  %v3251 = vrot.slane %v173, %v3250
  %v3252 = vlaneseq
  %v3253 = vshrl.u32 %v3252, 7
  %v3254 = vsub.s32 0, %v3253
  %v3255 = vrot.slane %v175, %v3254
  %v3256 = vlaneseq
  %v3257 = vshrl.u32 %v3256, 7
  %v3258 = vsub.s32 0, %v3257
  %v3259 = vrot.slane %v177, %v3258
  %v3260 = vlaneseq
  %v3261 = vshrl.u32 %v3260, 7
  %v3262 = vsub.s32 0, %v3261
  %v3263 = vrot.slane %v195, %v3262
  %v3264 = vlaneseq
  %v3265 = vshrl.u32 %v3264, 7
  %v3266 = vsub.s32 0, %v3265
  %v3267 = vrot.slane %v197, %v3266
  %v3268 = vlaneseq
  %v3269 = vshrl.u32 %v3268, 7
  %v3270 = vsub.s32 0, %v3269
  %v3271 = vrot.slane %v199, %v3270
  %v3272 = vlaneseq
  %v3273 = vshrl.u32 %v3272, 7
  %v3274 = vsub.s32 0, %v3273
  %v3275 = vrot.slane %v201, %v3274
  %v3276 = vlaneseq
  %v3277 = vshrl.u32 %v3276, 7
  %v3278 = vsub.s32 0, %v3277
  %v3279 = vrot.slane %v203, %v3278
  %v3280 = vlaneseq
  %v3281 = vshrl.u32 %v3280, 7
  %v3282 = vsub.s32 0, %v3281
  %v3283 = vrot.slane %v205, %v3282
  %v3284 = vlaneseq
  %v3285 = vshrl.u32 %v3284, 7
  %v3286 = vsub.s32 0, %v3285
  %v3287 = vrot.slane %v207, %v3286
  %v3288 = vlaneseq
  %v3289 = vshrl.u32 %v3288, 7
  %v3290 = vsub.s32 0, %v3289
  %v3291 = vrot.slane %v225, %v3290
  %v3292 = vlaneseq
  %v3293 = vshrl.u32 %v3292, 7
  %v3294 = vsub.s32 0, %v3293
  %v3295 = vrot.slane %v227, %v3294
  %v3296 = vlaneseq
  %v3297 = vshrl.u32 %v3296, 7
  %v3298 = vsub.s32 0, %v3297
  %v3299 = vrot.slane %v229, %v3298
  %v3300 = vlaneseq
  %v3301 = vshrl.u32 %v3300, 7
  %v3302 = vsub.s32 0, %v3301
  %v3303 = vrot.slane %v231, %v3302
  %v3304 = vlaneseq
  %v3305 = vshrl.u32 %v3304, 7
  %v3306 = vsub.s32 0, %v3305
  %v3307 = vrot.slane %v233, %v3306
  %v3308 = vlaneseq
  %v3309 = vshrl.u32 %v3308, 7
  %v3310 = vsub.s32 0, %v3309
  %v3311 = vrot.slane %v235, %v3310
  %v3312 = vlaneseq
  %v3313 = vshrl.u32 %v3312, 7
  %v3314 = vsub.s32 0, %v3313
  %v3315 = vrot.slane %v237, %v3314
  %v3316 = vlaneseq
  %v3317 = vshrl.u32 %v3316, 7
  %v3318 = vsub.s32 0, %v3317
  %v3319 = vrot.slane %v270, %v3318
  %v3320 = vlaneseq
  %v3321 = vshrl.u32 %v3320, 7
  %v3322 = vsub.s32 0, %v3321
  %v3323 = vrot.slane %v272, %v3322
  %v3324 = vlaneseq
  %v3325 = vshrl.u32 %v3324, 7
  %v3326 = vsub.s32 0, %v3325
  %v3327 = vrot.slane %v274, %v3326
  %v3328 = vlaneseq
  %v3329 = vshrl.u32 %v3328, 7
  %v3330 = vsub.s32 0, %v3329
  %v3331 = vrot.slane %v276, %v3330
  %v3332 = vlaneseq
  %v3333 = vshrl.u32 %v3332, 7
  %v3334 = vsub.s32 0, %v3333
  %v3335 = vrot.slane %v278, %v3334
  %v3336 = vlaneseq
  %v3337 = vshrl.u32 %v3336, 7
  %v3338 = vsub.s32 0, %v3337
  %v3339 = vrot.slane %v280, %v3338
  %v3340 = vlaneseq
  %v3341 = vshrl.u32 %v3340, 7
  %v3342 = vsub.s32 0, %v3341
  %v3343 = vrot.slane %v282, %v3342
  %v3344 = vlaneseq
  %v3345 = vshrl.u32 %v3344, 7
  %v3346 = vsub.s32 0, %v3345
  %v3347 = vrot.slane %v300, %v3346
  %v3348 = vlaneseq
  %v3349 = vshrl.u32 %v3348, 7
  %v3350 = vsub.s32 0, %v3349
  %v3351 = vrot.slane %v302, %v3350
  %v3352 = vlaneseq
  %v3353 = vshrl.u32 %v3352, 7
  %v3354 = vsub.s32 0, %v3353
  %v3355 = vrot.slane %v304, %v3354
  %v3356 = vlaneseq
  %v3357 = vshrl.u32 %v3356, 7
  %v3358 = vsub.s32 0, %v3357
  %v3359 = vrot.slane %v306, %v3358
  %v3360 = vlaneseq
  %v3361 = vshrl.u32 %v3360, 7
  %v3362 = vsub.s32 0, %v3361
  %v3363 = vrot.slane %v308, %v3362
  %v3364 = vlaneseq
  %v3365 = vshrl.u32 %v3364, 7
  %v3366 = vsub.s32 0, %v3365
  %v3367 = vrot.slane %v310, %v3366
  %v3368 = vlaneseq
  %v3369 = vshrl.u32 %v3368, 7
  %v3370 = vsub.s32 0, %v3369
  %v3371 = vrot.slane %v312, %v3370
  %v3372 = vlaneseq
  %v3373 = vshrl.u32 %v3372, 7
  %v3374 = vsub.s32 0, %v3373
  %v3375 = vrot.slane %v330, %v3374
  %v3376 = vlaneseq
  %v3377 = vshrl.u32 %v3376, 7
  %v3378 = vsub.s32 0, %v3377
  %v3379 = vrot.slane %v332, %v3378
  %v3380 = vlaneseq
  %v3381 = vshrl.u32 %v3380, 7
  %v3382 = vsub.s32 0, %v3381
  %v3383 = vrot.slane %v334, %v3382
  %v3384 = vlaneseq
  %v3385 = vshrl.u32 %v3384, 7
  %v3386 = vsub.s32 0, %v3385
  %v3387 = vrot.slane %v336, %v3386
  %v3388 = vlaneseq
  %v3389 = vshrl.u32 %v3388, 7
  %v3390 = vsub.s32 0, %v3389
  %v3391 = vrot.slane %v338, %v3390
  %v3392 = vlaneseq
  %v3393 = vshrl.u32 %v3392, 7
  %v3394 = vsub.s32 0, %v3393
  %v3395 = vrot.slane %v340, %v3394
  %v3396 = vlaneseq
  %v3397 = vshrl.u32 %v3396, 7
  %v3398 = vsub.s32 0, %v3397
  %v3399 = vrot.slane %v342, %v3398
  %v3400 = vlaneseq
  %v3401 = vshrl.u32 %v3400, 7
  %v3402 = vsub.s32 0, %v3401
  %v3403 = vrot.slane %v360, %v3402
  %v3404 = vlaneseq
  %v3405 = vshrl.u32 %v3404, 7
  %v3406 = vsub.s32 0, %v3405
  %v3407 = vrot.slane %v362, %v3406
  %v3408 = vlaneseq
  %v3409 = vshrl.u32 %v3408, 7
  %v3410 = vsub.s32 0, %v3409
  %v3411 = vrot.slane %v364, %v3410
  %v3412 = vlaneseq
  %v3413 = vshrl.u32 %v3412, 7
  %v3414 = vsub.s32 0, %v3413
  %v3415 = vrot.slane %v366, %v3414
  %v3416 = vlaneseq
  %v3417 = vshrl.u32 %v3416, 7
  %v3418 = vsub.s32 0, %v3417
  %v3419 = vrot.slane %v368, %v3418
  %v3420 = vlaneseq
  %v3421 = vshrl.u32 %v3420, 7
  %v3422 = vsub.s32 0, %v3421
  %v3423 = vrot.slane %v370, %v3422
  %v3424 = vlaneseq
  %v3425 = vshrl.u32 %v3424, 7
  %v3426 = vsub.s32 0, %v3425
  %v3427 = vrot.slane %v372, %v3426
  %v3428 = vlaneseq
  %v3429 = vshrl.u32 %v3428, 7
  %v3430 = vsub.s32 0, %v3429
  %v3431 = vrot.slane %v390, %v3430
  %v3432 = vlaneseq
  %v3433 = vshrl.u32 %v3432, 7
  %v3434 = vsub.s32 0, %v3433
  %v3435 = vrot.slane %v392, %v3434
  %v3436 = vlaneseq
  %v3437 = vshrl.u32 %v3436, 7
  %v3438 = vsub.s32 0, %v3437
  %v3439 = vrot.slane %v394, %v3438
  %v3440 = vlaneseq
  %v3441 = vshrl.u32 %v3440, 7
  %v3442 = vsub.s32 0, %v3441
  %v3443 = vrot.slane %v396, %v3442
  %v3444 = vlaneseq
  %v3445 = vshrl.u32 %v3444, 7
  %v3446 = vsub.s32 0, %v3445
  %v3447 = vrot.slane %v398, %v3446
  %v3448 = vlaneseq
  %v3449 = vshrl.u32 %v3448, 7
  %v3450 = vsub.s32 0, %v3449
  %v3451 = vrot.slane %v400, %v3450
  %v3452 = vlaneseq
  %v3453 = vshrl.u32 %v3452, 7
  %v3454 = vsub.s32 0, %v3453
  %v3455 = vrot.slane %v402, %v3454
  %v3456 = vlaneseq
  %v3457 = vshrl.u32 %v3456, 7
  %v3458 = vsub.s32 0, %v3457
  %v3459 = vrot.slane %v420, %v3458
  %v3460 = vlaneseq
  %v3461 = vshrl.u32 %v3460, 7
  %v3462 = vsub.s32 0, %v3461
  %v3463 = vrot.slane %v422, %v3462
  %v3464 = vlaneseq
  %v3465 = vshrl.u32 %v3464, 7
  %v3466 = vsub.s32 0, %v3465
  %v3467 = vrot.slane %v424, %v3466
  %v3468 = vlaneseq
  %v3469 = vshrl.u32 %v3468, 7
  %v3470 = vsub.s32 0, %v3469
  %v3471 = vrot.slane %v426, %v3470
  %v3472 = vlaneseq
  %v3473 = vshrl.u32 %v3472, 7
  %v3474 = vsub.s32 0, %v3473
  %v3475 = vrot.slane %v428, %v3474
  %v3476 = vlaneseq
  %v3477 = vshrl.u32 %v3476, 7
  %v3478 = vsub.s32 0, %v3477
  %v3479 = vrot.slane %v430, %v3478
  %v3480 = vlaneseq
  %v3481 = vshrl.u32 %v3480, 7
  %v3482 = vsub.s32 0, %v3481
  %v3483 = vrot.slane %v432, %v3482
  %v3484 = vlaneseq
  %v3485 = vshrl.u32 %v3484, 7
  %v3486 = vsub.s32 0, %v3485
  %v3487 = vrot.slane %v450, %v3486
  %v3488 = vlaneseq
  %v3489 = vshrl.u32 %v3488, 7
  %v3490 = vsub.s32 0, %v3489
  %v3491 = vrot.slane %v452, %v3490
  %v3492 = vlaneseq
  %v3493 = vshrl.u32 %v3492, 7
  %v3494 = vsub.s32 0, %v3493
  %v3495 = vrot.slane %v454, %v3494
  %v3496 = vlaneseq
  %v3497 = vshrl.u32 %v3496, 7
  %v3498 = vsub.s32 0, %v3497
  %v3499 = vrot.slane %v456, %v3498
  %v3500 = vlaneseq
  %v3501 = vshrl.u32 %v3500, 7
  %v3502 = vsub.s32 0, %v3501
  %v3503 = vrot.slane %v458, %v3502
  %v3504 = vlaneseq
  %v3505 = vshrl.u32 %v3504, 7
  %v3506 = vsub.s32 0, %v3505
  %v3507 = vrot.slane %v460, %v3506
  %v3508 = vlaneseq
  %v3509 = vshrl.u32 %v3508, 7
  %v3510 = vsub.s32 0, %v3509
  %v3511 = vrot.slane %v462, %v3510
  %v3610 = vmul.f32 %v3123, %v483
  %v3611 = vmul.f32 %v3127, %v483
  %v3612 = vmul.f32 %v3131, %v483
  %v3613 = vmul.f32 %v3135, %v483
  %v3614 = vmul.f32 %v3139, %v483
  %v3615 = vmul.f32 %v3143, %v483
  %v3616 = vmul.f32 %v3147, %v483
  %v3617 = vmul.f32 %v3151, %v483
  %v3618 = vmul.f32 %v3155, %v483
  %v3619 = vmul.f32 %v3159, %v483
  %v3620 = vmul.f32 %v3163, %v483
  %v3621 = vmul.f32 %v3167, %v483
  %v3622 = vmul.f32 %v3171, %v483
  %v3623 = vmul.f32 %v3175, %v483
  %v3624 = vmul.f32 %v3179, %v483
  %v3625 = vmul.f32 %v3183, %v483
  %v3626 = vmul.f32 %v3187, %v483
  %v3627 = vmul.f32 %v3191, %v483
  %v3628 = vmul.f32 %v3195, %v483
  %v3629 = vmul.f32 %v3199, %v483
  %v3630 = vmul.f32 %v3203, %v483
  %v3631 = vmul.f32 %v3207, %v483
  %v3632 = vmul.f32 %v3211, %v483
  %v3633 = vmul.f32 %v3215, %v483
  %v3634 = vmul.f32 %v3219, %v483
  %v3635 = vmul.f32 %v3223, %v483
  %v3636 = vmul.f32 %v3227, %v483
  %v3637 = vmul.f32 %v3231, %v483
  %v3638 = vmul.f32 %v3235, %v483
  %v3639 = vmul.f32 %v3239, %v483
  %v3640 = vmul.f32 %v3243, %v483
  %v3641 = vmul.f32 %v3247, %v483
  %v3642 = vmul.f32 %v3251, %v483
  %v3643 = vmul.f32 %v3255, %v483
  %v3644 = vmul.f32 %v3259, %v483
  %v3645 = vmul.f32 %v3263, %v483
  %v3646 = vmul.f32 %v3267, %v483
  %v3647 = vmul.f32 %v3271, %v483
  %v3648 = vmul.f32 %v3275, %v483
  %v3649 = vmul.f32 %v3279, %v483
  %v3650 = vmul.f32 %v3283, %v483
  %v3651 = vmul.f32 %v3287, %v483
  %v3652 = vmul.f32 %v3291, %v483
  %v3653 = vmul.f32 %v3295, %v483
  %v3654 = vmul.f32 %v3299, %v483
  %v3655 = vmul.f32 %v3303, %v483
  %v3656 = vmul.f32 %v3307, %v483
  %v3657 = vmul.f32 %v3311, %v483
  %v3658 = vmul.f32 %v3315, %v483
  %v3659 = vmul.f32 %v3319, %v483
  %v3660 = vmul.f32 %v3323, %v483
  %v3661 = vmul.f32 %v3327, %v483
  %v3662 = vmul.f32 %v3331, %v483
  %v3663 = vmul.f32 %v3335, %v483
  %v3664 = vmul.f32 %v3339, %v483
  %v3665 = vmul.f32 %v3343, %v483
  %v3666 = vmul.f32 %v3347, %v483
  %v3667 = vmul.f32 %v3351, %v483
  %v3668 = vmul.f32 %v3355, %v483
  %v3669 = vmul.f32 %v3359, %v483
  %v3670 = vmul.f32 %v3363, %v483
  %v3671 = vmul.f32 %v3367, %v483
  %v3672 = vmul.f32 %v3371, %v483
  %v3673 = vmul.f32 %v3375, %v483
  %v3674 = vmul.f32 %v3379, %v483
  %v3675 = vmul.f32 %v3383, %v483
  %v3676 = vmul.f32 %v3387, %v483
  %v3677 = vmul.f32 %v3391, %v483
  %v3678 = vmul.f32 %v3395, %v483
  %v3679 = vmul.f32 %v3399, %v483
  %v3680 = vmul.f32 %v3403, %v483
  %v3681 = vmul.f32 %v3407, %v483
  %v3682 = vmul.f32 %v3411, %v483
  %v3683 = vmul.f32 %v3415, %v483
  %v3684 = vmul.f32 %v3419, %v483
  %v3685 = vmul.f32 %v3423, %v483
  %v3686 = vmul.f32 %v3427, %v483
  %v3687 = vmul.f32 %v3431, %v483
  %v3688 = vmul.f32 %v3435, %v483
  %v3689 = vmul.f32 %v3439, %v483
  %v3690 = vmul.f32 %v3443, %v483
  %v3691 = vmul.f32 %v3447, %v483
  %v3692 = vmul.f32 %v3451, %v483
  %v3693 = vmul.f32 %v3455, %v483
  %v3694 = vmul.f32 %v3459, %v483
  %v3695 = vmul.f32 %v3463, %v483
  %v3696 = vmul.f32 %v3467, %v483
  %v3697 = vmul.f32 %v3471, %v483
  %v3698 = vmul.f32 %v3475, %v483
  %v3699 = vmul.f32 %v3479, %v483
  %v3700 = vmul.f32 %v3483, %v483
  %v3701 = vmul.f32 %v3487, %v483
  %v3702 = vmul.f32 %v3491, %v483
  %v3703 = vmul.f32 %v3495, %v483
  %v3704 = vmul.f32 %v3499, %v483
  %v3705 = vmul.f32 %v3503, %v483
  %v3706 = vmul.f32 %v3507, %v483
  %v3707 = vmul.f32 %v3511, %v483
  %v3708 = vadd.f32 %v2924, %v3610
  %v3709 = vadd.f32 %v2925, %v3611
  %v3710 = vadd.f32 %v2926, %v3612
  %v3711 = vadd.f32 %v2927, %v3613
  %v3712 = vadd.f32 %v2928, %v3614
  %v3713 = vadd.f32 %v2929, %v3615
  %v3714 = vadd.f32 %v2930, %v3616
  %v3715 = vadd.f32 %v2931, %v3617
  %v3716 = vadd.f32 %v2932, %v3618
  %v3717 = vadd.f32 %v2933, %v3619
  %v3718 = vadd.f32 %v2934, %v3620
  %v3719 = vadd.f32 %v2935, %v3621
  %v3720 = vadd.f32 %v2936, %v3622
  %v3721 = vadd.f32 %v2937, %v3623
  %v3722 = vadd.f32 %v2938, %v3624
  %v3723 = vadd.f32 %v2939, %v3625
  %v3724 = vadd.f32 %v2940, %v3626
  %v3725 = vadd.f32 %v2941, %v3627
  %v3726 = vadd.f32 %v2942, %v3628
  %v3727 = vadd.f32 %v2943, %v3629
  %v3728 = vadd.f32 %v2944, %v3630
  %v3729 = vadd.f32 %v2945, %v3631
  %v3730 = vadd.f32 %v2946, %v3632
  %v3731 = vadd.f32 %v2947, %v3633
  %v3732 = vadd.f32 %v2948, %v3634
  %v3733 = vadd.f32 %v2949, %v3635
  %v3734 = vadd.f32 %v2950, %v3636
  %v3735 = vadd.f32 %v2951, %v3637
  %v3736 = vadd.f32 %v2952, %v3638
  %v3737 = vadd.f32 %v2953, %v3639
  %v3738 = vadd.f32 %v2954, %v3640
  %v3739 = vadd.f32 %v2955, %v3641
  %v3740 = vadd.f32 %v2956, %v3642
  %v3741 = vadd.f32 %v2957, %v3643
  %v3742 = vadd.f32 %v2958, %v3644
  %v3743 = vadd.f32 %v2959, %v3645
  %v3744 = vadd.f32 %v2960, %v3646
  %v3745 = vadd.f32 %v2961, %v3647
  %v3746 = vadd.f32 %v2962, %v3648
  %v3747 = vadd.f32 %v2963, %v3649
  %v3748 = vadd.f32 %v2964, %v3650
  %v3749 = vadd.f32 %v2965, %v3651
  %v3750 = vadd.f32 %v2966, %v3652
  %v3751 = vadd.f32 %v2967, %v3653
  %v3752 = vadd.f32 %v2968, %v3654
  %v3753 = vadd.f32 %v2969, %v3655
  %v3754 = vadd.f32 %v2970, %v3656
  %v3755 = vadd.f32 %v2971, %v3657
  %v3756 = vadd.f32 %v2972, %v3658
  %v3757 = vadd.f32 %v2973, %v3659
  %v3758 = vadd.f32 %v2974, %v3660
  %v3759 = vadd.f32 %v2975, %v3661
  %v3760 = vadd.f32 %v2976, %v3662
  %v3761 = vadd.f32 %v2977, %v3663
  %v3762 = vadd.f32 %v2978, %v3664
  %v3763 = vadd.f32 %v2979, %v3665
  %v3764 = vadd.f32 %v2980, %v3666
  %v3765 = vadd.f32 %v2981, %v3667
  %v3766 = vadd.f32 %v2982, %v3668
  %v3767 = vadd.f32 %v2983, %v3669
  %v3768 = vadd.f32 %v2984, %v3670
  %v3769 = vadd.f32 %v2985, %v3671
  %v3770 = vadd.f32 %v2986, %v3672
  %v3771 = vadd.f32 %v2987, %v3673
  %v3772 = vadd.f32 %v2988, %v3674
  %v3773 = vadd.f32 %v2989, %v3675
  %v3774 = vadd.f32 %v2990, %v3676
  %v3775 = vadd.f32 %v2991, %v3677
  %v3776 = vadd.f32 %v2992, %v3678
  %v3777 = vadd.f32 %v2993, %v3679
  %v3778 = vadd.f32 %v2994, %v3680
  %v3779 = vadd.f32 %v2995, %v3681
  %v3780 = vadd.f32 %v2996, %v3682
  %v3781 = vadd.f32 %v2997, %v3683
  %v3782 = vadd.f32 %v2998, %v3684
  %v3783 = vadd.f32 %v2999, %v3685
  %v3784 = vadd.f32 %v3000, %v3686
  %v3785 = vadd.f32 %v3001, %v3687
  %v3786 = vadd.f32 %v3002, %v3688
  %v3787 = vadd.f32 %v3003, %v3689
  %v3788 = vadd.f32 %v3004, %v3690
  %v3789 = vadd.f32 %v3005, %v3691
  %v3790 = vadd.f32 %v3006, %v3692
  %v3791 = vadd.f32 %v3007, %v3693
  %v3792 = vadd.f32 %v3008, %v3694
  %v3793 = vadd.f32 %v3009, %v3695
  %v3794 = vadd.f32 %v3010, %v3696
  %v3795 = vadd.f32 %v3011, %v3697
  %v3796 = vadd.f32 %v3012, %v3698
  %v3797 = vadd.f32 %v3013, %v3699
  %v3798 = vadd.f32 %v3014, %v3700
  %v3799 = vadd.f32 %v3015, %v3701
  %v3800 = vadd.f32 %v3016, %v3702
  %v3801 = vadd.f32 %v3017, %v3703
  %v3802 = vadd.f32 %v3018, %v3704
  %v3803 = vadd.f32 %v3019, %v3705
  %v3804 = vadd.f32 %v3020, %v3706
  %v3805 = vadd.f32 %v3021, %v3707
  %v3820 = vlaneseq
  %v3821 = vshrl.u32 %v3820, 7
  %v3822 = vsub.s32 0, %v3821
  %v3823 = vrot.slane %v58, %v3822
  %v3824 = vlaneseq
  %v3825 = vshrl.u32 %v3824, 7
  %v3826 = vsub.s32 0, %v3825
  %v3827 = vrot.slane %v88, %v3826
  %v3828 = vlaneseq
  %v3829 = vshrl.u32 %v3828, 7
  %v3830 = vsub.s32 0, %v3829
  %v3831 = vrot.slane %v118, %v3830
  %v3832 = vlaneseq
  %v3833 = vshrl.u32 %v3832, 7
  %v3834 = vsub.s32 0, %v3833
  %v3835 = vrot.slane %v148, %v3834
  %v3836 = vlaneseq
  %v3837 = vshrl.u32 %v3836, 7
  %v3838 = vsub.s32 0, %v3837
  %v3839 = vrot.slane %v178, %v3838
  %v3840 = vlaneseq
  %v3841 = vshrl.u32 %v3840, 7
  %v3842 = vsub.s32 0, %v3841
  %v3843 = vrot.slane %v208, %v3842
  %v3844 = vlaneseq
  %v3845 = vshrl.u32 %v3844, 7
  %v3846 = vsub.s32 0, %v3845
  %v3847 = vrot.slane %v238, %v3846
  %v3848 = vlaneseq
  %v3849 = vshrl.u32 %v3848, 7
  %v3850 = vsub.s32 0, %v3849
  %v3851 = vrot.slane %v283, %v3850
  %v3852 = vlaneseq
  %v3853 = vshrl.u32 %v3852, 7
  %v3854 = vsub.s32 0, %v3853
  %v3855 = vrot.slane %v313, %v3854
  %v3856 = vlaneseq
  %v3857 = vshrl.u32 %v3856, 7
  %v3858 = vsub.s32 0, %v3857
  %v3859 = vrot.slane %v343, %v3858
  %v3860 = vlaneseq
  %v3861 = vshrl.u32 %v3860, 7
  %v3862 = vsub.s32 0, %v3861
  %v3863 = vrot.slane %v373, %v3862
  %v3864 = vlaneseq
  %v3865 = vshrl.u32 %v3864, 7
  %v3866 = vsub.s32 0, %v3865
  %v3867 = vrot.slane %v403, %v3866
  %v3868 = vlaneseq
  %v3869 = vshrl.u32 %v3868, 7
  %v3870 = vsub.s32 0, %v3869
  %v3871 = vrot.slane %v433, %v3870
  %v3872 = vlaneseq
  %v3873 = vshrl.u32 %v3872, 7
  %v3874 = vsub.s32 0, %v3873
  %v3875 = vrot.slane %v463, %v3874
  %v3890 = vmul.f32 %v2343, %v484
  %v3891 = vmul.f32 %v2347, %v484
  %v3892 = vmul.f32 %v2351, %v484
  %v3893 = vmul.f32 %v2355, %v484
  %v3894 = vmul.f32 %v2359, %v484
  %v3895 = vmul.f32 %v2363, %v484
  %v3896 = vmul.f32 %v3823, %v484
  %v3897 = vmul.f32 %v2371, %v484
  %v3898 = vmul.f32 %v2375, %v484
  %v3899 = vmul.f32 %v2379, %v484
  %v3900 = vmul.f32 %v2383, %v484
  %v3901 = vmul.f32 %v2387, %v484
  %v3902 = vmul.f32 %v2391, %v484
  %v3903 = vmul.f32 %v3827, %v484
  %v3904 = vmul.f32 %v2399, %v484
  %v3905 = vmul.f32 %v2403, %v484
  %v3906 = vmul.f32 %v2407, %v484
  %v3907 = vmul.f32 %v2411, %v484
  %v3908 = vmul.f32 %v2415, %v484
  %v3909 = vmul.f32 %v2419, %v484
  %v3910 = vmul.f32 %v3831, %v484
  %v3911 = vmul.f32 %v2427, %v484
  %v3912 = vmul.f32 %v2431, %v484
  %v3913 = vmul.f32 %v2435, %v484
  %v3914 = vmul.f32 %v2439, %v484
  %v3915 = vmul.f32 %v2443, %v484
  %v3916 = vmul.f32 %v2447, %v484
  %v3917 = vmul.f32 %v3835, %v484
  %v3918 = vmul.f32 %v2455, %v484
  %v3919 = vmul.f32 %v2459, %v484
  %v3920 = vmul.f32 %v2463, %v484
  %v3921 = vmul.f32 %v2467, %v484
  %v3922 = vmul.f32 %v2471, %v484
  %v3923 = vmul.f32 %v2475, %v484
  %v3924 = vmul.f32 %v3839, %v484
  %v3925 = vmul.f32 %v2483, %v484
  %v3926 = vmul.f32 %v2487, %v484
  %v3927 = vmul.f32 %v2491, %v484
  %v3928 = vmul.f32 %v2495, %v484
  %v3929 = vmul.f32 %v2499, %v484
  %v3930 = vmul.f32 %v2503, %v484
  %v3931 = vmul.f32 %v3843, %v484
  %v3932 = vmul.f32 %v2511, %v484
  %v3933 = vmul.f32 %v2515, %v484
  %v3934 = vmul.f32 %v2519, %v484
  %v3935 = vmul.f32 %v2523, %v484
  %v3936 = vmul.f32 %v2527, %v484
  %v3937 = vmul.f32 %v2531, %v484
  %v3938 = vmul.f32 %v3847, %v484
  %v3939 = vmul.f32 %v2539, %v484
  %v3940 = vmul.f32 %v2543, %v484
  %v3941 = vmul.f32 %v2547, %v484
  %v3942 = vmul.f32 %v2551, %v484
  %v3943 = vmul.f32 %v2555, %v484
  %v3944 = vmul.f32 %v2559, %v484
  %v3945 = vmul.f32 %v3851, %v484
  %v3946 = vmul.f32 %v2567, %v484
  %v3947 = vmul.f32 %v2571, %v484
  %v3948 = vmul.f32 %v2575, %v484
  %v3949 = vmul.f32 %v2579, %v484
  %v3950 = vmul.f32 %v2583, %v484
  %v3951 = vmul.f32 %v2587, %v484
  %v3952 = vmul.f32 %v3855, %v484
  %v3953 = vmul.f32 %v2595, %v484
  %v3954 = vmul.f32 %v2599, %v484
  %v3955 = vmul.f32 %v2603, %v484
  %v3956 = vmul.f32 %v2607, %v484
  %v3957 = vmul.f32 %v2611, %v484
  %v3958 = vmul.f32 %v2615, %v484
  %v3959 = vmul.f32 %v3859, %v484
  %v3960 = vmul.f32 %v2623, %v484
  %v3961 = vmul.f32 %v2627, %v484
  %v3962 = vmul.f32 %v2631, %v484
  %v3963 = vmul.f32 %v2635, %v484
  %v3964 = vmul.f32 %v2639, %v484
  %v3965 = vmul.f32 %v2643, %v484
  %v3966 = vmul.f32 %v3863, %v484
  %v3967 = vmul.f32 %v2651, %v484
  %v3968 = vmul.f32 %v2655, %v484
  %v3969 = vmul.f32 %v2659, %v484
  %v3970 = vmul.f32 %v2663, %v484
  %v3971 = vmul.f32 %v2667, %v484
  %v3972 = vmul.f32 %v2671, %v484
  %v3973 = vmul.f32 %v3867, %v484
  %v3974 = vmul.f32 %v2679, %v484
  %v3975 = vmul.f32 %v2683, %v484
  %v3976 = vmul.f32 %v2687, %v484
  %v3977 = vmul.f32 %v2691, %v484
  %v3978 = vmul.f32 %v2695, %v484
  %v3979 = vmul.f32 %v2699, %v484
  %v3980 = vmul.f32 %v3871, %v484
  %v3981 = vmul.f32 %v2707, %v484
  %v3982 = vmul.f32 %v2711, %v484
  %v3983 = vmul.f32 %v2715, %v484
  %v3984 = vmul.f32 %v2719, %v484
  %v3985 = vmul.f32 %v2723, %v484
  %v3986 = vmul.f32 %v2727, %v484
  %v3987 = vmul.f32 %v3875, %v484
  %v3988 = vadd.f32 %v3708, %v3890
  %v3989 = vadd.f32 %v3709, %v3891
  %v3990 = vadd.f32 %v3710, %v3892
  %v3991 = vadd.f32 %v3711, %v3893
  %v3992 = vadd.f32 %v3712, %v3894
  %v3993 = vadd.f32 %v3713, %v3895
  %v3994 = vadd.f32 %v3714, %v3896
  %v3995 = vadd.f32 %v3715, %v3897
  %v3996 = vadd.f32 %v3716, %v3898
  %v3997 = vadd.f32 %v3717, %v3899
  %v3998 = vadd.f32 %v3718, %v3900
  %v3999 = vadd.f32 %v3719, %v3901
  %v4000 = vadd.f32 %v3720, %v3902
  %v4001 = vadd.f32 %v3721, %v3903
  %v4002 = vadd.f32 %v3722, %v3904
  %v4003 = vadd.f32 %v3723, %v3905
  %v4004 = vadd.f32 %v3724, %v3906
  %v4005 = vadd.f32 %v3725, %v3907
  %v4006 = vadd.f32 %v3726, %v3908
  %v4007 = vadd.f32 %v3727, %v3909
  %v4008 = vadd.f32 %v3728, %v3910
  %v4009 = vadd.f32 %v3729, %v3911
  %v4010 = vadd.f32 %v3730, %v3912
  %v4011 = vadd.f32 %v3731, %v3913
  %v4012 = vadd.f32 %v3732, %v3914
  %v4013 = vadd.f32 %v3733, %v3915
  %v4014 = vadd.f32 %v3734, %v3916
  %v4015 = vadd.f32 %v3735, %v3917
  %v4016 = vadd.f32 %v3736, %v3918
  %v4017 = vadd.f32 %v3737, %v3919
  %v4018 = vadd.f32 %v3738, %v3920
  %v4019 = vadd.f32 %v3739, %v3921
  %v4020 = vadd.f32 %v3740, %v3922
  %v4021 = vadd.f32 %v3741, %v3923
  %v4022 = vadd.f32 %v3742, %v3924
  %v4023 = vadd.f32 %v3743, %v3925
  %v4024 = vadd.f32 %v3744, %v3926
  %v4025 = vadd.f32 %v3745, %v3927
  %v4026 = vadd.f32 %v3746, %v3928
  %v4027 = vadd.f32 %v3747, %v3929
  %v4028 = vadd.f32 %v3748, %v3930
  %v4029 = vadd.f32 %v3749, %v3931
  %v4030 = vadd.f32 %v3750, %v3932
  %v4031 = vadd.f32 %v3751, %v3933
  %v4032 = vadd.f32 %v3752, %v3934
  %v4033 = vadd.f32 %v3753, %v3935
  %v4034 = vadd.f32 %v3754, %v3936
  %v4035 = vadd.f32 %v3755, %v3937
  %v4036 = vadd.f32 %v3756, %v3938
  %v4037 = vadd.f32 %v3757, %v3939
  %v4038 = vadd.f32 %v3758, %v3940
  %v4039 = vadd.f32 %v3759, %v3941
  %v4040 = vadd.f32 %v3760, %v3942
  %v4041 = vadd.f32 %v3761, %v3943
  %v4042 = vadd.f32 %v3762, %v3944
  %v4043 = vadd.f32 %v3763, %v3945
  %v4044 = vadd.f32 %v3764, %v3946
  %v4045 = vadd.f32 %v3765, %v3947
  %v4046 = vadd.f32 %v3766, %v3948
  %v4047 = vadd.f32 %v3767, %v3949
  %v4048 = vadd.f32 %v3768, %v3950
  %v4049 = vadd.f32 %v3769, %v3951
  %v4050 = vadd.f32 %v3770, %v3952
  %v4051 = vadd.f32 %v3771, %v3953
  %v4052 = vadd.f32 %v3772, %v3954
  %v4053 = vadd.f32 %v3773, %v3955
  %v4054 = vadd.f32 %v3774, %v3956
  %v4055 = vadd.f32 %v3775, %v3957
  %v4056 = vadd.f32 %v3776, %v3958
  %v4057 = vadd.f32 %v3777, %v3959
  %v4058 = vadd.f32 %v3778, %v3960
  %v4059 = vadd.f32 %v3779, %v3961
  %v4060 = vadd.f32 %v3780, %v3962
  %v4061 = vadd.f32 %v3781, %v3963
  %v4062 = vadd.f32 %v3782, %v3964
  %v4063 = vadd.f32 %v3783, %v3965
  %v4064 = vadd.f32 %v3784, %v3966
  %v4065 = vadd.f32 %v3785, %v3967
  %v4066 = vadd.f32 %v3786, %v3968
  %v4067 = vadd.f32 %v3787, %v3969
  %v4068 = vadd.f32 %v3788, %v3970
  %v4069 = vadd.f32 %v3789, %v3971
  %v4070 = vadd.f32 %v3790, %v3972
  %v4071 = vadd.f32 %v3791, %v3973
  %v4072 = vadd.f32 %v3792, %v3974
  %v4073 = vadd.f32 %v3793, %v3975
  %v4074 = vadd.f32 %v3794, %v3976
  %v4075 = vadd.f32 %v3795, %v3977
  %v4076 = vadd.f32 %v3796, %v3978
  %v4077 = vadd.f32 %v3797, %v3979
  %v4078 = vadd.f32 %v3798, %v3980
  %v4079 = vadd.f32 %v3799, %v3981
  %v4080 = vadd.f32 %v3800, %v3982
  %v4081 = vadd.f32 %v3801, %v3983
  %v4082 = vadd.f32 %v3802, %v3984
  %v4083 = vadd.f32 %v3803, %v3985
  %v4084 = vadd.f32 %v3804, %v3986
  %v4085 = vadd.f32 %v3805, %v3987
  %v4100 = vlaneseq
  %v4101 = vshrl.u32 %v4100, 7
  %v4102 = vsub.s32 0, %v4101
  %v4103 = vrot.slane %v239, %v4102
  %v4104 = vlaneseq
  %v4105 = vshrl.u32 %v4104, 7
  %v4106 = vsub.s32 0, %v4105
  %v4107 = vrot.slane %v241, %v4106
  %v4108 = vlaneseq
  %v4109 = vshrl.u32 %v4108, 7
  %v4110 = vsub.s32 0, %v4109
  %v4111 = vrot.slane %v243, %v4110
  %v4112 = vlaneseq
  %v4113 = vshrl.u32 %v4112, 7
  %v4114 = vsub.s32 0, %v4113
  %v4115 = vrot.slane %v245, %v4114
  %v4116 = vlaneseq
  %v4117 = vshrl.u32 %v4116, 7
  %v4118 = vsub.s32 0, %v4117
  %v4119 = vrot.slane %v247, %v4118
  %v4120 = vlaneseq
  %v4121 = vshrl.u32 %v4120, 7
  %v4122 = vsub.s32 0, %v4121
  %v4123 = vrot.slane %v249, %v4122
  %v4124 = vlaneseq
  %v4125 = vshrl.u32 %v4124, 7
  %v4126 = vsub.s32 0, %v4125
  %v4127 = vrot.slane %v251, %v4126
  %v4128 = vlaneseq
  %v4129 = vshrl.u32 %v4128, 7
  %v4130 = vsub.s32 0, %v4129
  %v4131 = vrot.slane %v464, %v4130
  %v4132 = vlaneseq
  %v4133 = vshrl.u32 %v4132, 7
  %v4134 = vsub.s32 0, %v4133
  %v4135 = vrot.slane %v466, %v4134
  %v4136 = vlaneseq
  %v4137 = vshrl.u32 %v4136, 7
  %v4138 = vsub.s32 0, %v4137
  %v4139 = vrot.slane %v468, %v4138
  %v4140 = vlaneseq
  %v4141 = vshrl.u32 %v4140, 7
  %v4142 = vsub.s32 0, %v4141
  %v4143 = vrot.slane %v470, %v4142
  %v4144 = vlaneseq
  %v4145 = vshrl.u32 %v4144, 7
  %v4146 = vsub.s32 0, %v4145
  %v4147 = vrot.slane %v472, %v4146
  %v4148 = vlaneseq
  %v4149 = vshrl.u32 %v4148, 7
  %v4150 = vsub.s32 0, %v4149
  %v4151 = vrot.slane %v474, %v4150
  %v4152 = vlaneseq
  %v4153 = vshrl.u32 %v4152, 7
  %v4154 = vsub.s32 0, %v4153
  %v4155 = vrot.slane %v476, %v4154
  %v4170 = vmul.f32 %v617, %v485
  %v4171 = vmul.f32 %v621, %v485
  %v4172 = vmul.f32 %v625, %v485
  %v4173 = vmul.f32 %v629, %v485
  %v4174 = vmul.f32 %v633, %v485
  %v4175 = vmul.f32 %v637, %v485
  %v4176 = vmul.f32 %v641, %v485
  %v4177 = vmul.f32 %v645, %v485
  %v4178 = vmul.f32 %v649, %v485
  %v4179 = vmul.f32 %v653, %v485
  %v4180 = vmul.f32 %v657, %v485
  %v4181 = vmul.f32 %v661, %v485
  %v4182 = vmul.f32 %v665, %v485
  %v4183 = vmul.f32 %v669, %v485
  %v4184 = vmul.f32 %v673, %v485
  %v4185 = vmul.f32 %v677, %v485
  %v4186 = vmul.f32 %v681, %v485
  %v4187 = vmul.f32 %v685, %v485
  %v4188 = vmul.f32 %v689, %v485
  %v4189 = vmul.f32 %v693, %v485
  %v4190 = vmul.f32 %v697, %v485
  %v4191 = vmul.f32 %v701, %v485
  %v4192 = vmul.f32 %v705, %v485
  %v4193 = vmul.f32 %v709, %v485
  %v4194 = vmul.f32 %v713, %v485
  %v4195 = vmul.f32 %v717, %v485
  %v4196 = vmul.f32 %v721, %v485
  %v4197 = vmul.f32 %v725, %v485
  %v4198 = vmul.f32 %v729, %v485
  %v4199 = vmul.f32 %v733, %v485
  %v4200 = vmul.f32 %v737, %v485
  %v4201 = vmul.f32 %v741, %v485
  %v4202 = vmul.f32 %v745, %v485
  %v4203 = vmul.f32 %v749, %v485
  %v4204 = vmul.f32 %v753, %v485
  %v4205 = vmul.f32 %v757, %v485
  %v4206 = vmul.f32 %v761, %v485
  %v4207 = vmul.f32 %v765, %v485
  %v4208 = vmul.f32 %v769, %v485
  %v4209 = vmul.f32 %v773, %v485
  %v4210 = vmul.f32 %v777, %v485
  %v4211 = vmul.f32 %v781, %v485
  %v4212 = vmul.f32 %v4103, %v485
  %v4213 = vmul.f32 %v4107, %v485
  %v4214 = vmul.f32 %v4111, %v485
  %v4215 = vmul.f32 %v4115, %v485
  %v4216 = vmul.f32 %v4119, %v485
  %v4217 = vmul.f32 %v4123, %v485
  %v4218 = vmul.f32 %v4127, %v485
  %v4219 = vmul.f32 %v813, %v485
  %v4220 = vmul.f32 %v817, %v485
  %v4221 = vmul.f32 %v821, %v485
  %v4222 = vmul.f32 %v825, %v485
  %v4223 = vmul.f32 %v829, %v485
  %v4224 = vmul.f32 %v833, %v485
  %v4225 = vmul.f32 %v837, %v485
  %v4226 = vmul.f32 %v841, %v485
  %v4227 = vmul.f32 %v845, %v485
  %v4228 = vmul.f32 %v849, %v485
  %v4229 = vmul.f32 %v853, %v485
  %v4230 = vmul.f32 %v857, %v485
  %v4231 = vmul.f32 %v861, %v485
  %v4232 = vmul.f32 %v865, %v485
  %v4233 = vmul.f32 %v869, %v485
  %v4234 = vmul.f32 %v873, %v485
  %v4235 = vmul.f32 %v877, %v485
  %v4236 = vmul.f32 %v881, %v485
  %v4237 = vmul.f32 %v885, %v485
  %v4238 = vmul.f32 %v889, %v485
  %v4239 = vmul.f32 %v893, %v485
  %v4240 = vmul.f32 %v897, %v485
  %v4241 = vmul.f32 %v901, %v485
  %v4242 = vmul.f32 %v905, %v485
  %v4243 = vmul.f32 %v909, %v485
  %v4244 = vmul.f32 %v913, %v485
  %v4245 = vmul.f32 %v917, %v485
  %v4246 = vmul.f32 %v921, %v485
  %v4247 = vmul.f32 %v925, %v485
  %v4248 = vmul.f32 %v929, %v485
  %v4249 = vmul.f32 %v933, %v485
  %v4250 = vmul.f32 %v937, %v485
  %v4251 = vmul.f32 %v941, %v485
  %v4252 = vmul.f32 %v945, %v485
  %v4253 = vmul.f32 %v949, %v485
  %v4254 = vmul.f32 %v953, %v485
  %v4255 = vmul.f32 %v957, %v485
  %v4256 = vmul.f32 %v961, %v485
  %v4257 = vmul.f32 %v965, %v485
  %v4258 = vmul.f32 %v969, %v485
  %v4259 = vmul.f32 %v973, %v485
  %v4260 = vmul.f32 %v977, %v485
  %v4261 = vmul.f32 %v4131, %v485
  %v4262 = vmul.f32 %v4135, %v485
  %v4263 = vmul.f32 %v4139, %v485
  %v4264 = vmul.f32 %v4143, %v485
  %v4265 = vmul.f32 %v4147, %v485
  %v4266 = vmul.f32 %v4151, %v485
  %v4267 = vmul.f32 %v4155, %v485
  %v4268 = vadd.f32 %v3988, %v4170
  %v4269 = vadd.f32 %v3989, %v4171
  %v4270 = vadd.f32 %v3990, %v4172
  %v4271 = vadd.f32 %v3991, %v4173
  %v4272 = vadd.f32 %v3992, %v4174
  %v4273 = vadd.f32 %v3993, %v4175
  %v4274 = vadd.f32 %v3994, %v4176
  %v4275 = vadd.f32 %v3995, %v4177
  %v4276 = vadd.f32 %v3996, %v4178
  %v4277 = vadd.f32 %v3997, %v4179
  %v4278 = vadd.f32 %v3998, %v4180
  %v4279 = vadd.f32 %v3999, %v4181
  %v4280 = vadd.f32 %v4000, %v4182
  %v4281 = vadd.f32 %v4001, %v4183
  %v4282 = vadd.f32 %v4002, %v4184
  %v4283 = vadd.f32 %v4003, %v4185
  %v4284 = vadd.f32 %v4004, %v4186
  %v4285 = vadd.f32 %v4005, %v4187
  %v4286 = vadd.f32 %v4006, %v4188
  %v4287 = vadd.f32 %v4007, %v4189
  %v4288 = vadd.f32 %v4008, %v4190
  %v4289 = vadd.f32 %v4009, %v4191
  %v4290 = vadd.f32 %v4010, %v4192
  %v4291 = vadd.f32 %v4011, %v4193
  %v4292 = vadd.f32 %v4012, %v4194
  %v4293 = vadd.f32 %v4013, %v4195
  %v4294 = vadd.f32 %v4014, %v4196
  %v4295 = vadd.f32 %v4015, %v4197
  %v4296 = vadd.f32 %v4016, %v4198
  %v4297 = vadd.f32 %v4017, %v4199
  %v4298 = vadd.f32 %v4018, %v4200
  %v4299 = vadd.f32 %v4019, %v4201
  %v4300 = vadd.f32 %v4020, %v4202
  %v4301 = vadd.f32 %v4021, %v4203
  %v4302 = vadd.f32 %v4022, %v4204
  %v4303 = vadd.f32 %v4023, %v4205
  %v4304 = vadd.f32 %v4024, %v4206
  %v4305 = vadd.f32 %v4025, %v4207
  %v4306 = vadd.f32 %v4026, %v4208
  %v4307 = vadd.f32 %v4027, %v4209
  %v4308 = vadd.f32 %v4028, %v4210
  %v4309 = vadd.f32 %v4029, %v4211
  %v4310 = vadd.f32 %v4030, %v4212
  %v4311 = vadd.f32 %v4031, %v4213
  %v4312 = vadd.f32 %v4032, %v4214
  %v4313 = vadd.f32 %v4033, %v4215
  %v4314 = vadd.f32 %v4034, %v4216
  %v4315 = vadd.f32 %v4035, %v4217
  %v4316 = vadd.f32 %v4036, %v4218
  %v4317 = vadd.f32 %v4037, %v4219
  %v4318 = vadd.f32 %v4038, %v4220
  %v4319 = vadd.f32 %v4039, %v4221
  %v4320 = vadd.f32 %v4040, %v4222
  %v4321 = vadd.f32 %v4041, %v4223
  %v4322 = vadd.f32 %v4042, %v4224
  %v4323 = vadd.f32 %v4043, %v4225
  %v4324 = vadd.f32 %v4044, %v4226
  %v4325 = vadd.f32 %v4045, %v4227
  %v4326 = vadd.f32 %v4046, %v4228
  %v4327 = vadd.f32 %v4047, %v4229
  %v4328 = vadd.f32 %v4048, %v4230
  %v4329 = vadd.f32 %v4049, %v4231
  %v4330 = vadd.f32 %v4050, %v4232
  %v4331 = vadd.f32 %v4051, %v4233
  %v4332 = vadd.f32 %v4052, %v4234
  %v4333 = vadd.f32 %v4053, %v4235
  %v4334 = vadd.f32 %v4054, %v4236
  %v4335 = vadd.f32 %v4055, %v4237
  %v4336 = vadd.f32 %v4056, %v4238
  %v4337 = vadd.f32 %v4057, %v4239
  %v4338 = vadd.f32 %v4058, %v4240
  %v4339 = vadd.f32 %v4059, %v4241
  %v4340 = vadd.f32 %v4060, %v4242
  %v4341 = vadd.f32 %v4061, %v4243
  %v4342 = vadd.f32 %v4062, %v4244
  %v4343 = vadd.f32 %v4063, %v4245
  %v4344 = vadd.f32 %v4064, %v4246
  %v4345 = vadd.f32 %v4065, %v4247
  %v4346 = vadd.f32 %v4066, %v4248
  %v4347 = vadd.f32 %v4067, %v4249
  %v4348 = vadd.f32 %v4068, %v4250
  %v4349 = vadd.f32 %v4069, %v4251
  %v4350 = vadd.f32 %v4070, %v4252
  %v4351 = vadd.f32 %v4071, %v4253
  %v4352 = vadd.f32 %v4072, %v4254
  %v4353 = vadd.f32 %v4073, %v4255
  %v4354 = vadd.f32 %v4074, %v4256
  %v4355 = vadd.f32 %v4075, %v4257
  %v4356 = vadd.f32 %v4076, %v4258
  %v4357 = vadd.f32 %v4077, %v4259
  %v4358 = vadd.f32 %v4078, %v4260
  %v4359 = vadd.f32 %v4079, %v4261
  %v4360 = vadd.f32 %v4080, %v4262
  %v4361 = vadd.f32 %v4081, %v4263
  %v4362 = vadd.f32 %v4082, %v4264
  %v4363 = vadd.f32 %v4083, %v4265
  %v4364 = vadd.f32 %v4084, %v4266
  %v4365 = vadd.f32 %v4085, %v4267
  %v4380 = vlaneseq
  %v4381 = vshrl.u32 %v4380, 7
  %v4382 = vsub.s32 0, %v4381
  %v4383 = vrot.slane %v240, %v4382
  %v4384 = vlaneseq
  %v4385 = vshrl.u32 %v4384, 7
  %v4386 = vsub.s32 0, %v4385
  %v4387 = vrot.slane %v242, %v4386
  %v4388 = vlaneseq
  %v4389 = vshrl.u32 %v4388, 7
  %v4390 = vsub.s32 0, %v4389
  %v4391 = vrot.slane %v244, %v4390
  %v4392 = vlaneseq
  %v4393 = vshrl.u32 %v4392, 7
  %v4394 = vsub.s32 0, %v4393
  %v4395 = vrot.slane %v246, %v4394
  %v4396 = vlaneseq
  %v4397 = vshrl.u32 %v4396, 7
  %v4398 = vsub.s32 0, %v4397
  %v4399 = vrot.slane %v248, %v4398
  %v4400 = vlaneseq
  %v4401 = vshrl.u32 %v4400, 7
  %v4402 = vsub.s32 0, %v4401
  %v4403 = vrot.slane %v250, %v4402
  %v4404 = vlaneseq
  %v4405 = vshrl.u32 %v4404, 7
  %v4406 = vsub.s32 0, %v4405
  %v4407 = vrot.slane %v252, %v4406
  %v4408 = vlaneseq
  %v4409 = vshrl.u32 %v4408, 7
  %v4410 = vsub.s32 0, %v4409
  %v4411 = vrot.slane %v465, %v4410
  %v4412 = vlaneseq
  %v4413 = vshrl.u32 %v4412, 7
  %v4414 = vsub.s32 0, %v4413
  %v4415 = vrot.slane %v467, %v4414
  %v4416 = vlaneseq
  %v4417 = vshrl.u32 %v4416, 7
  %v4418 = vsub.s32 0, %v4417
  %v4419 = vrot.slane %v469, %v4418
  %v4420 = vlaneseq
  %v4421 = vshrl.u32 %v4420, 7
  %v4422 = vsub.s32 0, %v4421
  %v4423 = vrot.slane %v471, %v4422
  %v4424 = vlaneseq
  %v4425 = vshrl.u32 %v4424, 7
  %v4426 = vsub.s32 0, %v4425
  %v4427 = vrot.slane %v473, %v4426
  %v4428 = vlaneseq
  %v4429 = vshrl.u32 %v4428, 7
  %v4430 = vsub.s32 0, %v4429
  %v4431 = vrot.slane %v475, %v4430
  %v4432 = vlaneseq
  %v4433 = vshrl.u32 %v4432, 7
  %v4434 = vsub.s32 0, %v4433
  %v4435 = vrot.slane %v477, %v4434
  %v4450 = vmul.f32 %v1303, %v486
  %v4451 = vmul.f32 %v1307, %v486
  %v4452 = vmul.f32 %v1311, %v486
  %v4453 = vmul.f32 %v1315, %v486
  %v4454 = vmul.f32 %v1319, %v486
  %v4455 = vmul.f32 %v1323, %v486
  %v4456 = vmul.f32 %v1327, %v486
  %v4457 = vmul.f32 %v1331, %v486
  %v4458 = vmul.f32 %v1335, %v486
  %v4459 = vmul.f32 %v1339, %v486
  %v4460 = vmul.f32 %v1343, %v486
  %v4461 = vmul.f32 %v1347, %v486
  %v4462 = vmul.f32 %v1351, %v486
  %v4463 = vmul.f32 %v1355, %v486
  %v4464 = vmul.f32 %v1359, %v486
  %v4465 = vmul.f32 %v1363, %v486
  %v4466 = vmul.f32 %v1367, %v486
  %v4467 = vmul.f32 %v1371, %v486
  %v4468 = vmul.f32 %v1375, %v486
  %v4469 = vmul.f32 %v1379, %v486
  %v4470 = vmul.f32 %v1383, %v486
  %v4471 = vmul.f32 %v1387, %v486
  %v4472 = vmul.f32 %v1391, %v486
  %v4473 = vmul.f32 %v1395, %v486
  %v4474 = vmul.f32 %v1399, %v486
  %v4475 = vmul.f32 %v1403, %v486
  %v4476 = vmul.f32 %v1407, %v486
  %v4477 = vmul.f32 %v1411, %v486
  %v4478 = vmul.f32 %v1415, %v486
  %v4479 = vmul.f32 %v1419, %v486
  %v4480 = vmul.f32 %v1423, %v486
  %v4481 = vmul.f32 %v1427, %v486
  %v4482 = vmul.f32 %v1431, %v486
  %v4483 = vmul.f32 %v1435, %v486
  %v4484 = vmul.f32 %v1439, %v486
  %v4485 = vmul.f32 %v1443, %v486
  %v4486 = vmul.f32 %v1447, %v486
  %v4487 = vmul.f32 %v1451, %v486
  %v4488 = vmul.f32 %v1455, %v486
  %v4489 = vmul.f32 %v1459, %v486
  %v4490 = vmul.f32 %v1463, %v486
  %v4491 = vmul.f32 %v1467, %v486
  %v4492 = vmul.f32 %v4383, %v486
  %v4493 = vmul.f32 %v4387, %v486
  %v4494 = vmul.f32 %v4391, %v486
  %v4495 = vmul.f32 %v4395, %v486
  %v4496 = vmul.f32 %v4399, %v486
  %v4497 = vmul.f32 %v4403, %v486
  %v4498 = vmul.f32 %v4407, %v486
  %v4499 = vmul.f32 %v1499, %v486
  %v4500 = vmul.f32 %v1503, %v486
  %v4501 = vmul.f32 %v1507, %v486
  %v4502 = vmul.f32 %v1511, %v486
  %v4503 = vmul.f32 %v1515, %v486
  %v4504 = vmul.f32 %v1519, %v486
  %v4505 = vmul.f32 %v1523, %v486
  %v4506 = vmul.f32 %v1527, %v486
  %v4507 = vmul.f32 %v1531, %v486
  %v4508 = vmul.f32 %v1535, %v486
  %v4509 = vmul.f32 %v1539, %v486
  %v4510 = vmul.f32 %v1543, %v486
  %v4511 = vmul.f32 %v1547, %v486
  %v4512 = vmul.f32 %v1551, %v486
  %v4513 = vmul.f32 %v1555, %v486
  %v4514 = vmul.f32 %v1559, %v486
  %v4515 = vmul.f32 %v1563, %v486
  %v4516 = vmul.f32 %v1567, %v486
  %v4517 = vmul.f32 %v1571, %v486
  %v4518 = vmul.f32 %v1575, %v486
  %v4519 = vmul.f32 %v1579, %v486
  %v4520 = vmul.f32 %v1583, %v486
  %v4521 = vmul.f32 %v1587, %v486
  %v4522 = vmul.f32 %v1591, %v486
  %v4523 = vmul.f32 %v1595, %v486
  %v4524 = vmul.f32 %v1599, %v486
  %v4525 = vmul.f32 %v1603, %v486
  %v4526 = vmul.f32 %v1607, %v486
  %v4527 = vmul.f32 %v1611, %v486
  %v4528 = vmul.f32 %v1615, %v486
  %v4529 = vmul.f32 %v1619, %v486
  %v4530 = vmul.f32 %v1623, %v486
  %v4531 = vmul.f32 %v1627, %v486
  %v4532 = vmul.f32 %v1631, %v486
  %v4533 = vmul.f32 %v1635, %v486
  %v4534 = vmul.f32 %v1639, %v486
  %v4535 = vmul.f32 %v1643, %v486
  %v4536 = vmul.f32 %v1647, %v486
  %v4537 = vmul.f32 %v1651, %v486
  %v4538 = vmul.f32 %v1655, %v486
  %v4539 = vmul.f32 %v1659, %v486
  %v4540 = vmul.f32 %v1663, %v486
  %v4541 = vmul.f32 %v4411, %v486
  %v4542 = vmul.f32 %v4415, %v486
  %v4543 = vmul.f32 %v4419, %v486
  %v4544 = vmul.f32 %v4423, %v486
  %v4545 = vmul.f32 %v4427, %v486
  %v4546 = vmul.f32 %v4431, %v486
  %v4547 = vmul.f32 %v4435, %v486
  %v4548 = vadd.f32 %v4268, %v4450
  %v4549 = vadd.f32 %v4269, %v4451
  %v4550 = vadd.f32 %v4270, %v4452
  %v4551 = vadd.f32 %v4271, %v4453
  %v4552 = vadd.f32 %v4272, %v4454
  %v4553 = vadd.f32 %v4273, %v4455
  %v4554 = vadd.f32 %v4274, %v4456
  %v4555 = vadd.f32 %v4275, %v4457
  %v4556 = vadd.f32 %v4276, %v4458
  %v4557 = vadd.f32 %v4277, %v4459
  %v4558 = vadd.f32 %v4278, %v4460
  %v4559 = vadd.f32 %v4279, %v4461
  %v4560 = vadd.f32 %v4280, %v4462
  %v4561 = vadd.f32 %v4281, %v4463
  %v4562 = vadd.f32 %v4282, %v4464
  %v4563 = vadd.f32 %v4283, %v4465
  %v4564 = vadd.f32 %v4284, %v4466
  %v4565 = vadd.f32 %v4285, %v4467
  %v4566 = vadd.f32 %v4286, %v4468
  %v4567 = vadd.f32 %v4287, %v4469
  %v4568 = vadd.f32 %v4288, %v4470
  %v4569 = vadd.f32 %v4289, %v4471
  %v4570 = vadd.f32 %v4290, %v4472
  %v4571 = vadd.f32 %v4291, %v4473
  %v4572 = vadd.f32 %v4292, %v4474
  %v4573 = vadd.f32 %v4293, %v4475
  %v4574 = vadd.f32 %v4294, %v4476
  %v4575 = vadd.f32 %v4295, %v4477
  %v4576 = vadd.f32 %v4296, %v4478
  %v4577 = vadd.f32 %v4297, %v4479
  %v4578 = vadd.f32 %v4298, %v4480
  %v4579 = vadd.f32 %v4299, %v4481
  %v4580 = vadd.f32 %v4300, %v4482
  %v4581 = vadd.f32 %v4301, %v4483
  %v4582 = vadd.f32 %v4302, %v4484
  %v4583 = vadd.f32 %v4303, %v4485
  %v4584 = vadd.f32 %v4304, %v4486
  %v4585 = vadd.f32 %v4305, %v4487
  %v4586 = vadd.f32 %v4306, %v4488
  %v4587 = vadd.f32 %v4307, %v4489
  %v4588 = vadd.f32 %v4308, %v4490
  %v4589 = vadd.f32 %v4309, %v4491
  %v4590 = vadd.f32 %v4310, %v4492
  %v4591 = vadd.f32 %v4311, %v4493
  %v4592 = vadd.f32 %v4312, %v4494
  %v4593 = vadd.f32 %v4313, %v4495
  %v4594 = vadd.f32 %v4314, %v4496
  %v4595 = vadd.f32 %v4315, %v4497
  %v4596 = vadd.f32 %v4316, %v4498
  %v4597 = vadd.f32 %v4317, %v4499
  %v4598 = vadd.f32 %v4318, %v4500
  %v4599 = vadd.f32 %v4319, %v4501
  %v4600 = vadd.f32 %v4320, %v4502
  %v4601 = vadd.f32 %v4321, %v4503
  %v4602 = vadd.f32 %v4322, %v4504
  %v4603 = vadd.f32 %v4323, %v4505
  %v4604 = vadd.f32 %v4324, %v4506
  %v4605 = vadd.f32 %v4325, %v4507
  %v4606 = vadd.f32 %v4326, %v4508
  %v4607 = vadd.f32 %v4327, %v4509
  %v4608 = vadd.f32 %v4328, %v4510
  %v4609 = vadd.f32 %v4329, %v4511
  %v4610 = vadd.f32 %v4330, %v4512
  %v4611 = vadd.f32 %v4331, %v4513
  %v4612 = vadd.f32 %v4332, %v4514
  %v4613 = vadd.f32 %v4333, %v4515
  %v4614 = vadd.f32 %v4334, %v4516
  %v4615 = vadd.f32 %v4335, %v4517
  %v4616 = vadd.f32 %v4336, %v4518
  %v4617 = vadd.f32 %v4337, %v4519
  %v4618 = vadd.f32 %v4338, %v4520
  %v4619 = vadd.f32 %v4339, %v4521
  %v4620 = vadd.f32 %v4340, %v4522
  %v4621 = vadd.f32 %v4341, %v4523
  %v4622 = vadd.f32 %v4342, %v4524
  %v4623 = vadd.f32 %v4343, %v4525
  %v4624 = vadd.f32 %v4344, %v4526
  %v4625 = vadd.f32 %v4345, %v4527
  %v4626 = vadd.f32 %v4346, %v4528
  %v4627 = vadd.f32 %v4347, %v4529
  %v4628 = vadd.f32 %v4348, %v4530
  %v4629 = vadd.f32 %v4349, %v4531
  %v4630 = vadd.f32 %v4350, %v4532
  %v4631 = vadd.f32 %v4351, %v4533
  %v4632 = vadd.f32 %v4352, %v4534
  %v4633 = vadd.f32 %v4353, %v4535
  %v4634 = vadd.f32 %v4354, %v4536
  %v4635 = vadd.f32 %v4355, %v4537
  %v4636 = vadd.f32 %v4356, %v4538
  %v4637 = vadd.f32 %v4357, %v4539
  %v4638 = vadd.f32 %v4358, %v4540
  %v4639 = vadd.f32 %v4359, %v4541
  %v4640 = vadd.f32 %v4360, %v4542
  %v4641 = vadd.f32 %v4361, %v4543
  %v4642 = vadd.f32 %v4362, %v4544
  %v4643 = vadd.f32 %v4363, %v4545
  %v4644 = vadd.f32 %v4364, %v4546
  %v4645 = vadd.f32 %v4365, %v4547
  %v4648 = vlaneseq
  %v4649 = vshrl.u32 %v4648, 7
  %v4650 = vsub.s32 0, %v4649
  %v4651 = vrot.slane %v253, %v4650
  %v4652 = vlaneseq
  %v4653 = vshrl.u32 %v4652, 7
  %v4654 = vsub.s32 0, %v4653
  %v4655 = vrot.slane %v478, %v4654
  %v4658 = vmul.f32 %v621, %v487
  %v4659 = vmul.f32 %v625, %v487
  %v4660 = vmul.f32 %v629, %v487
  %v4661 = vmul.f32 %v633, %v487
  %v4662 = vmul.f32 %v637, %v487
  %v4663 = vmul.f32 %v641, %v487
  %v4664 = vmul.f32 %v1979, %v487
  %v4665 = vmul.f32 %v649, %v487
  %v4666 = vmul.f32 %v653, %v487
  %v4667 = vmul.f32 %v657, %v487
  %v4668 = vmul.f32 %v661, %v487
  %v4669 = vmul.f32 %v665, %v487
  %v4670 = vmul.f32 %v669, %v487
  %v4671 = vmul.f32 %v1983, %v487
  %v4672 = vmul.f32 %v677, %v487
  %v4673 = vmul.f32 %v681, %v487
  %v4674 = vmul.f32 %v685, %v487
  %v4675 = vmul.f32 %v689, %v487
  %v4676 = vmul.f32 %v693, %v487
  %v4677 = vmul.f32 %v697, %v487
  %v4678 = vmul.f32 %v1987, %v487
  %v4679 = vmul.f32 %v705, %v487
  %v4680 = vmul.f32 %v709, %v487
  %v4681 = vmul.f32 %v713, %v487
  %v4682 = vmul.f32 %v717, %v487
  %v4683 = vmul.f32 %v721, %v487
  %v4684 = vmul.f32 %v725, %v487
  %v4685 = vmul.f32 %v1991, %v487
  %v4686 = vmul.f32 %v733, %v487
  %v4687 = vmul.f32 %v737, %v487
  %v4688 = vmul.f32 %v741, %v487
  %v4689 = vmul.f32 %v745, %v487
  %v4690 = vmul.f32 %v749, %v487
  %v4691 = vmul.f32 %v753, %v487
  %v4692 = vmul.f32 %v1995, %v487
  %v4693 = vmul.f32 %v761, %v487
  %v4694 = vmul.f32 %v765, %v487
  %v4695 = vmul.f32 %v769, %v487
  %v4696 = vmul.f32 %v773, %v487
  %v4697 = vmul.f32 %v777, %v487
  %v4698 = vmul.f32 %v781, %v487
  %v4699 = vmul.f32 %v1999, %v487
  %v4700 = vmul.f32 %v4107, %v487
  %v4701 = vmul.f32 %v4111, %v487
  %v4702 = vmul.f32 %v4115, %v487
  %v4703 = vmul.f32 %v4119, %v487
  %v4704 = vmul.f32 %v4123, %v487
  %v4705 = vmul.f32 %v4127, %v487
  %v4706 = vmul.f32 %v4651, %v487
  %v4707 = vmul.f32 %v817, %v487
  %v4708 = vmul.f32 %v821, %v487
  %v4709 = vmul.f32 %v825, %v487
  %v4710 = vmul.f32 %v829, %v487
  %v4711 = vmul.f32 %v833, %v487
  %v4712 = vmul.f32 %v837, %v487
  %v4713 = vmul.f32 %v2007, %v487
  %v4714 = vmul.f32 %v845, %v487
  %v4715 = vmul.f32 %v849, %v487
  %v4716 = vmul.f32 %v853, %v487
  %v4717 = vmul.f32 %v857, %v487
  %v4718 = vmul.f32 %v861, %v487
  %v4719 = vmul.f32 %v865, %v487
  %v4720 = vmul.f32 %v2011, %v487
  %v4721 = vmul.f32 %v873, %v487
  %v4722 = vmul.f32 %v877, %v487
  %v4723 = vmul.f32 %v881, %v487
  %v4724 = vmul.f32 %v885, %v487
  %v4725 = vmul.f32 %v889, %v487
  %v4726 = vmul.f32 %v893, %v487
  %v4727 = vmul.f32 %v2015, %v487
  %v4728 = vmul.f32 %v901, %v487
  %v4729 = vmul.f32 %v905, %v487
  %v4730 = vmul.f32 %v909, %v487
  %v4731 = vmul.f32 %v913, %v487
  %v4732 = vmul.f32 %v917, %v487
  %v4733 = vmul.f32 %v921, %v487
  %v4734 = vmul.f32 %v2019, %v487
  %v4735 = vmul.f32 %v929, %v487
  %v4736 = vmul.f32 %v933, %v487
  %v4737 = vmul.f32 %v937, %v487
  %v4738 = vmul.f32 %v941, %v487
  %v4739 = vmul.f32 %v945, %v487
  %v4740 = vmul.f32 %v949, %v487
  %v4741 = vmul.f32 %v2023, %v487
  %v4742 = vmul.f32 %v957, %v487
  %v4743 = vmul.f32 %v961, %v487
  %v4744 = vmul.f32 %v965, %v487
  %v4745 = vmul.f32 %v969, %v487
  %v4746 = vmul.f32 %v973, %v487
  %v4747 = vmul.f32 %v977, %v487
  %v4748 = vmul.f32 %v2027, %v487
  %v4749 = vmul.f32 %v4135, %v487
  %v4750 = vmul.f32 %v4139, %v487
  %v4751 = vmul.f32 %v4143, %v487
  %v4752 = vmul.f32 %v4147, %v487
  %v4753 = vmul.f32 %v4151, %v487
  %v4754 = vmul.f32 %v4155, %v487
  %v4755 = vmul.f32 %v4655, %v487
  %v4756 = vadd.f32 %v4548, %v4658
  %v4757 = vadd.f32 %v4549, %v4659
  %v4758 = vadd.f32 %v4550, %v4660
  %v4759 = vadd.f32 %v4551, %v4661
  %v4760 = vadd.f32 %v4552, %v4662
  %v4761 = vadd.f32 %v4553, %v4663
  %v4762 = vadd.f32 %v4554, %v4664
  %v4763 = vadd.f32 %v4555, %v4665
  %v4764 = vadd.f32 %v4556, %v4666
  %v4765 = vadd.f32 %v4557, %v4667
  %v4766 = vadd.f32 %v4558, %v4668
  %v4767 = vadd.f32 %v4559, %v4669
  %v4768 = vadd.f32 %v4560, %v4670
  %v4769 = vadd.f32 %v4561, %v4671
  %v4770 = vadd.f32 %v4562, %v4672
  %v4771 = vadd.f32 %v4563, %v4673
  %v4772 = vadd.f32 %v4564, %v4674
  %v4773 = vadd.f32 %v4565, %v4675
  %v4774 = vadd.f32 %v4566, %v4676
  %v4775 = vadd.f32 %v4567, %v4677
  %v4776 = vadd.f32 %v4568, %v4678
  %v4777 = vadd.f32 %v4569, %v4679
  %v4778 = vadd.f32 %v4570, %v4680
  %v4779 = vadd.f32 %v4571, %v4681
  %v4780 = vadd.f32 %v4572, %v4682
  %v4781 = vadd.f32 %v4573, %v4683
  %v4782 = vadd.f32 %v4574, %v4684
  %v4783 = vadd.f32 %v4575, %v4685
  %v4784 = vadd.f32 %v4576, %v4686
  %v4785 = vadd.f32 %v4577, %v4687
  %v4786 = vadd.f32 %v4578, %v4688
  %v4787 = vadd.f32 %v4579, %v4689
  %v4788 = vadd.f32 %v4580, %v4690
  %v4789 = vadd.f32 %v4581, %v4691
  %v4790 = vadd.f32 %v4582, %v4692
  %v4791 = vadd.f32 %v4583, %v4693
  %v4792 = vadd.f32 %v4584, %v4694
  %v4793 = vadd.f32 %v4585, %v4695
  %v4794 = vadd.f32 %v4586, %v4696
  %v4795 = vadd.f32 %v4587, %v4697
  %v4796 = vadd.f32 %v4588, %v4698
  %v4797 = vadd.f32 %v4589, %v4699
  %v4798 = vadd.f32 %v4590, %v4700
  %v4799 = vadd.f32 %v4591, %v4701
  %v4800 = vadd.f32 %v4592, %v4702
  %v4801 = vadd.f32 %v4593, %v4703
  %v4802 = vadd.f32 %v4594, %v4704
  %v4803 = vadd.f32 %v4595, %v4705
  %v4804 = vadd.f32 %v4596, %v4706
  %v4805 = vadd.f32 %v4597, %v4707
  %v4806 = vadd.f32 %v4598, %v4708
  %v4807 = vadd.f32 %v4599, %v4709
  %v4808 = vadd.f32 %v4600, %v4710
  %v4809 = vadd.f32 %v4601, %v4711
  %v4810 = vadd.f32 %v4602, %v4712
  %v4811 = vadd.f32 %v4603, %v4713
  %v4812 = vadd.f32 %v4604, %v4714
  %v4813 = vadd.f32 %v4605, %v4715
  %v4814 = vadd.f32 %v4606, %v4716
  %v4815 = vadd.f32 %v4607, %v4717
  %v4816 = vadd.f32 %v4608, %v4718
  %v4817 = vadd.f32 %v4609, %v4719
  %v4818 = vadd.f32 %v4610, %v4720
  %v4819 = vadd.f32 %v4611, %v4721
  %v4820 = vadd.f32 %v4612, %v4722
  %v4821 = vadd.f32 %v4613, %v4723
  %v4822 = vadd.f32 %v4614, %v4724
  %v4823 = vadd.f32 %v4615, %v4725
  %v4824 = vadd.f32 %v4616, %v4726
  %v4825 = vadd.f32 %v4617, %v4727
  %v4826 = vadd.f32 %v4618, %v4728
  %v4827 = vadd.f32 %v4619, %v4729
  %v4828 = vadd.f32 %v4620, %v4730
  %v4829 = vadd.f32 %v4621, %v4731
  %v4830 = vadd.f32 %v4622, %v4732
  %v4831 = vadd.f32 %v4623, %v4733
  %v4832 = vadd.f32 %v4624, %v4734
  %v4833 = vadd.f32 %v4625, %v4735
  %v4834 = vadd.f32 %v4626, %v4736
  %v4835 = vadd.f32 %v4627, %v4737
  %v4836 = vadd.f32 %v4628, %v4738
  %v4837 = vadd.f32 %v4629, %v4739
  %v4838 = vadd.f32 %v4630, %v4740
  %v4839 = vadd.f32 %v4631, %v4741
  %v4840 = vadd.f32 %v4632, %v4742
  %v4841 = vadd.f32 %v4633, %v4743
  %v4842 = vadd.f32 %v4634, %v4744
  %v4843 = vadd.f32 %v4635, %v4745
  %v4844 = vadd.f32 %v4636, %v4746
  %v4845 = vadd.f32 %v4637, %v4747
  %v4846 = vadd.f32 %v4638, %v4748
  %v4847 = vadd.f32 %v4639, %v4749
  %v4848 = vadd.f32 %v4640, %v4750
  %v4849 = vadd.f32 %v4641, %v4751
  %v4850 = vadd.f32 %v4642, %v4752
  %v4851 = vadd.f32 %v4643, %v4753
  %v4852 = vadd.f32 %v4644, %v4754
  %v4853 = vadd.f32 %v4645, %v4755
  %vm4854 = vcmask 23552
  %v4855 = vsel %vm4854, %v4756, 0.0
  %4856 = vadd.xlane.f32.xlu0 %v4855
  %v4857 = vpop.xlane.xlu0 %4856
  %v4858 = vsel %vm4854, %v4757, 0.0
  %4859 = vadd.xlane.f32.xlu0 %v4858
  %v4860 = vpop.xlane.xlu0 %4859
  %v4861 = vsel %vm4854, %v4758, 0.0
  %4862 = vadd.xlane.f32.xlu0 %v4861
  %v4863 = vpop.xlane.xlu0 %4862
  %v4864 = vsel %vm4854, %v4759, 0.0
  %4865 = vadd.xlane.f32.xlu0 %v4864
  %v4866 = vpop.xlane.xlu0 %4865
  %v4867 = vsel %vm4854, %v4760, 0.0
  %4868 = vadd.xlane.f32.xlu0 %v4867
  %v4869 = vpop.xlane.xlu0 %4868
  %v4870 = vsel %vm4854, %v4761, 0.0
  %4871 = vadd.xlane.f32.xlu0 %v4870
  %v4872 = vpop.xlane.xlu0 %4871
  %v4873 = vsel %vm4854, %v4762, 0.0
  %4874 = vadd.xlane.f32.xlu0 %v4873
  %v4875 = vpop.xlane.xlu0 %4874
  %v4876 = vsel %vm4854, %v4763, 0.0
  %4877 = vadd.xlane.f32.xlu0 %v4876
  %v4878 = vpop.xlane.xlu0 %4877
  %v4879 = vsel %vm4854, %v4764, 0.0
  %4880 = vadd.xlane.f32.xlu0 %v4879
  %v4881 = vpop.xlane.xlu0 %4880
  %v4882 = vsel %vm4854, %v4765, 0.0
  %4883 = vadd.xlane.f32.xlu0 %v4882
  %v4884 = vpop.xlane.xlu0 %4883
  %v4885 = vsel %vm4854, %v4766, 0.0
  %4886 = vadd.xlane.f32.xlu0 %v4885
  %v4887 = vpop.xlane.xlu0 %4886
  %v4888 = vsel %vm4854, %v4767, 0.0
  %4889 = vadd.xlane.f32.xlu0 %v4888
  %v4890 = vpop.xlane.xlu0 %4889
  %v4891 = vsel %vm4854, %v4768, 0.0
  %4892 = vadd.xlane.f32.xlu0 %v4891
  %v4893 = vpop.xlane.xlu0 %4892
  %v4894 = vsel %vm4854, %v4769, 0.0
  %4895 = vadd.xlane.f32.xlu0 %v4894
  %v4896 = vpop.xlane.xlu0 %4895
  %v4897 = vsel %vm4854, %v4770, 0.0
  %4898 = vadd.xlane.f32.xlu0 %v4897
  %v4899 = vpop.xlane.xlu0 %4898
  %v4900 = vsel %vm4854, %v4771, 0.0
  %4901 = vadd.xlane.f32.xlu0 %v4900
  %v4902 = vpop.xlane.xlu0 %4901
  %v4903 = vsel %vm4854, %v4772, 0.0
  %4904 = vadd.xlane.f32.xlu0 %v4903
  %v4905 = vpop.xlane.xlu0 %4904
  %v4906 = vsel %vm4854, %v4773, 0.0
  %4907 = vadd.xlane.f32.xlu0 %v4906
  %v4908 = vpop.xlane.xlu0 %4907
  %v4909 = vsel %vm4854, %v4774, 0.0
  %4910 = vadd.xlane.f32.xlu0 %v4909
  %v4911 = vpop.xlane.xlu0 %4910
  %v4912 = vsel %vm4854, %v4775, 0.0
  %4913 = vadd.xlane.f32.xlu0 %v4912
  %v4914 = vpop.xlane.xlu0 %4913
  %v4915 = vsel %vm4854, %v4776, 0.0
  %4916 = vadd.xlane.f32.xlu0 %v4915
  %v4917 = vpop.xlane.xlu0 %4916
  %v4918 = vsel %vm4854, %v4777, 0.0
  %4919 = vadd.xlane.f32.xlu0 %v4918
  %v4920 = vpop.xlane.xlu0 %4919
  %v4921 = vsel %vm4854, %v4778, 0.0
  %4922 = vadd.xlane.f32.xlu0 %v4921
  %v4923 = vpop.xlane.xlu0 %4922
  %v4924 = vsel %vm4854, %v4779, 0.0
  %4925 = vadd.xlane.f32.xlu0 %v4924
  %v4926 = vpop.xlane.xlu0 %4925
  %v4927 = vsel %vm4854, %v4780, 0.0
  %4928 = vadd.xlane.f32.xlu0 %v4927
  %v4929 = vpop.xlane.xlu0 %4928
  %v4930 = vsel %vm4854, %v4781, 0.0
  %4931 = vadd.xlane.f32.xlu0 %v4930
  %v4932 = vpop.xlane.xlu0 %4931
  %v4933 = vsel %vm4854, %v4782, 0.0
  %4934 = vadd.xlane.f32.xlu0 %v4933
  %v4935 = vpop.xlane.xlu0 %4934
  %v4936 = vsel %vm4854, %v4783, 0.0
  %4937 = vadd.xlane.f32.xlu0 %v4936
  %v4938 = vpop.xlane.xlu0 %4937
  %v4939 = vsel %vm4854, %v4784, 0.0
  %4940 = vadd.xlane.f32.xlu0 %v4939
  %v4941 = vpop.xlane.xlu0 %4940
  %v4942 = vsel %vm4854, %v4785, 0.0
  %4943 = vadd.xlane.f32.xlu0 %v4942
  %v4944 = vpop.xlane.xlu0 %4943
  %v4945 = vsel %vm4854, %v4786, 0.0
  %4946 = vadd.xlane.f32.xlu0 %v4945
  %v4947 = vpop.xlane.xlu0 %4946
  %v4948 = vsel %vm4854, %v4787, 0.0
  %4949 = vadd.xlane.f32.xlu0 %v4948
  %v4950 = vpop.xlane.xlu0 %4949
  %v4951 = vsel %vm4854, %v4788, 0.0
  %4952 = vadd.xlane.f32.xlu0 %v4951
  %v4953 = vpop.xlane.xlu0 %4952
  %v4954 = vsel %vm4854, %v4789, 0.0
  %4955 = vadd.xlane.f32.xlu0 %v4954
  %v4956 = vpop.xlane.xlu0 %4955
  %v4957 = vsel %vm4854, %v4790, 0.0
  %4958 = vadd.xlane.f32.xlu0 %v4957
  %v4959 = vpop.xlane.xlu0 %4958
  %v4960 = vsel %vm4854, %v4791, 0.0
  %4961 = vadd.xlane.f32.xlu0 %v4960
  %v4962 = vpop.xlane.xlu0 %4961
  %v4963 = vsel %vm4854, %v4792, 0.0
  %4964 = vadd.xlane.f32.xlu0 %v4963
  %v4965 = vpop.xlane.xlu0 %4964
  %v4966 = vsel %vm4854, %v4793, 0.0
  %4967 = vadd.xlane.f32.xlu0 %v4966
  %v4968 = vpop.xlane.xlu0 %4967
  %v4969 = vsel %vm4854, %v4794, 0.0
  %4970 = vadd.xlane.f32.xlu0 %v4969
  %v4971 = vpop.xlane.xlu0 %4970
  %v4972 = vsel %vm4854, %v4795, 0.0
  %4973 = vadd.xlane.f32.xlu0 %v4972
  %v4974 = vpop.xlane.xlu0 %4973
  %v4975 = vsel %vm4854, %v4796, 0.0
  %4976 = vadd.xlane.f32.xlu0 %v4975
  %v4977 = vpop.xlane.xlu0 %4976
  %v4978 = vsel %vm4854, %v4797, 0.0
  %4979 = vadd.xlane.f32.xlu0 %v4978
  %v4980 = vpop.xlane.xlu0 %4979
  %v4981 = vsel %vm4854, %v4798, 0.0
  %4982 = vadd.xlane.f32.xlu0 %v4981
  %v4983 = vpop.xlane.xlu0 %4982
  %v4984 = vsel %vm4854, %v4799, 0.0
  %4985 = vadd.xlane.f32.xlu0 %v4984
  %v4986 = vpop.xlane.xlu0 %4985
  %v4987 = vsel %vm4854, %v4800, 0.0
  %4988 = vadd.xlane.f32.xlu0 %v4987
  %v4989 = vpop.xlane.xlu0 %4988
  %v4990 = vsel %vm4854, %v4801, 0.0
  %4991 = vadd.xlane.f32.xlu0 %v4990
  %v4992 = vpop.xlane.xlu0 %4991
  %v4993 = vsel %vm4854, %v4802, 0.0
  %4994 = vadd.xlane.f32.xlu0 %v4993
  %v4995 = vpop.xlane.xlu0 %4994
  %v4996 = vsel %vm4854, %v4803, 0.0
  %4997 = vadd.xlane.f32.xlu0 %v4996
  %v4998 = vpop.xlane.xlu0 %4997
  %v4999 = vsel %vm4854, %v4804, 0.0
  %5000 = vadd.xlane.f32.xlu0 %v4999
  %v5001 = vpop.xlane.xlu0 %5000
  %v5002 = vsel %vm4854, %v4805, 0.0
  %5003 = vadd.xlane.f32.xlu0 %v5002
  %v5004 = vpop.xlane.xlu0 %5003
  %v5005 = vsel %vm4854, %v4806, 0.0
  %5006 = vadd.xlane.f32.xlu0 %v5005
  %v5007 = vpop.xlane.xlu0 %5006
  %v5008 = vsel %vm4854, %v4807, 0.0
  %5009 = vadd.xlane.f32.xlu0 %v5008
  %v5010 = vpop.xlane.xlu0 %5009
  %v5011 = vsel %vm4854, %v4808, 0.0
  %5012 = vadd.xlane.f32.xlu0 %v5011
  %v5013 = vpop.xlane.xlu0 %5012
  %v5014 = vsel %vm4854, %v4809, 0.0
  %5015 = vadd.xlane.f32.xlu0 %v5014
  %v5016 = vpop.xlane.xlu0 %5015
  %v5017 = vsel %vm4854, %v4810, 0.0
  %5018 = vadd.xlane.f32.xlu0 %v5017
  %v5019 = vpop.xlane.xlu0 %5018
  %v5020 = vsel %vm4854, %v4811, 0.0
  %5021 = vadd.xlane.f32.xlu0 %v5020
  %v5022 = vpop.xlane.xlu0 %5021
  %v5023 = vsel %vm4854, %v4812, 0.0
  %5024 = vadd.xlane.f32.xlu0 %v5023
  %v5025 = vpop.xlane.xlu0 %5024
  %v5026 = vsel %vm4854, %v4813, 0.0
  %5027 = vadd.xlane.f32.xlu0 %v5026
  %v5028 = vpop.xlane.xlu0 %5027
  %v5029 = vsel %vm4854, %v4814, 0.0
  %5030 = vadd.xlane.f32.xlu0 %v5029
  %v5031 = vpop.xlane.xlu0 %5030
  %v5032 = vsel %vm4854, %v4815, 0.0
  %5033 = vadd.xlane.f32.xlu0 %v5032
  %v5034 = vpop.xlane.xlu0 %5033
  %v5035 = vsel %vm4854, %v4816, 0.0
  %5036 = vadd.xlane.f32.xlu0 %v5035
  %v5037 = vpop.xlane.xlu0 %5036
  %v5038 = vsel %vm4854, %v4817, 0.0
  %5039 = vadd.xlane.f32.xlu0 %v5038
  %v5040 = vpop.xlane.xlu0 %5039
  %v5041 = vsel %vm4854, %v4818, 0.0
  %5042 = vadd.xlane.f32.xlu0 %v5041
  %v5043 = vpop.xlane.xlu0 %5042
  %v5044 = vsel %vm4854, %v4819, 0.0
  %5045 = vadd.xlane.f32.xlu0 %v5044
  %v5046 = vpop.xlane.xlu0 %5045
  %v5047 = vsel %vm4854, %v4820, 0.0
  %5048 = vadd.xlane.f32.xlu0 %v5047
  %v5049 = vpop.xlane.xlu0 %5048
  %v5050 = vsel %vm4854, %v4821, 0.0
  %5051 = vadd.xlane.f32.xlu0 %v5050
  %v5052 = vpop.xlane.xlu0 %5051
  %v5053 = vsel %vm4854, %v4822, 0.0
  %5054 = vadd.xlane.f32.xlu0 %v5053
  %v5055 = vpop.xlane.xlu0 %5054
  %v5056 = vsel %vm4854, %v4823, 0.0
  %5057 = vadd.xlane.f32.xlu0 %v5056
  %v5058 = vpop.xlane.xlu0 %5057
  %v5059 = vsel %vm4854, %v4824, 0.0
  %5060 = vadd.xlane.f32.xlu0 %v5059
  %v5061 = vpop.xlane.xlu0 %5060
  %v5062 = vsel %vm4854, %v4825, 0.0
  %5063 = vadd.xlane.f32.xlu0 %v5062
  %v5064 = vpop.xlane.xlu0 %5063
  %v5065 = vsel %vm4854, %v4826, 0.0
  %5066 = vadd.xlane.f32.xlu0 %v5065
  %v5067 = vpop.xlane.xlu0 %5066
  %v5068 = vsel %vm4854, %v4827, 0.0
  %5069 = vadd.xlane.f32.xlu0 %v5068
  %v5070 = vpop.xlane.xlu0 %5069
  %v5071 = vsel %vm4854, %v4828, 0.0
  %5072 = vadd.xlane.f32.xlu0 %v5071
  %v5073 = vpop.xlane.xlu0 %5072
  %v5074 = vsel %vm4854, %v4829, 0.0
  %5075 = vadd.xlane.f32.xlu0 %v5074
  %v5076 = vpop.xlane.xlu0 %5075
  %v5077 = vsel %vm4854, %v4830, 0.0
  %5078 = vadd.xlane.f32.xlu0 %v5077
  %v5079 = vpop.xlane.xlu0 %5078
  %v5080 = vsel %vm4854, %v4831, 0.0
  %5081 = vadd.xlane.f32.xlu0 %v5080
  %v5082 = vpop.xlane.xlu0 %5081
  %v5083 = vsel %vm4854, %v4832, 0.0
  %5084 = vadd.xlane.f32.xlu0 %v5083
  %v5085 = vpop.xlane.xlu0 %5084
  %v5086 = vsel %vm4854, %v4833, 0.0
  %5087 = vadd.xlane.f32.xlu0 %v5086
  %v5088 = vpop.xlane.xlu0 %5087
  %v5089 = vsel %vm4854, %v4834, 0.0
  %5090 = vadd.xlane.f32.xlu0 %v5089
  %v5091 = vpop.xlane.xlu0 %5090
  %v5092 = vsel %vm4854, %v4835, 0.0
  %5093 = vadd.xlane.f32.xlu0 %v5092
  %v5094 = vpop.xlane.xlu0 %5093
  %v5095 = vsel %vm4854, %v4836, 0.0
  %5096 = vadd.xlane.f32.xlu0 %v5095
  %v5097 = vpop.xlane.xlu0 %5096
  %v5098 = vsel %vm4854, %v4837, 0.0
  %5099 = vadd.xlane.f32.xlu0 %v5098
  %v5100 = vpop.xlane.xlu0 %5099
  %v5101 = vsel %vm4854, %v4838, 0.0
  %5102 = vadd.xlane.f32.xlu0 %v5101
  %v5103 = vpop.xlane.xlu0 %5102
  %v5104 = vsel %vm4854, %v4839, 0.0
  %5105 = vadd.xlane.f32.xlu0 %v5104
  %v5106 = vpop.xlane.xlu0 %5105
  %v5107 = vsel %vm4854, %v4840, 0.0
  %5108 = vadd.xlane.f32.xlu0 %v5107
  %v5109 = vpop.xlane.xlu0 %5108
  %v5110 = vsel %vm4854, %v4841, 0.0
  %5111 = vadd.xlane.f32.xlu0 %v5110
  %v5112 = vpop.xlane.xlu0 %5111
  %v5113 = vsel %vm4854, %v4842, 0.0
  %5114 = vadd.xlane.f32.xlu0 %v5113
  %v5115 = vpop.xlane.xlu0 %5114
  %v5116 = vsel %vm4854, %v4843, 0.0
  %5117 = vadd.xlane.f32.xlu0 %v5116
  %v5118 = vpop.xlane.xlu0 %5117
  %v5119 = vsel %vm4854, %v4844, 0.0
  %5120 = vadd.xlane.f32.xlu0 %v5119
  %v5121 = vpop.xlane.xlu0 %5120
  %v5122 = vsel %vm4854, %v4845, 0.0
  %5123 = vadd.xlane.f32.xlu0 %v5122
  %v5124 = vpop.xlane.xlu0 %5123
  %v5125 = vsel %vm4854, %v4846, 0.0
  %5126 = vadd.xlane.f32.xlu0 %v5125
  %v5127 = vpop.xlane.xlu0 %5126
  %v5128 = vsel %vm4854, %v4847, 0.0
  %5129 = vadd.xlane.f32.xlu0 %v5128
  %v5130 = vpop.xlane.xlu0 %5129
  %v5131 = vsel %vm4854, %v4848, 0.0
  %5132 = vadd.xlane.f32.xlu0 %v5131
  %v5133 = vpop.xlane.xlu0 %5132
  %v5134 = vsel %vm4854, %v4849, 0.0
  %5135 = vadd.xlane.f32.xlu0 %v5134
  %v5136 = vpop.xlane.xlu0 %5135
  %v5137 = vsel %vm4854, %v4850, 0.0
  %5138 = vadd.xlane.f32.xlu0 %v5137
  %v5139 = vpop.xlane.xlu0 %5138
  %v5140 = vsel %vm4854, %v4851, 0.0
  %5141 = vadd.xlane.f32.xlu0 %v5140
  %v5142 = vpop.xlane.xlu0 %5141
  %v5143 = vsel %vm4854, %v4852, 0.0
  %5144 = vadd.xlane.f32.xlu0 %v5143
  %v5145 = vpop.xlane.xlu0 %5144
  %v5146 = vsel %vm4854, %v4853, 0.0
  %5147 = vadd.xlane.f32.xlu0 %v5146
  %v5148 = vpop.xlane.xlu0 %5147
  %v5149 = vld [vmem:[%s2] sm:$0xff]
  %v5150 = vadd.f32 %v4857, %v5149
  %v5151 = vadd.f32 %v4860, %v5149
  %v5152 = vadd.f32 %v4863, %v5149
  %v5153 = vadd.f32 %v4866, %v5149
  %v5154 = vadd.f32 %v4869, %v5149
  %v5155 = vadd.f32 %v4872, %v5149
  %v5156 = vadd.f32 %v4875, %v5149
  %v5157 = vadd.f32 %v4878, %v5149
  %v5158 = vadd.f32 %v4881, %v5149
  %v5159 = vadd.f32 %v4884, %v5149
  %v5160 = vadd.f32 %v4887, %v5149
  %v5161 = vadd.f32 %v4890, %v5149
  %v5162 = vadd.f32 %v4893, %v5149
  %v5163 = vadd.f32 %v4896, %v5149
  %v5164 = vadd.f32 %v4899, %v5149
  %v5165 = vadd.f32 %v4902, %v5149
  %v5166 = vadd.f32 %v4905, %v5149
  %v5167 = vadd.f32 %v4908, %v5149
  %v5168 = vadd.f32 %v4911, %v5149
  %v5169 = vadd.f32 %v4914, %v5149
  %v5170 = vadd.f32 %v4917, %v5149
  %v5171 = vadd.f32 %v4920, %v5149
  %v5172 = vadd.f32 %v4923, %v5149
  %v5173 = vadd.f32 %v4926, %v5149
  %v5174 = vadd.f32 %v4929, %v5149
  %v5175 = vadd.f32 %v4932, %v5149
  %v5176 = vadd.f32 %v4935, %v5149
  %v5177 = vadd.f32 %v4938, %v5149
  %v5178 = vadd.f32 %v4941, %v5149
  %v5179 = vadd.f32 %v4944, %v5149
  %v5180 = vadd.f32 %v4947, %v5149
  %v5181 = vadd.f32 %v4950, %v5149
  %v5182 = vadd.f32 %v4953, %v5149
  %v5183 = vadd.f32 %v4956, %v5149
  %v5184 = vadd.f32 %v4959, %v5149
  %v5185 = vadd.f32 %v4962, %v5149
  %v5186 = vadd.f32 %v4965, %v5149
  %v5187 = vadd.f32 %v4968, %v5149
  %v5188 = vadd.f32 %v4971, %v5149
  %v5189 = vadd.f32 %v4974, %v5149
  %v5190 = vadd.f32 %v4977, %v5149
  %v5191 = vadd.f32 %v4980, %v5149
  %v5192 = vadd.f32 %v4983, %v5149
  %v5193 = vadd.f32 %v4986, %v5149
  %v5194 = vadd.f32 %v4989, %v5149
  %v5195 = vadd.f32 %v4992, %v5149
  %v5196 = vadd.f32 %v4995, %v5149
  %v5197 = vadd.f32 %v4998, %v5149
  %v5198 = vadd.f32 %v5001, %v5149
  %v5199 = vadd.f32 %v5004, %v5149
  %v5200 = vadd.f32 %v5007, %v5149
  %v5201 = vadd.f32 %v5010, %v5149
  %v5202 = vadd.f32 %v5013, %v5149
  %v5203 = vadd.f32 %v5016, %v5149
  %v5204 = vadd.f32 %v5019, %v5149
  %v5205 = vadd.f32 %v5022, %v5149
  %v5206 = vadd.f32 %v5025, %v5149
  %v5207 = vadd.f32 %v5028, %v5149
  %v5208 = vadd.f32 %v5031, %v5149
  %v5209 = vadd.f32 %v5034, %v5149
  %v5210 = vadd.f32 %v5037, %v5149
  %v5211 = vadd.f32 %v5040, %v5149
  %v5212 = vadd.f32 %v5043, %v5149
  %v5213 = vadd.f32 %v5046, %v5149
  %v5214 = vadd.f32 %v5049, %v5149
  %v5215 = vadd.f32 %v5052, %v5149
  %v5216 = vadd.f32 %v5055, %v5149
  %v5217 = vadd.f32 %v5058, %v5149
  %v5218 = vadd.f32 %v5061, %v5149
  %v5219 = vadd.f32 %v5064, %v5149
  %v5220 = vadd.f32 %v5067, %v5149
  %v5221 = vadd.f32 %v5070, %v5149
  %v5222 = vadd.f32 %v5073, %v5149
  %v5223 = vadd.f32 %v5076, %v5149
  %v5224 = vadd.f32 %v5079, %v5149
  %v5225 = vadd.f32 %v5082, %v5149
  %v5226 = vadd.f32 %v5085, %v5149
  %v5227 = vadd.f32 %v5088, %v5149
  %v5228 = vadd.f32 %v5091, %v5149
  %v5229 = vadd.f32 %v5094, %v5149
  %v5230 = vadd.f32 %v5097, %v5149
  %v5231 = vadd.f32 %v5100, %v5149
  %v5232 = vadd.f32 %v5103, %v5149
  %v5233 = vadd.f32 %v5106, %v5149
  %v5234 = vadd.f32 %v5109, %v5149
  %v5235 = vadd.f32 %v5112, %v5149
  %v5236 = vadd.f32 %v5115, %v5149
  %v5237 = vadd.f32 %v5118, %v5149
  %v5238 = vadd.f32 %v5121, %v5149
  %v5239 = vadd.f32 %v5124, %v5149
  %v5240 = vadd.f32 %v5127, %v5149
  %v5241 = vadd.f32 %v5130, %v5149
  %v5242 = vadd.f32 %v5133, %v5149
  %v5243 = vadd.f32 %v5136, %v5149
  %v5244 = vadd.f32 %v5139, %v5149
  %v5245 = vadd.f32 %v5142, %v5149
  %v5246 = vadd.f32 %v5145, %v5149
  %v5247 = vadd.f32 %v5148, %v5149
  %v5248 = vmul.f32 %v5150, 0.2
  %v5249 = vmul.f32 %v5151, 0.2
  %v5250 = vmul.f32 %v5152, 0.2
  %v5251 = vmul.f32 %v5153, 0.2
  %v5252 = vmul.f32 %v5154, 0.2
  %v5253 = vmul.f32 %v5155, 0.2
  %v5254 = vmul.f32 %v5156, 0.2
  %v5255 = vmul.f32 %v5157, 0.2
  %v5256 = vmul.f32 %v5158, 0.2
  %v5257 = vmul.f32 %v5159, 0.2
  %v5258 = vmul.f32 %v5160, 0.2
  %v5259 = vmul.f32 %v5161, 0.2
  %v5260 = vmul.f32 %v5162, 0.2
  %v5261 = vmul.f32 %v5163, 0.2
  %v5262 = vmul.f32 %v5164, 0.2
  %v5263 = vmul.f32 %v5165, 0.2
  %v5264 = vmul.f32 %v5166, 0.2
  %v5265 = vmul.f32 %v5167, 0.2
  %v5266 = vmul.f32 %v5168, 0.2
  %v5267 = vmul.f32 %v5169, 0.2
  %v5268 = vmul.f32 %v5170, 0.2
  %v5269 = vmul.f32 %v5171, 0.2
  %v5270 = vmul.f32 %v5172, 0.2
  %v5271 = vmul.f32 %v5173, 0.2
  %v5272 = vmul.f32 %v5174, 0.2
  %v5273 = vmul.f32 %v5175, 0.2
  %v5274 = vmul.f32 %v5176, 0.2
  %v5275 = vmul.f32 %v5177, 0.2
  %v5276 = vmul.f32 %v5178, 0.2
  %v5277 = vmul.f32 %v5179, 0.2
  %v5278 = vmul.f32 %v5180, 0.2
  %v5279 = vmul.f32 %v5181, 0.2
  %v5280 = vmul.f32 %v5182, 0.2
  %v5281 = vmul.f32 %v5183, 0.2
  %v5282 = vmul.f32 %v5184, 0.2
  %v5283 = vmul.f32 %v5185, 0.2
  %v5284 = vmul.f32 %v5186, 0.2
  %v5285 = vmul.f32 %v5187, 0.2
  %v5286 = vmul.f32 %v5188, 0.2
  %v5287 = vmul.f32 %v5189, 0.2
  %v5288 = vmul.f32 %v5190, 0.2
  %v5289 = vmul.f32 %v5191, 0.2
  %v5290 = vmul.f32 %v5192, 0.2
  %v5291 = vmul.f32 %v5193, 0.2
  %v5292 = vmul.f32 %v5194, 0.2
  %v5293 = vmul.f32 %v5195, 0.2
  %v5294 = vmul.f32 %v5196, 0.2
  %v5295 = vmul.f32 %v5197, 0.2
  %v5296 = vmul.f32 %v5198, 0.2
  %v5297 = vmul.f32 %v5199, 0.2
  %v5298 = vmul.f32 %v5200, 0.2
  %v5299 = vmul.f32 %v5201, 0.2
  %v5300 = vmul.f32 %v5202, 0.2
  %v5301 = vmul.f32 %v5203, 0.2
  %v5302 = vmul.f32 %v5204, 0.2
  %v5303 = vmul.f32 %v5205, 0.2
  %v5304 = vmul.f32 %v5206, 0.2
  %v5305 = vmul.f32 %v5207, 0.2
  %v5306 = vmul.f32 %v5208, 0.2
  %v5307 = vmul.f32 %v5209, 0.2
  %v5308 = vmul.f32 %v5210, 0.2
  %v5309 = vmul.f32 %v5211, 0.2
  %v5310 = vmul.f32 %v5212, 0.2
  %v5311 = vmul.f32 %v5213, 0.2
  %v5312 = vmul.f32 %v5214, 0.2
  %v5313 = vmul.f32 %v5215, 0.2
  %v5314 = vmul.f32 %v5216, 0.2
  %v5315 = vmul.f32 %v5217, 0.2
  %v5316 = vmul.f32 %v5218, 0.2
  %v5317 = vmul.f32 %v5219, 0.2
  %v5318 = vmul.f32 %v5220, 0.2
  %v5319 = vmul.f32 %v5221, 0.2
  %v5320 = vmul.f32 %v5222, 0.2
  %v5321 = vmul.f32 %v5223, 0.2
  %v5322 = vmul.f32 %v5224, 0.2
  %v5323 = vmul.f32 %v5225, 0.2
  %v5324 = vmul.f32 %v5226, 0.2
  %v5325 = vmul.f32 %v5227, 0.2
  %v5326 = vmul.f32 %v5228, 0.2
  %v5327 = vmul.f32 %v5229, 0.2
  %v5328 = vmul.f32 %v5230, 0.2
  %v5329 = vmul.f32 %v5231, 0.2
  %v5330 = vmul.f32 %v5232, 0.2
  %v5331 = vmul.f32 %v5233, 0.2
  %v5332 = vmul.f32 %v5234, 0.2
  %v5333 = vmul.f32 %v5235, 0.2
  %v5334 = vmul.f32 %v5236, 0.2
  %v5335 = vmul.f32 %v5237, 0.2
  %v5336 = vmul.f32 %v5238, 0.2
  %v5337 = vmul.f32 %v5239, 0.2
  %v5338 = vmul.f32 %v5240, 0.2
  %v5339 = vmul.f32 %v5241, 0.2
  %v5340 = vmul.f32 %v5242, 0.2
  %v5341 = vmul.f32 %v5243, 0.2
  %v5342 = vmul.f32 %v5244, 0.2
  %v5343 = vmul.f32 %v5245, 0.2
  %v5344 = vmul.f32 %v5246, 0.2
  %v5345 = vmul.f32 %v5247, 0.2
  %v5346 = vmax.f32 %v5150, %v5248
  %v5347 = vmax.f32 %v5151, %v5249
  %v5348 = vmax.f32 %v5152, %v5250
  %v5349 = vmax.f32 %v5153, %v5251
  %v5350 = vmax.f32 %v5154, %v5252
  %v5351 = vmax.f32 %v5155, %v5253
  %v5352 = vmax.f32 %v5156, %v5254
  %v5353 = vmax.f32 %v5157, %v5255
  %v5354 = vmax.f32 %v5158, %v5256
  %v5355 = vmax.f32 %v5159, %v5257
  %v5356 = vmax.f32 %v5160, %v5258
  %v5357 = vmax.f32 %v5161, %v5259
  %v5358 = vmax.f32 %v5162, %v5260
  %v5359 = vmax.f32 %v5163, %v5261
  %v5360 = vmax.f32 %v5164, %v5262
  %v5361 = vmax.f32 %v5165, %v5263
  %v5362 = vmax.f32 %v5166, %v5264
  %v5363 = vmax.f32 %v5167, %v5265
  %v5364 = vmax.f32 %v5168, %v5266
  %v5365 = vmax.f32 %v5169, %v5267
  %v5366 = vmax.f32 %v5170, %v5268
  %v5367 = vmax.f32 %v5171, %v5269
  %v5368 = vmax.f32 %v5172, %v5270
  %v5369 = vmax.f32 %v5173, %v5271
  %v5370 = vmax.f32 %v5174, %v5272
  %v5371 = vmax.f32 %v5175, %v5273
  %v5372 = vmax.f32 %v5176, %v5274
  %v5373 = vmax.f32 %v5177, %v5275
  %v5374 = vmax.f32 %v5178, %v5276
  %v5375 = vmax.f32 %v5179, %v5277
  %v5376 = vmax.f32 %v5180, %v5278
  %v5377 = vmax.f32 %v5181, %v5279
  %v5378 = vmax.f32 %v5182, %v5280
  %v5379 = vmax.f32 %v5183, %v5281
  %v5380 = vmax.f32 %v5184, %v5282
  %v5381 = vmax.f32 %v5185, %v5283
  %v5382 = vmax.f32 %v5186, %v5284
  %v5383 = vmax.f32 %v5187, %v5285
  %v5384 = vmax.f32 %v5188, %v5286
  %v5385 = vmax.f32 %v5189, %v5287
  %v5386 = vmax.f32 %v5190, %v5288
  %v5387 = vmax.f32 %v5191, %v5289
  %v5388 = vmax.f32 %v5192, %v5290
  %v5389 = vmax.f32 %v5193, %v5291
  %v5390 = vmax.f32 %v5194, %v5292
  %v5391 = vmax.f32 %v5195, %v5293
  %v5392 = vmax.f32 %v5196, %v5294
  %v5393 = vmax.f32 %v5197, %v5295
  %v5394 = vmax.f32 %v5198, %v5296
  %v5395 = vmax.f32 %v5199, %v5297
  %v5396 = vmax.f32 %v5200, %v5298
  %v5397 = vmax.f32 %v5201, %v5299
  %v5398 = vmax.f32 %v5202, %v5300
  %v5399 = vmax.f32 %v5203, %v5301
  %v5400 = vmax.f32 %v5204, %v5302
  %v5401 = vmax.f32 %v5205, %v5303
  %v5402 = vmax.f32 %v5206, %v5304
  %v5403 = vmax.f32 %v5207, %v5305
  %v5404 = vmax.f32 %v5208, %v5306
  %v5405 = vmax.f32 %v5209, %v5307
  %v5406 = vmax.f32 %v5210, %v5308
  %v5407 = vmax.f32 %v5211, %v5309
  %v5408 = vmax.f32 %v5212, %v5310
  %v5409 = vmax.f32 %v5213, %v5311
  %v5410 = vmax.f32 %v5214, %v5312
  %v5411 = vmax.f32 %v5215, %v5313
  %v5412 = vmax.f32 %v5216, %v5314
  %v5413 = vmax.f32 %v5217, %v5315
  %v5414 = vmax.f32 %v5218, %v5316
  %v5415 = vmax.f32 %v5219, %v5317
  %v5416 = vmax.f32 %v5220, %v5318
  %v5417 = vmax.f32 %v5221, %v5319
  %v5418 = vmax.f32 %v5222, %v5320
  %v5419 = vmax.f32 %v5223, %v5321
  %v5420 = vmax.f32 %v5224, %v5322
  %v5421 = vmax.f32 %v5225, %v5323
  %v5422 = vmax.f32 %v5226, %v5324
  %v5423 = vmax.f32 %v5227, %v5325
  %v5424 = vmax.f32 %v5228, %v5326
  %v5425 = vmax.f32 %v5229, %v5327
  %v5426 = vmax.f32 %v5230, %v5328
  %v5427 = vmax.f32 %v5231, %v5329
  %v5428 = vmax.f32 %v5232, %v5330
  %v5429 = vmax.f32 %v5233, %v5331
  %v5430 = vmax.f32 %v5234, %v5332
  %v5431 = vmax.f32 %v5235, %v5333
  %v5432 = vmax.f32 %v5236, %v5334
  %v5433 = vmax.f32 %v5237, %v5335
  %v5434 = vmax.f32 %v5238, %v5336
  %v5435 = vmax.f32 %v5239, %v5337
  %v5436 = vmax.f32 %v5240, %v5338
  %v5437 = vmax.f32 %v5241, %v5339
  %v5438 = vmax.f32 %v5242, %v5340
  %v5439 = vmax.f32 %v5243, %v5341
  %v5440 = vmax.f32 %v5244, %v5342
  %v5441 = vmax.f32 %v5245, %v5343
  %v5442 = vmax.f32 %v5246, %v5344
  %v5443 = vmax.f32 %v5247, %v5345
  %v5444 = vld [vmem:[%s3] sm:$0xff]
  %v5445 = vld [vmem:[%s3 + $0x8] sm:$0xff]
  %v5446 = vld [vmem:[%s3 + $0x10] sm:$0xff]
  %v5447 = vld [vmem:[%s3 + $0x18] sm:$0xff]
  %v5448 = vld [vmem:[%s3 + $0x20] sm:$0xff]
  %v5449 = vld [vmem:[%s3 + $0x28] sm:$0xff]
  %v5450 = vld [vmem:[%s3 + $0x30] sm:$0xff]
  %v5451 = vld [vmem:[%s3 + $0x38] sm:$0xff]
  %v5452 = vld [vmem:[%s3 + $0x40] sm:$0xff]
  %5454 = vset.pattern.permute.xlu0 0
  %5455 = vperm.xlu0 %5454, %v5346
  %v5456 = vpop.permute.xlu0 %5455
  %5459 = vset.pattern.permute.xlu0 0
  %5460 = vperm.xlu0 %5459, %v5348
  %v5461 = vpop.permute.xlu0 %5460
  %5464 = vset.pattern.permute.xlu0 0
  %5465 = vperm.xlu0 %5464, %v5350
  %v5466 = vpop.permute.xlu0 %5465
  %5469 = vset.pattern.permute.xlu0 0
  %5470 = vperm.xlu0 %5469, %v5360
  %v5471 = vpop.permute.xlu0 %5470
  %5474 = vset.pattern.permute.xlu0 0
  %5475 = vperm.xlu0 %5474, %v5362
  %v5476 = vpop.permute.xlu0 %5475
  %5479 = vset.pattern.permute.xlu0 0
  %5480 = vperm.xlu0 %5479, %v5364
  %v5481 = vpop.permute.xlu0 %5480
  %5484 = vset.pattern.permute.xlu0 0
  %5485 = vperm.xlu0 %5484, %v5374
  %v5486 = vpop.permute.xlu0 %5485
  %5489 = vset.pattern.permute.xlu0 0
  %5490 = vperm.xlu0 %5489, %v5376
  %v5491 = vpop.permute.xlu0 %5490
  %5494 = vset.pattern.permute.xlu0 0
  %5495 = vperm.xlu0 %5494, %v5378
  %v5496 = vpop.permute.xlu0 %5495
  %5499 = vset.pattern.permute.xlu0 0
  %5500 = vperm.xlu0 %5499, %v5395
  %v5501 = vpop.permute.xlu0 %5500
  %5504 = vset.pattern.permute.xlu0 0
  %5505 = vperm.xlu0 %5504, %v5397
  %v5506 = vpop.permute.xlu0 %5505
  %5509 = vset.pattern.permute.xlu0 0
  %5510 = vperm.xlu0 %5509, %v5399
  %v5511 = vpop.permute.xlu0 %5510
  %5514 = vset.pattern.permute.xlu0 0
  %5515 = vperm.xlu0 %5514, %v5409
  %v5516 = vpop.permute.xlu0 %5515
  %5519 = vset.pattern.permute.xlu0 0
  %5520 = vperm.xlu0 %5519, %v5411
  %v5521 = vpop.permute.xlu0 %5520
  %5524 = vset.pattern.permute.xlu0 0
  %5525 = vperm.xlu0 %5524, %v5413
  %v5526 = vpop.permute.xlu0 %5525
  %5529 = vset.pattern.permute.xlu0 0
  %5530 = vperm.xlu0 %5529, %v5423
  %v5531 = vpop.permute.xlu0 %5530
  %5534 = vset.pattern.permute.xlu0 0
  %5535 = vperm.xlu0 %5534, %v5425
  %v5536 = vpop.permute.xlu0 %5535
  %5539 = vset.pattern.permute.xlu0 0
  %5540 = vperm.xlu0 %5539, %v5427
  %v5541 = vpop.permute.xlu0 %5540
  %v5543 = vmul.f32 %v5456, %v5444
  %v5544 = vmul.f32 %v5461, %v5444
  %v5545 = vmul.f32 %v5466, %v5444
  %v5546 = vmul.f32 %v5471, %v5444
  %v5547 = vmul.f32 %v5476, %v5444
  %v5548 = vmul.f32 %v5481, %v5444
  %v5549 = vmul.f32 %v5486, %v5444
  %v5550 = vmul.f32 %v5491, %v5444
  %v5551 = vmul.f32 %v5496, %v5444
  %v5552 = vmul.f32 %v5501, %v5444
  %v5553 = vmul.f32 %v5506, %v5444
  %v5554 = vmul.f32 %v5511, %v5444
  %v5555 = vmul.f32 %v5516, %v5444
  %v5556 = vmul.f32 %v5521, %v5444
  %v5557 = vmul.f32 %v5526, %v5444
  %v5558 = vmul.f32 %v5531, %v5444
  %v5559 = vmul.f32 %v5536, %v5444
  %v5560 = vmul.f32 %v5541, %v5444
  %5562 = vset.pattern.permute.xlu0 0
  %5563 = vperm.xlu0 %5562, %v5347
  %v5564 = vpop.permute.xlu0 %5563
  %5567 = vset.pattern.permute.xlu0 0
  %5568 = vperm.xlu0 %5567, %v5349
  %v5569 = vpop.permute.xlu0 %5568
  %5572 = vset.pattern.permute.xlu0 0
  %5573 = vperm.xlu0 %5572, %v5351
  %v5574 = vpop.permute.xlu0 %5573
  %5577 = vset.pattern.permute.xlu0 0
  %5578 = vperm.xlu0 %5577, %v5361
  %v5579 = vpop.permute.xlu0 %5578
  %5582 = vset.pattern.permute.xlu0 0
  %5583 = vperm.xlu0 %5582, %v5363
  %v5584 = vpop.permute.xlu0 %5583
  %5587 = vset.pattern.permute.xlu0 0
  %5588 = vperm.xlu0 %5587, %v5365
  %v5589 = vpop.permute.xlu0 %5588
  %5592 = vset.pattern.permute.xlu0 0
  %5593 = vperm.xlu0 %5592, %v5375
  %v5594 = vpop.permute.xlu0 %5593
  %5597 = vset.pattern.permute.xlu0 0
  %5598 = vperm.xlu0 %5597, %v5377
  %v5599 = vpop.permute.xlu0 %5598
  %5602 = vset.pattern.permute.xlu0 0
  %5603 = vperm.xlu0 %5602, %v5379
  %v5604 = vpop.permute.xlu0 %5603
  %5607 = vset.pattern.permute.xlu0 0
  %5608 = vperm.xlu0 %5607, %v5396
  %v5609 = vpop.permute.xlu0 %5608
  %5612 = vset.pattern.permute.xlu0 0
  %5613 = vperm.xlu0 %5612, %v5398
  %v5614 = vpop.permute.xlu0 %5613
  %5617 = vset.pattern.permute.xlu0 0
  %5618 = vperm.xlu0 %5617, %v5400
  %v5619 = vpop.permute.xlu0 %5618
  %5622 = vset.pattern.permute.xlu0 0
  %5623 = vperm.xlu0 %5622, %v5410
  %v5624 = vpop.permute.xlu0 %5623
  %5627 = vset.pattern.permute.xlu0 0
  %5628 = vperm.xlu0 %5627, %v5412
  %v5629 = vpop.permute.xlu0 %5628
  %5632 = vset.pattern.permute.xlu0 0
  %5633 = vperm.xlu0 %5632, %v5414
  %v5634 = vpop.permute.xlu0 %5633
  %5637 = vset.pattern.permute.xlu0 0
  %5638 = vperm.xlu0 %5637, %v5424
  %v5639 = vpop.permute.xlu0 %5638
  %5642 = vset.pattern.permute.xlu0 0
  %5643 = vperm.xlu0 %5642, %v5426
  %v5644 = vpop.permute.xlu0 %5643
  %5647 = vset.pattern.permute.xlu0 0
  %5648 = vperm.xlu0 %5647, %v5428
  %v5649 = vpop.permute.xlu0 %5648
  %v5651 = vmul.f32 %v5564, %v5445
  %v5652 = vmul.f32 %v5569, %v5445
  %v5653 = vmul.f32 %v5574, %v5445
  %v5654 = vmul.f32 %v5579, %v5445
  %v5655 = vmul.f32 %v5584, %v5445
  %v5656 = vmul.f32 %v5589, %v5445
  %v5657 = vmul.f32 %v5594, %v5445
  %v5658 = vmul.f32 %v5599, %v5445
  %v5659 = vmul.f32 %v5604, %v5445
  %v5660 = vmul.f32 %v5609, %v5445
  %v5661 = vmul.f32 %v5614, %v5445
  %v5662 = vmul.f32 %v5619, %v5445
  %v5663 = vmul.f32 %v5624, %v5445
  %v5664 = vmul.f32 %v5629, %v5445
  %v5665 = vmul.f32 %v5634, %v5445
  %v5666 = vmul.f32 %v5639, %v5445
  %v5667 = vmul.f32 %v5644, %v5445
  %v5668 = vmul.f32 %v5649, %v5445
  %v5669 = vadd.f32 %v5543, %v5651
  %v5670 = vadd.f32 %v5544, %v5652
  %v5671 = vadd.f32 %v5545, %v5653
  %v5672 = vadd.f32 %v5546, %v5654
  %v5673 = vadd.f32 %v5547, %v5655
  %v5674 = vadd.f32 %v5548, %v5656
  %v5675 = vadd.f32 %v5549, %v5657
  %v5676 = vadd.f32 %v5550, %v5658
  %v5677 = vadd.f32 %v5551, %v5659
  %v5678 = vadd.f32 %v5552, %v5660
  %v5679 = vadd.f32 %v5553, %v5661
  %v5680 = vadd.f32 %v5554, %v5662
  %v5681 = vadd.f32 %v5555, %v5663
  %v5682 = vadd.f32 %v5556, %v5664
  %v5683 = vadd.f32 %v5557, %v5665
  %v5684 = vadd.f32 %v5558, %v5666
  %v5685 = vadd.f32 %v5559, %v5667
  %v5686 = vadd.f32 %v5560, %v5668
  %5688 = vset.pattern.permute.xlu0 0
  %5689 = vperm.xlu0 %5688, %v5352
  %v5690 = vpop.permute.xlu0 %5689
  %5693 = vset.pattern.permute.xlu0 0
  %5694 = vperm.xlu0 %5693, %v5366
  %v5695 = vpop.permute.xlu0 %5694
  %5698 = vset.pattern.permute.xlu0 0
  %5699 = vperm.xlu0 %5698, %v5380
  %v5700 = vpop.permute.xlu0 %5699
  %5703 = vset.pattern.permute.xlu0 0
  %5704 = vperm.xlu0 %5703, %v5401
  %v5705 = vpop.permute.xlu0 %5704
  %5708 = vset.pattern.permute.xlu0 0
  %5709 = vperm.xlu0 %5708, %v5415
  %v5710 = vpop.permute.xlu0 %5709
  %5713 = vset.pattern.permute.xlu0 0
  %5714 = vperm.xlu0 %5713, %v5429
  %v5715 = vpop.permute.xlu0 %5714
  %v5717 = vmul.f32 %v5461, %v5446
  %v5718 = vmul.f32 %v5466, %v5446
  %v5719 = vmul.f32 %v5690, %v5446
  %v5720 = vmul.f32 %v5476, %v5446
  %v5721 = vmul.f32 %v5481, %v5446
  %v5722 = vmul.f32 %v5695, %v5446
  %v5723 = vmul.f32 %v5491, %v5446
  %v5724 = vmul.f32 %v5496, %v5446
  %v5725 = vmul.f32 %v5700, %v5446
  %v5726 = vmul.f32 %v5506, %v5446
  %v5727 = vmul.f32 %v5511, %v5446
  %v5728 = vmul.f32 %v5705, %v5446
  %v5729 = vmul.f32 %v5521, %v5446
  %v5730 = vmul.f32 %v5526, %v5446
  %v5731 = vmul.f32 %v5710, %v5446
  %v5732 = vmul.f32 %v5536, %v5446
  %v5733 = vmul.f32 %v5541, %v5446
  %v5734 = vmul.f32 %v5715, %v5446
  %v5735 = vadd.f32 %v5669, %v5717
  %v5736 = vadd.f32 %v5670, %v5718
  %v5737 = vadd.f32 %v5671, %v5719
  %v5738 = vadd.f32 %v5672, %v5720
  %v5739 = vadd.f32 %v5673, %v5721
  %v5740 = vadd.f32 %v5674, %v5722
  %v5741 = vadd.f32 %v5675, %v5723
  %v5742 = vadd.f32 %v5676, %v5724
  %v5743 = vadd.f32 %v5677, %v5725
  %v5744 = vadd.f32 %v5678, %v5726
  %v5745 = vadd.f32 %v5679, %v5727
  %v5746 = vadd.f32 %v5680, %v5728
  %v5747 = vadd.f32 %v5681, %v5729
  %v5748 = vadd.f32 %v5682, %v5730
  %v5749 = vadd.f32 %v5683, %v5731
  %v5750 = vadd.f32 %v5684, %v5732
  %v5751 = vadd.f32 %v5685, %v5733
  %v5752 = vadd.f32 %v5686, %v5734
  %5754 = vset.pattern.permute.xlu0 0
  %5755 = vperm.xlu0 %5754, %v5353
  %v5756 = vpop.permute.xlu0 %5755
  %5759 = vset.pattern.permute.xlu0 0
  %5760 = vperm.xlu0 %5759, %v5355
  %v5761 = vpop.permute.xlu0 %5760
  %5764 = vset.pattern.permute.xlu0 0
  %5765 = vperm.xlu0 %5764, %v5357
  %v5766 = vpop.permute.xlu0 %5765
  %5769 = vset.pattern.permute.xlu0 0
  %5770 = vperm.xlu0 %5769, %v5367
  %v5771 = vpop.permute.xlu0 %5770
  %5774 = vset.pattern.permute.xlu0 0
  %5775 = vperm.xlu0 %5774, %v5369
  %v5776 = vpop.permute.xlu0 %5775
  %5779 = vset.pattern.permute.xlu0 0
  %5780 = vperm.xlu0 %5779, %v5371
  %v5781 = vpop.permute.xlu0 %5780
  %5784 = vset.pattern.permute.xlu0 0
  %5785 = vperm.xlu0 %5784, %v5381
  %v5786 = vpop.permute.xlu0 %5785
  %5789 = vset.pattern.permute.xlu0 0
  %5790 = vperm.xlu0 %5789, %v5383
  %v5791 = vpop.permute.xlu0 %5790
  %5794 = vset.pattern.permute.xlu0 0
  %5795 = vperm.xlu0 %5794, %v5385
  %v5796 = vpop.permute.xlu0 %5795
  %5799 = vset.pattern.permute.xlu0 0
  %5800 = vperm.xlu0 %5799, %v5402
  %v5801 = vpop.permute.xlu0 %5800
  %5804 = vset.pattern.permute.xlu0 0
  %5805 = vperm.xlu0 %5804, %v5404
  %v5806 = vpop.permute.xlu0 %5805
  %5809 = vset.pattern.permute.xlu0 0
  %5810 = vperm.xlu0 %5809, %v5406
  %v5811 = vpop.permute.xlu0 %5810
  %5814 = vset.pattern.permute.xlu0 0
  %5815 = vperm.xlu0 %5814, %v5416
  %v5816 = vpop.permute.xlu0 %5815
  %5819 = vset.pattern.permute.xlu0 0
  %5820 = vperm.xlu0 %5819, %v5418
  %v5821 = vpop.permute.xlu0 %5820
  %5824 = vset.pattern.permute.xlu0 0
  %5825 = vperm.xlu0 %5824, %v5420
  %v5826 = vpop.permute.xlu0 %5825
  %5829 = vset.pattern.permute.xlu0 0
  %5830 = vperm.xlu0 %5829, %v5430
  %v5831 = vpop.permute.xlu0 %5830
  %5834 = vset.pattern.permute.xlu0 0
  %5835 = vperm.xlu0 %5834, %v5432
  %v5836 = vpop.permute.xlu0 %5835
  %5839 = vset.pattern.permute.xlu0 0
  %5840 = vperm.xlu0 %5839, %v5434
  %v5841 = vpop.permute.xlu0 %5840
  %v5843 = vmul.f32 %v5756, %v5447
  %v5844 = vmul.f32 %v5761, %v5447
  %v5845 = vmul.f32 %v5766, %v5447
  %v5846 = vmul.f32 %v5771, %v5447
  %v5847 = vmul.f32 %v5776, %v5447
  %v5848 = vmul.f32 %v5781, %v5447
  %v5849 = vmul.f32 %v5786, %v5447
  %v5850 = vmul.f32 %v5791, %v5447
  %v5851 = vmul.f32 %v5796, %v5447
  %v5852 = vmul.f32 %v5801, %v5447
  %v5853 = vmul.f32 %v5806, %v5447
  %v5854 = vmul.f32 %v5811, %v5447
  %v5855 = vmul.f32 %v5816, %v5447
  %v5856 = vmul.f32 %v5821, %v5447
  %v5857 = vmul.f32 %v5826, %v5447
  %v5858 = vmul.f32 %v5831, %v5447
  %v5859 = vmul.f32 %v5836, %v5447
  %v5860 = vmul.f32 %v5841, %v5447
  %v5861 = vadd.f32 %v5735, %v5843
  %v5862 = vadd.f32 %v5736, %v5844
  %v5863 = vadd.f32 %v5737, %v5845
  %v5864 = vadd.f32 %v5738, %v5846
  %v5865 = vadd.f32 %v5739, %v5847
  %v5866 = vadd.f32 %v5740, %v5848
  %v5867 = vadd.f32 %v5741, %v5849
  %v5868 = vadd.f32 %v5742, %v5850
  %v5869 = vadd.f32 %v5743, %v5851
  %v5870 = vadd.f32 %v5744, %v5852
  %v5871 = vadd.f32 %v5745, %v5853
  %v5872 = vadd.f32 %v5746, %v5854
  %v5873 = vadd.f32 %v5747, %v5855
  %v5874 = vadd.f32 %v5748, %v5856
  %v5875 = vadd.f32 %v5749, %v5857
  %v5876 = vadd.f32 %v5750, %v5858
  %v5877 = vadd.f32 %v5751, %v5859
  %v5878 = vadd.f32 %v5752, %v5860
  %5880 = vset.pattern.permute.xlu0 0
  %5881 = vperm.xlu0 %5880, %v5354
  %v5882 = vpop.permute.xlu0 %5881
  %5885 = vset.pattern.permute.xlu0 0
  %5886 = vperm.xlu0 %5885, %v5356
  %v5887 = vpop.permute.xlu0 %5886
  %5890 = vset.pattern.permute.xlu0 0
  %5891 = vperm.xlu0 %5890, %v5358
  %v5892 = vpop.permute.xlu0 %5891
  %5895 = vset.pattern.permute.xlu0 0
  %5896 = vperm.xlu0 %5895, %v5368
  %v5897 = vpop.permute.xlu0 %5896
  %5900 = vset.pattern.permute.xlu0 0
  %5901 = vperm.xlu0 %5900, %v5370
  %v5902 = vpop.permute.xlu0 %5901
  %5905 = vset.pattern.permute.xlu0 0
  %5906 = vperm.xlu0 %5905, %v5372
  %v5907 = vpop.permute.xlu0 %5906
  %5910 = vset.pattern.permute.xlu0 0
  %5911 = vperm.xlu0 %5910, %v5382
  %v5912 = vpop.permute.xlu0 %5911
  %5915 = vset.pattern.permute.xlu0 0
  %5916 = vperm.xlu0 %5915, %v5384
  %v5917 = vpop.permute.xlu0 %5916
  %5920 = vset.pattern.permute.xlu0 0
  %5921 = vperm.xlu0 %5920, %v5386
  %v5922 = vpop.permute.xlu0 %5921
  %5925 = vset.pattern.permute.xlu0 0
  %5926 = vperm.xlu0 %5925, %v5403
  %v5927 = vpop.permute.xlu0 %5926
  %5930 = vset.pattern.permute.xlu0 0
  %5931 = vperm.xlu0 %5930, %v5405
  %v5932 = vpop.permute.xlu0 %5931
  %5935 = vset.pattern.permute.xlu0 0
  %5936 = vperm.xlu0 %5935, %v5407
  %v5937 = vpop.permute.xlu0 %5936
  %5940 = vset.pattern.permute.xlu0 0
  %5941 = vperm.xlu0 %5940, %v5417
  %v5942 = vpop.permute.xlu0 %5941
  %5945 = vset.pattern.permute.xlu0 0
  %5946 = vperm.xlu0 %5945, %v5419
  %v5947 = vpop.permute.xlu0 %5946
  %5950 = vset.pattern.permute.xlu0 0
  %5951 = vperm.xlu0 %5950, %v5421
  %v5952 = vpop.permute.xlu0 %5951
  %5955 = vset.pattern.permute.xlu0 0
  %5956 = vperm.xlu0 %5955, %v5431
  %v5957 = vpop.permute.xlu0 %5956
  %5960 = vset.pattern.permute.xlu0 0
  %5961 = vperm.xlu0 %5960, %v5433
  %v5962 = vpop.permute.xlu0 %5961
  %5965 = vset.pattern.permute.xlu0 0
  %5966 = vperm.xlu0 %5965, %v5435
  %v5967 = vpop.permute.xlu0 %5966
  %v5969 = vmul.f32 %v5882, %v5448
  %v5970 = vmul.f32 %v5887, %v5448
  %v5971 = vmul.f32 %v5892, %v5448
  %v5972 = vmul.f32 %v5897, %v5448
  %v5973 = vmul.f32 %v5902, %v5448
  %v5974 = vmul.f32 %v5907, %v5448
  %v5975 = vmul.f32 %v5912, %v5448
  %v5976 = vmul.f32 %v5917, %v5448
  %v5977 = vmul.f32 %v5922, %v5448
  %v5978 = vmul.f32 %v5927, %v5448
  %v5979 = vmul.f32 %v5932, %v5448
  %v5980 = vmul.f32 %v5937, %v5448
  %v5981 = vmul.f32 %v5942, %v5448
  %v5982 = vmul.f32 %v5947, %v5448
  %v5983 = vmul.f32 %v5952, %v5448
  %v5984 = vmul.f32 %v5957, %v5448
  %v5985 = vmul.f32 %v5962, %v5448
  %v5986 = vmul.f32 %v5967, %v5448
  %v5987 = vadd.f32 %v5861, %v5969
  %v5988 = vadd.f32 %v5862, %v5970
  %v5989 = vadd.f32 %v5863, %v5971
  %v5990 = vadd.f32 %v5864, %v5972
  %v5991 = vadd.f32 %v5865, %v5973
  %v5992 = vadd.f32 %v5866, %v5974
  %v5993 = vadd.f32 %v5867, %v5975
  %v5994 = vadd.f32 %v5868, %v5976
  %v5995 = vadd.f32 %v5869, %v5977
  %v5996 = vadd.f32 %v5870, %v5978
  %v5997 = vadd.f32 %v5871, %v5979
  %v5998 = vadd.f32 %v5872, %v5980
  %v5999 = vadd.f32 %v5873, %v5981
  %v6000 = vadd.f32 %v5874, %v5982
  %v6001 = vadd.f32 %v5875, %v5983
  %v6002 = vadd.f32 %v5876, %v5984
  %v6003 = vadd.f32 %v5877, %v5985
  %v6004 = vadd.f32 %v5878, %v5986
  %6006 = vset.pattern.permute.xlu0 0
  %6007 = vperm.xlu0 %6006, %v5359
  %v6008 = vpop.permute.xlu0 %6007
  %6011 = vset.pattern.permute.xlu0 0
  %6012 = vperm.xlu0 %6011, %v5373
  %v6013 = vpop.permute.xlu0 %6012
  %6016 = vset.pattern.permute.xlu0 0
  %6017 = vperm.xlu0 %6016, %v5387
  %v6018 = vpop.permute.xlu0 %6017
  %6021 = vset.pattern.permute.xlu0 0
  %6022 = vperm.xlu0 %6021, %v5408
  %v6023 = vpop.permute.xlu0 %6022
  %6026 = vset.pattern.permute.xlu0 0
  %6027 = vperm.xlu0 %6026, %v5422
  %v6028 = vpop.permute.xlu0 %6027
  %6031 = vset.pattern.permute.xlu0 0
  %6032 = vperm.xlu0 %6031, %v5436
  %v6033 = vpop.permute.xlu0 %6032
  %v6035 = vmul.f32 %v5761, %v5449
  %v6036 = vmul.f32 %v5766, %v5449
  %v6037 = vmul.f32 %v6008, %v5449
  %v6038 = vmul.f32 %v5776, %v5449
  %v6039 = vmul.f32 %v5781, %v5449
  %v6040 = vmul.f32 %v6013, %v5449
  %v6041 = vmul.f32 %v5791, %v5449
  %v6042 = vmul.f32 %v5796, %v5449
  %v6043 = vmul.f32 %v6018, %v5449
  %v6044 = vmul.f32 %v5806, %v5449
  %v6045 = vmul.f32 %v5811, %v5449
  %v6046 = vmul.f32 %v6023, %v5449
  %v6047 = vmul.f32 %v5821, %v5449
  %v6048 = vmul.f32 %v5826, %v5449
  %v6049 = vmul.f32 %v6028, %v5449
  %v6050 = vmul.f32 %v5836, %v5449
  %v6051 = vmul.f32 %v5841, %v5449
  %v6052 = vmul.f32 %v6033, %v5449
  %v6053 = vadd.f32 %v5987, %v6035
  %v6054 = vadd.f32 %v5988, %v6036
  %v6055 = vadd.f32 %v5989, %v6037
  %v6056 = vadd.f32 %v5990, %v6038
  %v6057 = vadd.f32 %v5991, %v6039
  %v6058 = vadd.f32 %v5992, %v6040
  %v6059 = vadd.f32 %v5993, %v6041
  %v6060 = vadd.f32 %v5994, %v6042
  %v6061 = vadd.f32 %v5995, %v6043
  %v6062 = vadd.f32 %v5996, %v6044
  %v6063 = vadd.f32 %v5997, %v6045
  %v6064 = vadd.f32 %v5998, %v6046
  %v6065 = vadd.f32 %v5999, %v6047
  %v6066 = vadd.f32 %v6000, %v6048
  %v6067 = vadd.f32 %v6001, %v6049
  %v6068 = vadd.f32 %v6002, %v6050
  %v6069 = vadd.f32 %v6003, %v6051
  %v6070 = vadd.f32 %v6004, %v6052
  %6072 = vset.pattern.permute.xlu0 0
  %6073 = vperm.xlu0 %6072, %v5388
  %v6074 = vpop.permute.xlu0 %6073
  %6077 = vset.pattern.permute.xlu0 0
  %6078 = vperm.xlu0 %6077, %v5390
  %v6079 = vpop.permute.xlu0 %6078
  %6082 = vset.pattern.permute.xlu0 0
  %6083 = vperm.xlu0 %6082, %v5392
  %v6084 = vpop.permute.xlu0 %6083
  %6087 = vset.pattern.permute.xlu0 0
  %6088 = vperm.xlu0 %6087, %v5437
  %v6089 = vpop.permute.xlu0 %6088
  %6092 = vset.pattern.permute.xlu0 0
  %6093 = vperm.xlu0 %6092, %v5439
  %v6094 = vpop.permute.xlu0 %6093
  %6097 = vset.pattern.permute.xlu0 0
  %6098 = vperm.xlu0 %6097, %v5441
  %v6099 = vpop.permute.xlu0 %6098
  %v6101 = vmul.f32 %v5471, %v5450
  %v6102 = vmul.f32 %v5476, %v5450
  %v6103 = vmul.f32 %v5481, %v5450
  %v6104 = vmul.f32 %v5486, %v5450
  %v6105 = vmul.f32 %v5491, %v5450
  %v6106 = vmul.f32 %v5496, %v5450
  %v6107 = vmul.f32 %v6074, %v5450
  %v6108 = vmul.f32 %v6079, %v5450
  %v6109 = vmul.f32 %v6084, %v5450
  %v6110 = vmul.f32 %v5516, %v5450
  %v6111 = vmul.f32 %v5521, %v5450
  %v6112 = vmul.f32 %v5526, %v5450
  %v6113 = vmul.f32 %v5531, %v5450
  %v6114 = vmul.f32 %v5536, %v5450
  %v6115 = vmul.f32 %v5541, %v5450
  %v6116 = vmul.f32 %v6089, %v5450
  %v6117 = vmul.f32 %v6094, %v5450
  %v6118 = vmul.f32 %v6099, %v5450
  %v6119 = vadd.f32 %v6053, %v6101
  %v6120 = vadd.f32 %v6054, %v6102
  %v6121 = vadd.f32 %v6055, %v6103
  %v6122 = vadd.f32 %v6056, %v6104
  %v6123 = vadd.f32 %v6057, %v6105
  %v6124 = vadd.f32 %v6058, %v6106
  %v6125 = vadd.f32 %v6059, %v6107
  %v6126 = vadd.f32 %v6060, %v6108
  %v6127 = vadd.f32 %v6061, %v6109
  %v6128 = vadd.f32 %v6062, %v6110
  %v6129 = vadd.f32 %v6063, %v6111
  %v6130 = vadd.f32 %v6064, %v6112
  %v6131 = vadd.f32 %v6065, %v6113
  %v6132 = vadd.f32 %v6066, %v6114
  %v6133 = vadd.f32 %v6067, %v6115
  %v6134 = vadd.f32 %v6068, %v6116
  %v6135 = vadd.f32 %v6069, %v6117
  %v6136 = vadd.f32 %v6070, %v6118
  %6138 = vset.pattern.permute.xlu0 0
  %6139 = vperm.xlu0 %6138, %v5389
  %v6140 = vpop.permute.xlu0 %6139
  %6143 = vset.pattern.permute.xlu0 0
  %6144 = vperm.xlu0 %6143, %v5391
  %v6145 = vpop.permute.xlu0 %6144
  %6148 = vset.pattern.permute.xlu0 0
  %6149 = vperm.xlu0 %6148, %v5393
  %v6150 = vpop.permute.xlu0 %6149
  %6153 = vset.pattern.permute.xlu0 0
  %6154 = vperm.xlu0 %6153, %v5438
  %v6155 = vpop.permute.xlu0 %6154
  %6158 = vset.pattern.permute.xlu0 0
  %6159 = vperm.xlu0 %6158, %v5440
  %v6160 = vpop.permute.xlu0 %6159
  %6163 = vset.pattern.permute.xlu0 0
  %6164 = vperm.xlu0 %6163, %v5442
  %v6165 = vpop.permute.xlu0 %6164
  %v6167 = vmul.f32 %v5579, %v5451
  %v6168 = vmul.f32 %v5584, %v5451
  %v6169 = vmul.f32 %v5589, %v5451
  %v6170 = vmul.f32 %v5594, %v5451
  %v6171 = vmul.f32 %v5599, %v5451
  %v6172 = vmul.f32 %v5604, %v5451
  %v6173 = vmul.f32 %v6140, %v5451
  %v6174 = vmul.f32 %v6145, %v5451
  %v6175 = vmul.f32 %v6150, %v5451
  %v6176 = vmul.f32 %v5624, %v5451
  %v6177 = vmul.f32 %v5629, %v5451
  %v6178 = vmul.f32 %v5634, %v5451
  %v6179 = vmul.f32 %v5639, %v5451
  %v6180 = vmul.f32 %v5644, %v5451
  %v6181 = vmul.f32 %v5649, %v5451
  %v6182 = vmul.f32 %v6155, %v5451
  %v6183 = vmul.f32 %v6160, %v5451
  %v6184 = vmul.f32 %v6165, %v5451
  %v6185 = vadd.f32 %v6119, %v6167
  %v6186 = vadd.f32 %v6120, %v6168
  %v6187 = vadd.f32 %v6121, %v6169
  %v6188 = vadd.f32 %v6122, %v6170
  %v6189 = vadd.f32 %v6123, %v6171
  %v6190 = vadd.f32 %v6124, %v6172
  %v6191 = vadd.f32 %v6125, %v6173
  %v6192 = vadd.f32 %v6126, %v6174
  %v6193 = vadd.f32 %v6127, %v6175
  %v6194 = vadd.f32 %v6128, %v6176
  %v6195 = vadd.f32 %v6129, %v6177
  %v6196 = vadd.f32 %v6130, %v6178
  %v6197 = vadd.f32 %v6131, %v6179
  %v6198 = vadd.f32 %v6132, %v6180
  %v6199 = vadd.f32 %v6133, %v6181
  %v6200 = vadd.f32 %v6134, %v6182
  %v6201 = vadd.f32 %v6135, %v6183
  %v6202 = vadd.f32 %v6136, %v6184
  %6204 = vset.pattern.permute.xlu0 0
  %6205 = vperm.xlu0 %6204, %v5394
  %v6206 = vpop.permute.xlu0 %6205
  %6209 = vset.pattern.permute.xlu0 0
  %6210 = vperm.xlu0 %6209, %v5443
  %v6211 = vpop.permute.xlu0 %6210
  %v6213 = vmul.f32 %v5476, %v5452
  %v6214 = vmul.f32 %v5481, %v5452
  %v6215 = vmul.f32 %v5695, %v5452
  %v6216 = vmul.f32 %v5491, %v5452
  %v6217 = vmul.f32 %v5496, %v5452
  %v6218 = vmul.f32 %v5700, %v5452
  %v6219 = vmul.f32 %v6079, %v5452
  %v6220 = vmul.f32 %v6084, %v5452
  %v6221 = vmul.f32 %v6206, %v5452
  %v6222 = vmul.f32 %v5521, %v5452
  %v6223 = vmul.f32 %v5526, %v5452
  %v6224 = vmul.f32 %v5710, %v5452
  %v6225 = vmul.f32 %v5536, %v5452
  %v6226 = vmul.f32 %v5541, %v5452
  %v6227 = vmul.f32 %v5715, %v5452
  %v6228 = vmul.f32 %v6094, %v5452
  %v6229 = vmul.f32 %v6099, %v5452
  %v6230 = vmul.f32 %v6211, %v5452
  %v6231 = vadd.f32 %v6185, %v6213
  %v6232 = vadd.f32 %v6186, %v6214
  %v6233 = vadd.f32 %v6187, %v6215
  %v6234 = vadd.f32 %v6188, %v6216
  %v6235 = vadd.f32 %v6189, %v6217
  %v6236 = vadd.f32 %v6190, %v6218
  %v6237 = vadd.f32 %v6191, %v6219
  %v6238 = vadd.f32 %v6192, %v6220
  %v6239 = vadd.f32 %v6193, %v6221
  %v6240 = vadd.f32 %v6194, %v6222
  %v6241 = vadd.f32 %v6195, %v6223
  %v6242 = vadd.f32 %v6196, %v6224
  %v6243 = vadd.f32 %v6197, %v6225
  %v6244 = vadd.f32 %v6198, %v6226
  %v6245 = vadd.f32 %v6199, %v6227
  %v6246 = vadd.f32 %v6200, %v6228
  %v6247 = vadd.f32 %v6201, %v6229
  %v6248 = vadd.f32 %v6202, %v6230
  %vm6249 = vcmask 130048
  %v6250 = vsel %vm6249, %v6231, 0.0
  %v6251 = vrot.slane %v6250, 4
  %v6252 = vadd.f32 %v6250, %v6251
  %v6253 = vrot.slane %v6252, 2
  %v6254 = vadd.f32 %v6252, %v6253
  %v6255 = vrot.slane %v6254, 1
  %v6256 = vadd.f32 %v6254, %v6255
  %v6257 = vsel %vm6249, %v6232, 0.0
  %v6258 = vrot.slane %v6257, 4
  %v6259 = vadd.f32 %v6257, %v6258
  %v6260 = vrot.slane %v6259, 2
  %v6261 = vadd.f32 %v6259, %v6260
  %v6262 = vrot.slane %v6261, 1
  %v6263 = vadd.f32 %v6261, %v6262
  %v6264 = vsel %vm6249, %v6233, 0.0
  %v6265 = vrot.slane %v6264, 4
  %v6266 = vadd.f32 %v6264, %v6265
  %v6267 = vrot.slane %v6266, 2
  %v6268 = vadd.f32 %v6266, %v6267
  %v6269 = vrot.slane %v6268, 1
  %v6270 = vadd.f32 %v6268, %v6269
  %v6271 = vsel %vm6249, %v6234, 0.0
  %v6272 = vrot.slane %v6271, 4
  %v6273 = vadd.f32 %v6271, %v6272
  %v6274 = vrot.slane %v6273, 2
  %v6275 = vadd.f32 %v6273, %v6274
  %v6276 = vrot.slane %v6275, 1
  %v6277 = vadd.f32 %v6275, %v6276
  %v6278 = vsel %vm6249, %v6235, 0.0
  %v6279 = vrot.slane %v6278, 4
  %v6280 = vadd.f32 %v6278, %v6279
  %v6281 = vrot.slane %v6280, 2
  %v6282 = vadd.f32 %v6280, %v6281
  %v6283 = vrot.slane %v6282, 1
  %v6284 = vadd.f32 %v6282, %v6283
  %v6285 = vsel %vm6249, %v6236, 0.0
  %v6286 = vrot.slane %v6285, 4
  %v6287 = vadd.f32 %v6285, %v6286
  %v6288 = vrot.slane %v6287, 2
  %v6289 = vadd.f32 %v6287, %v6288
  %v6290 = vrot.slane %v6289, 1
  %v6291 = vadd.f32 %v6289, %v6290
  %v6292 = vsel %vm6249, %v6237, 0.0
  %v6293 = vrot.slane %v6292, 4
  %v6294 = vadd.f32 %v6292, %v6293
  %v6295 = vrot.slane %v6294, 2
  %v6296 = vadd.f32 %v6294, %v6295
  %v6297 = vrot.slane %v6296, 1
  %v6298 = vadd.f32 %v6296, %v6297
  %v6299 = vsel %vm6249, %v6238, 0.0
  %v6300 = vrot.slane %v6299, 4
  %v6301 = vadd.f32 %v6299, %v6300
  %v6302 = vrot.slane %v6301, 2
  %v6303 = vadd.f32 %v6301, %v6302
  %v6304 = vrot.slane %v6303, 1
  %v6305 = vadd.f32 %v6303, %v6304
  %v6306 = vsel %vm6249, %v6239, 0.0
  %v6307 = vrot.slane %v6306, 4
  %v6308 = vadd.f32 %v6306, %v6307
  %v6309 = vrot.slane %v6308, 2
  %v6310 = vadd.f32 %v6308, %v6309
  %v6311 = vrot.slane %v6310, 1
  %v6312 = vadd.f32 %v6310, %v6311
  %v6313 = vsel %vm6249, %v6240, 0.0
  %v6314 = vrot.slane %v6313, 4
  %v6315 = vadd.f32 %v6313, %v6314
  %v6316 = vrot.slane %v6315, 2
  %v6317 = vadd.f32 %v6315, %v6316
  %v6318 = vrot.slane %v6317, 1
  %v6319 = vadd.f32 %v6317, %v6318
  %v6320 = vsel %vm6249, %v6241, 0.0
  %v6321 = vrot.slane %v6320, 4
  %v6322 = vadd.f32 %v6320, %v6321
  %v6323 = vrot.slane %v6322, 2
  %v6324 = vadd.f32 %v6322, %v6323
  %v6325 = vrot.slane %v6324, 1
  %v6326 = vadd.f32 %v6324, %v6325
  %v6327 = vsel %vm6249, %v6242, 0.0
  %v6328 = vrot.slane %v6327, 4
  %v6329 = vadd.f32 %v6327, %v6328
  %v6330 = vrot.slane %v6329, 2
  %v6331 = vadd.f32 %v6329, %v6330
  %v6332 = vrot.slane %v6331, 1
  %v6333 = vadd.f32 %v6331, %v6332
  %v6334 = vsel %vm6249, %v6243, 0.0
  %v6335 = vrot.slane %v6334, 4
  %v6336 = vadd.f32 %v6334, %v6335
  %v6337 = vrot.slane %v6336, 2
  %v6338 = vadd.f32 %v6336, %v6337
  %v6339 = vrot.slane %v6338, 1
  %v6340 = vadd.f32 %v6338, %v6339
  %v6341 = vsel %vm6249, %v6244, 0.0
  %v6342 = vrot.slane %v6341, 4
  %v6343 = vadd.f32 %v6341, %v6342
  %v6344 = vrot.slane %v6343, 2
  %v6345 = vadd.f32 %v6343, %v6344
  %v6346 = vrot.slane %v6345, 1
  %v6347 = vadd.f32 %v6345, %v6346
  %v6348 = vsel %vm6249, %v6245, 0.0
  %v6349 = vrot.slane %v6348, 4
  %v6350 = vadd.f32 %v6348, %v6349
  %v6351 = vrot.slane %v6350, 2
  %v6352 = vadd.f32 %v6350, %v6351
  %v6353 = vrot.slane %v6352, 1
  %v6354 = vadd.f32 %v6352, %v6353
  %v6355 = vsel %vm6249, %v6246, 0.0
  %v6356 = vrot.slane %v6355, 4
  %v6357 = vadd.f32 %v6355, %v6356
  %v6358 = vrot.slane %v6357, 2
  %v6359 = vadd.f32 %v6357, %v6358
  %v6360 = vrot.slane %v6359, 1
  %v6361 = vadd.f32 %v6359, %v6360
  %v6362 = vsel %vm6249, %v6247, 0.0
  %v6363 = vrot.slane %v6362, 4
  %v6364 = vadd.f32 %v6362, %v6363
  %v6365 = vrot.slane %v6364, 2
  %v6366 = vadd.f32 %v6364, %v6365
  %v6367 = vrot.slane %v6366, 1
  %v6368 = vadd.f32 %v6366, %v6367
  %v6369 = vsel %vm6249, %v6248, 0.0
  %v6370 = vrot.slane %v6369, 4
  %v6371 = vadd.f32 %v6369, %v6370
  %v6372 = vrot.slane %v6371, 2
  %v6373 = vadd.f32 %v6371, %v6372
  %v6374 = vrot.slane %v6373, 1
  %v6375 = vadd.f32 %v6373, %v6374
  %v6376 = vld [vmem:[%s4] sm:$0x1]
  %v6377 = vadd.f32 %v6256, %v6376
  %v6378 = vadd.f32 %v6263, %v6376
  %v6379 = vadd.f32 %v6270, %v6376
  %v6380 = vadd.f32 %v6277, %v6376
  %v6381 = vadd.f32 %v6284, %v6376
  %v6382 = vadd.f32 %v6291, %v6376
  %v6383 = vadd.f32 %v6298, %v6376
  %v6384 = vadd.f32 %v6305, %v6376
  %v6385 = vadd.f32 %v6312, %v6376
  %v6386 = vadd.f32 %v6319, %v6376
  %v6387 = vadd.f32 %v6326, %v6376
  %v6388 = vadd.f32 %v6333, %v6376
  %v6389 = vadd.f32 %v6340, %v6376
  %v6390 = vadd.f32 %v6347, %v6376
  %v6391 = vadd.f32 %v6354, %v6376
  %v6392 = vadd.f32 %v6361, %v6376
  %v6393 = vadd.f32 %v6368, %v6376
  %v6394 = vadd.f32 %v6375, %v6376
  %v6395 = vmul.f32 %v6377, 0.2
  %v6396 = vmul.f32 %v6378, 0.2
  %v6397 = vmul.f32 %v6379, 0.2
  %v6398 = vmul.f32 %v6380, 0.2
  %v6399 = vmul.f32 %v6381, 0.2
  %v6400 = vmul.f32 %v6382, 0.2
  %v6401 = vmul.f32 %v6383, 0.2
  %v6402 = vmul.f32 %v6384, 0.2
  %v6403 = vmul.f32 %v6385, 0.2
  %v6404 = vmul.f32 %v6386, 0.2
  %v6405 = vmul.f32 %v6387, 0.2
  %v6406 = vmul.f32 %v6388, 0.2
  %v6407 = vmul.f32 %v6389, 0.2
  %v6408 = vmul.f32 %v6390, 0.2
  %v6409 = vmul.f32 %v6391, 0.2
  %v6410 = vmul.f32 %v6392, 0.2
  %v6411 = vmul.f32 %v6393, 0.2
  %v6412 = vmul.f32 %v6394, 0.2
  %v6413 = vmax.f32 %v6377, %v6395
  %v6414 = vmax.f32 %v6378, %v6396
  %v6415 = vmax.f32 %v6379, %v6397
  %v6416 = vmax.f32 %v6380, %v6398
  %v6417 = vmax.f32 %v6381, %v6399
  %v6418 = vmax.f32 %v6382, %v6400
  %v6419 = vmax.f32 %v6383, %v6401
  %v6420 = vmax.f32 %v6384, %v6402
  %v6421 = vmax.f32 %v6385, %v6403
  %v6422 = vmax.f32 %v6386, %v6404
  %v6423 = vmax.f32 %v6387, %v6405
  %v6424 = vmax.f32 %v6388, %v6406
  %v6425 = vmax.f32 %v6389, %v6407
  %v6426 = vmax.f32 %v6390, %v6408
  %v6427 = vmax.f32 %v6391, %v6409
  %v6428 = vmax.f32 %v6392, %v6410
  %v6429 = vmax.f32 %v6393, %v6411
  %v6430 = vmax.f32 %v6394, %v6412
  %v6431 = vld [vmem:[%s5] sm:$0xff]
  %v6432 = vld [vmem:[%s5 + $0x8] sm:$0xff]
  %v6433 = vld [vmem:[%s5 + $0x10] sm:$0xff]
  %v6434 = vld [vmem:[%s5 + $0x18] sm:$0xff]
  %v6435 = vld [vmem:[%s5 + $0x20] sm:$0xff]
  %v6436 = vld [vmem:[%s5 + $0x28] sm:$0xff]
  %v6437 = vld [vmem:[%s5 + $0x30] sm:$0xff]
  %v6438 = vld [vmem:[%s5 + $0x38] sm:$0xff]
  %v6439 = vld [vmem:[%s5 + $0x40] sm:$0xff]
  %v6440 = vld [vmem:[%s5 + $0x48] sm:$0xff]
  %v6441 = vld [vmem:[%s5 + $0x50] sm:$0xff]
  %v6442 = vld [vmem:[%s5 + $0x58] sm:$0xff]
  %v6443 = vld [vmem:[%s5 + $0x60] sm:$0xff]
  %v6444 = vld [vmem:[%s5 + $0x68] sm:$0xff]
  %v6445 = vld [vmem:[%s5 + $0x70] sm:$0xff]
  %v6446 = vld [vmem:[%s5 + $0x78] sm:$0xff]
  %v6447 = vld [vmem:[%s5 + $0x80] sm:$0xff]
  %v6448 = vld [vmem:[%s5 + $0x88] sm:$0xff]
  %v6449 = vld [vmem:[%s5 + $0x90] sm:$0xff]
  %v6450 = vld [vmem:[%s5 + $0x98] sm:$0xff]
  %v6451 = vld [vmem:[%s5 + $0xa0] sm:$0xff]
  %v6452 = vld [vmem:[%s5 + $0xa8] sm:$0xff]
  %v6453 = vld [vmem:[%s5 + $0xb0] sm:$0xff]
  %v6454 = vld [vmem:[%s5 + $0xb8] sm:$0xff]
  %v6455 = vld [vmem:[%s5 + $0xc0] sm:$0xff]
  %v6456 = vld [vmem:[%s5 + $0xc8] sm:$0xff]
  %v6457 = vld [vmem:[%s5 + $0xd0] sm:$0xff]
  %v6458 = vld [vmem:[%s5 + $0xd8] sm:$0xff]
  %v6459 = vld [vmem:[%s5 + $0xe0] sm:$0xff]
  %v6460 = vld [vmem:[%s5 + $0xe8] sm:$0xff]
  %v6461 = vld [vmem:[%s5 + $0xf0] sm:$0xff]
  %v6462 = vld [vmem:[%s5 + $0xf8] sm:$0xff]
  %v6463 = vld [vmem:[%s5 + $0x100] sm:$0xff]
  %v6464 = vld [vmem:[%s5 + $0x108] sm:$0xff]
  %v6465 = vld [vmem:[%s5 + $0x110] sm:$0xff]
  %v6466 = vld [vmem:[%s5 + $0x118] sm:$0xff]
  %v6467 = vlaneseq
  %v6468 = vshrl.u32 %v6467, 7
  %v6469 = vsub.s32 0, %v6468
  %v6470 = vrot.slane %v6413, %v6469
  %v6471 = vlaneseq
  %v6472 = vshrl.u32 %v6471, 7
  %v6473 = vsub.s32 0, %v6472
  %v6474 = vrot.slane %v6422, %v6473
  %v6475 = vmul.f32 %v6470, %v6431
  %v6476 = vmul.f32 %v6470, %v6432
  %v6477 = vmul.f32 %v6470, %v6433
  %v6478 = vmul.f32 %v6470, %v6434
  %v6479 = vmul.f32 %v6474, %v6431
  %v6480 = vmul.f32 %v6474, %v6432
  %v6481 = vmul.f32 %v6474, %v6433
  %v6482 = vmul.f32 %v6474, %v6434
  %v6483 = vlaneseq
  %v6484 = vshrl.u32 %v6483, 7
  %v6485 = vsub.s32 0, %v6484
  %v6486 = vrot.slane %v6414, %v6485
  %v6487 = vlaneseq
  %v6488 = vshrl.u32 %v6487, 7
  %v6489 = vsub.s32 0, %v6488
  %v6490 = vrot.slane %v6423, %v6489
  %v6491 = vmul.f32 %v6486, %v6435
  %v6492 = vmul.f32 %v6486, %v6436
  %v6493 = vmul.f32 %v6486, %v6437
  %v6494 = vmul.f32 %v6486, %v6438
  %v6495 = vmul.f32 %v6490, %v6435
  %v6496 = vmul.f32 %v6490, %v6436
  %v6497 = vmul.f32 %v6490, %v6437
  %v6498 = vmul.f32 %v6490, %v6438
  %v6499 = vadd.f32 %v6475, %v6491
  %v6500 = vadd.f32 %v6476, %v6492
  %v6501 = vadd.f32 %v6477, %v6493
  %v6502 = vadd.f32 %v6478, %v6494
  %v6503 = vadd.f32 %v6479, %v6495
  %v6504 = vadd.f32 %v6480, %v6496
  %v6505 = vadd.f32 %v6481, %v6497
  %v6506 = vadd.f32 %v6482, %v6498
  %v6507 = vlaneseq
  %v6508 = vshrl.u32 %v6507, 7
  %v6509 = vsub.s32 0, %v6508
  %v6510 = vrot.slane %v6415, %v6509
  %v6511 = vlaneseq
  %v6512 = vshrl.u32 %v6511, 7
  %v6513 = vsub.s32 0, %v6512
  %v6514 = vrot.slane %v6424, %v6513
  %v6515 = vmul.f32 %v6510, %v6439
  %v6516 = vmul.f32 %v6510, %v6440
  %v6517 = vmul.f32 %v6510, %v6441
  %v6518 = vmul.f32 %v6510, %v6442
  %v6519 = vmul.f32 %v6514, %v6439
  %v6520 = vmul.f32 %v6514, %v6440
  %v6521 = vmul.f32 %v6514, %v6441
  %v6522 = vmul.f32 %v6514, %v6442
  %v6523 = vadd.f32 %v6499, %v6515
  %v6524 = vadd.f32 %v6500, %v6516
  %v6525 = vadd.f32 %v6501, %v6517
  %v6526 = vadd.f32 %v6502, %v6518
  %v6527 = vadd.f32 %v6503, %v6519
  %v6528 = vadd.f32 %v6504, %v6520
  %v6529 = vadd.f32 %v6505, %v6521
  %v6530 = vadd.f32 %v6506, %v6522
  %v6531 = vlaneseq
  %v6532 = vshrl.u32 %v6531, 7
  %v6533 = vsub.s32 0, %v6532
  %v6534 = vrot.slane %v6416, %v6533
  %v6535 = vlaneseq
  %v6536 = vshrl.u32 %v6535, 7
  %v6537 = vsub.s32 0, %v6536
  %v6538 = vrot.slane %v6425, %v6537
  %v6539 = vmul.f32 %v6534, %v6443
  %v6540 = vmul.f32 %v6534, %v6444
  %v6541 = vmul.f32 %v6534, %v6445
  %v6542 = vmul.f32 %v6534, %v6446
  %v6543 = vmul.f32 %v6538, %v6443
  %v6544 = vmul.f32 %v6538, %v6444
  %v6545 = vmul.f32 %v6538, %v6445
  %v6546 = vmul.f32 %v6538, %v6446
  %v6547 = vadd.f32 %v6523, %v6539
  %v6548 = vadd.f32 %v6524, %v6540
  %v6549 = vadd.f32 %v6525, %v6541
  %v6550 = vadd.f32 %v6526, %v6542
  %v6551 = vadd.f32 %v6527, %v6543
  %v6552 = vadd.f32 %v6528, %v6544
  %v6553 = vadd.f32 %v6529, %v6545
  %v6554 = vadd.f32 %v6530, %v6546
  %v6555 = vlaneseq
  %v6556 = vshrl.u32 %v6555, 7
  %v6557 = vsub.s32 0, %v6556
  %v6558 = vrot.slane %v6417, %v6557
  %v6559 = vlaneseq
  %v6560 = vshrl.u32 %v6559, 7
  %v6561 = vsub.s32 0, %v6560
  %v6562 = vrot.slane %v6426, %v6561
  %v6563 = vmul.f32 %v6558, %v6447
  %v6564 = vmul.f32 %v6558, %v6448
  %v6565 = vmul.f32 %v6558, %v6449
  %v6566 = vmul.f32 %v6558, %v6450
  %v6567 = vmul.f32 %v6562, %v6447
  %v6568 = vmul.f32 %v6562, %v6448
  %v6569 = vmul.f32 %v6562, %v6449
  %v6570 = vmul.f32 %v6562, %v6450
  %v6571 = vadd.f32 %v6547, %v6563
  %v6572 = vadd.f32 %v6548, %v6564
  %v6573 = vadd.f32 %v6549, %v6565
  %v6574 = vadd.f32 %v6550, %v6566
  %v6575 = vadd.f32 %v6551, %v6567
  %v6576 = vadd.f32 %v6552, %v6568
  %v6577 = vadd.f32 %v6553, %v6569
  %v6578 = vadd.f32 %v6554, %v6570
  %v6579 = vlaneseq
  %v6580 = vshrl.u32 %v6579, 7
  %v6581 = vsub.s32 0, %v6580
  %v6582 = vrot.slane %v6418, %v6581
  %v6583 = vlaneseq
  %v6584 = vshrl.u32 %v6583, 7
  %v6585 = vsub.s32 0, %v6584
  %v6586 = vrot.slane %v6427, %v6585
  %v6587 = vmul.f32 %v6582, %v6451
  %v6588 = vmul.f32 %v6582, %v6452
  %v6589 = vmul.f32 %v6582, %v6453
  %v6590 = vmul.f32 %v6582, %v6454
  %v6591 = vmul.f32 %v6586, %v6451
  %v6592 = vmul.f32 %v6586, %v6452
  %v6593 = vmul.f32 %v6586, %v6453
  %v6594 = vmul.f32 %v6586, %v6454
  %v6595 = vadd.f32 %v6571, %v6587
  %v6596 = vadd.f32 %v6572, %v6588
  %v6597 = vadd.f32 %v6573, %v6589
  %v6598 = vadd.f32 %v6574, %v6590
  %v6599 = vadd.f32 %v6575, %v6591
  %v6600 = vadd.f32 %v6576, %v6592
  %v6601 = vadd.f32 %v6577, %v6593
  %v6602 = vadd.f32 %v6578, %v6594
  %v6603 = vlaneseq
  %v6604 = vshrl.u32 %v6603, 7
  %v6605 = vsub.s32 0, %v6604
  %v6606 = vrot.slane %v6419, %v6605
  %v6607 = vlaneseq
  %v6608 = vshrl.u32 %v6607, 7
  %v6609 = vsub.s32 0, %v6608
  %v6610 = vrot.slane %v6428, %v6609
  %v6611 = vmul.f32 %v6606, %v6455
  %v6612 = vmul.f32 %v6606, %v6456
  %v6613 = vmul.f32 %v6606, %v6457
  %v6614 = vmul.f32 %v6606, %v6458
  %v6615 = vmul.f32 %v6610, %v6455
  %v6616 = vmul.f32 %v6610, %v6456
  %v6617 = vmul.f32 %v6610, %v6457
  %v6618 = vmul.f32 %v6610, %v6458
  %v6619 = vadd.f32 %v6595, %v6611
  %v6620 = vadd.f32 %v6596, %v6612
  %v6621 = vadd.f32 %v6597, %v6613
  %v6622 = vadd.f32 %v6598, %v6614
  %v6623 = vadd.f32 %v6599, %v6615
  %v6624 = vadd.f32 %v6600, %v6616
  %v6625 = vadd.f32 %v6601, %v6617
  %v6626 = vadd.f32 %v6602, %v6618
  %v6627 = vlaneseq
  %v6628 = vshrl.u32 %v6627, 7
  %v6629 = vsub.s32 0, %v6628
  %v6630 = vrot.slane %v6420, %v6629
  %v6631 = vlaneseq
  %v6632 = vshrl.u32 %v6631, 7
  %v6633 = vsub.s32 0, %v6632
  %v6634 = vrot.slane %v6429, %v6633
  %v6635 = vmul.f32 %v6630, %v6459
  %v6636 = vmul.f32 %v6630, %v6460
  %v6637 = vmul.f32 %v6630, %v6461
  %v6638 = vmul.f32 %v6630, %v6462
  %v6639 = vmul.f32 %v6634, %v6459
  %v6640 = vmul.f32 %v6634, %v6460
  %v6641 = vmul.f32 %v6634, %v6461
  %v6642 = vmul.f32 %v6634, %v6462
  %v6643 = vadd.f32 %v6619, %v6635
  %v6644 = vadd.f32 %v6620, %v6636
  %v6645 = vadd.f32 %v6621, %v6637
  %v6646 = vadd.f32 %v6622, %v6638
  %v6647 = vadd.f32 %v6623, %v6639
  %v6648 = vadd.f32 %v6624, %v6640
  %v6649 = vadd.f32 %v6625, %v6641
  %v6650 = vadd.f32 %v6626, %v6642
  %v6651 = vlaneseq
  %v6652 = vshrl.u32 %v6651, 7
  %v6653 = vsub.s32 0, %v6652
  %v6654 = vrot.slane %v6421, %v6653
  %v6655 = vlaneseq
  %v6656 = vshrl.u32 %v6655, 7
  %v6657 = vsub.s32 0, %v6656
  %v6658 = vrot.slane %v6430, %v6657
  %v6659 = vmul.f32 %v6654, %v6463
  %v6660 = vmul.f32 %v6654, %v6464
  %v6661 = vmul.f32 %v6654, %v6465
  %v6662 = vmul.f32 %v6654, %v6466
  %v6663 = vmul.f32 %v6658, %v6463
  %v6664 = vmul.f32 %v6658, %v6464
  %v6665 = vmul.f32 %v6658, %v6465
  %v6666 = vmul.f32 %v6658, %v6466
  %v6667 = vadd.f32 %v6643, %v6659
  %v6668 = vadd.f32 %v6644, %v6660
  %v6669 = vadd.f32 %v6645, %v6661
  %v6670 = vadd.f32 %v6646, %v6662
  %v6671 = vadd.f32 %v6647, %v6663
  %v6672 = vadd.f32 %v6648, %v6664
  %v6673 = vadd.f32 %v6649, %v6665
  %v6674 = vadd.f32 %v6650, %v6666
  %v6675 = vsel %vm6249, %v6667, 0.0
  %6676 = vadd.xlane.f32.xlu0 %v6675
  %v6677 = vpop.xlane.xlu0 %6676
  %v6678 = vsel %vm6249, %v6668, 0.0
  %6679 = vadd.xlane.f32.xlu0 %v6678
  %v6680 = vpop.xlane.xlu0 %6679
  %v6681 = vsel %vm6249, %v6669, 0.0
  %6682 = vadd.xlane.f32.xlu0 %v6681
  %v6683 = vpop.xlane.xlu0 %6682
  %v6684 = vsel %vm6249, %v6670, 0.0
  %6685 = vadd.xlane.f32.xlu0 %v6684
  %v6686 = vpop.xlane.xlu0 %6685
  %v6687 = vsel %vm6249, %v6671, 0.0
  %6688 = vadd.xlane.f32.xlu0 %v6687
  %v6689 = vpop.xlane.xlu0 %6688
  %v6690 = vsel %vm6249, %v6672, 0.0
  %6691 = vadd.xlane.f32.xlu0 %v6690
  %v6692 = vpop.xlane.xlu0 %6691
  %v6693 = vsel %vm6249, %v6673, 0.0
  %6694 = vadd.xlane.f32.xlu0 %v6693
  %v6695 = vpop.xlane.xlu0 %6694
  %v6696 = vsel %vm6249, %v6674, 0.0
  %6697 = vadd.xlane.f32.xlu0 %v6696
  %v6698 = vpop.xlane.xlu0 %6697
  %v6699 = vld [vmem:[%s6] sm:$0xff]
  %v6700 = vld [vmem:[%s6 + $0x8] sm:$0xff]
  %v6701 = vld [vmem:[%s6 + $0x10] sm:$0xff]
  %v6702 = vld [vmem:[%s6 + $0x18] sm:$0xff]
  %v6703 = vadd.f32 %v6677, %v6699
  %v6704 = vadd.f32 %v6680, %v6700
  %v6705 = vadd.f32 %v6683, %v6701
  %v6706 = vadd.f32 %v6686, %v6702
  %v6707 = vadd.f32 %v6689, %v6699
  %v6708 = vadd.f32 %v6692, %v6700
  %v6709 = vadd.f32 %v6695, %v6701
  %v6710 = vadd.f32 %v6698, %v6702
  %v6711 = vmul.f32 %v6703, 0.2
  %v6712 = vmul.f32 %v6704, 0.2
  %v6713 = vmul.f32 %v6705, 0.2
  %v6714 = vmul.f32 %v6706, 0.2
  %v6715 = vmul.f32 %v6707, 0.2
  %v6716 = vmul.f32 %v6708, 0.2
  %v6717 = vmul.f32 %v6709, 0.2
  %v6718 = vmul.f32 %v6710, 0.2
  %v6719 = vmax.f32 %v6703, %v6711
  %v6720 = vmax.f32 %v6704, %v6712
  %v6721 = vmax.f32 %v6705, %v6713
  %v6722 = vmax.f32 %v6706, %v6714
  %v6723 = vmax.f32 %v6707, %v6715
  %v6724 = vmax.f32 %v6708, %v6716
  %v6725 = vmax.f32 %v6709, %v6717
  %v6726 = vmax.f32 %v6710, %v6718
  %v6727 = vadd.f32 %v6719, 0.0
  %v6728 = vadd.f32 %v6720, 0.0
  %v6729 = vadd.f32 %v6721, 0.0
  %v6730 = vadd.f32 %v6722, 0.0
  %v6731 = vadd.f32 %v6723, 0.0
  %v6732 = vadd.f32 %v6724, 0.0
  %v6733 = vadd.f32 %v6725, 0.0
  %v6734 = vadd.f32 %v6726, 0.0
  %v6735 = vadd.f32 %v6727, 0.0
  %v6736 = vadd.f32 %v6728, 0.0
  %v6737 = vadd.f32 %v6729, 0.0
  %v6738 = vadd.f32 %v6730, 0.0
  %v6739 = vadd.f32 %v6731, 0.0
  %v6740 = vadd.f32 %v6732, 0.0
  %v6741 = vadd.f32 %v6733, 0.0
  %v6742 = vadd.f32 %v6734, 0.0
  %v6743 = vld [vmem:[%s7] sm:$0xff]
  %v6744 = vld [vmem:[%s7 + $0x8] sm:$0xff]
  %v6745 = vld [vmem:[%s7 + $0x10] sm:$0xff]
  %v6746 = vld [vmem:[%s7 + $0x18] sm:$0xff]
  %v6747 = vmul.f32 %v6735, %v6743
  %v6748 = vmul.f32 %v6736, %v6744
  %v6749 = vmul.f32 %v6737, %v6745
  %v6750 = vmul.f32 %v6738, %v6746
  %v6751 = vmul.f32 %v6739, %v6743
  %v6752 = vmul.f32 %v6740, %v6744
  %v6753 = vmul.f32 %v6741, %v6745
  %v6754 = vmul.f32 %v6742, %v6746
  %vm6755 = vcmask 7168
  %v6756 = vsel %vm6755, %v6747, 0.0
  %v6757 = vsel %vm6755, %v6748, 0.0
  %v6758 = vadd.f32 %v6756, %v6757
  %v6759 = vsel %vm6755, %v6749, 0.0
  %v6760 = vadd.f32 %v6758, %v6759
  %v6761 = vsel %vm6755, %v6750, 0.0
  %v6762 = vadd.f32 %v6760, %v6761
  %v6763 = vrot.slane %v6762, 4
  %v6764 = vadd.f32 %v6762, %v6763
  %v6765 = vrot.slane %v6764, 2
  %v6766 = vadd.f32 %v6764, %v6765
  %v6767 = vrot.slane %v6766, 1
  %v6768 = vadd.f32 %v6766, %v6767
  %v6769 = vsel %vm6755, %v6751, 0.0
  %v6770 = vsel %vm6755, %v6752, 0.0
  %v6771 = vadd.f32 %v6769, %v6770
  %v6772 = vsel %vm6755, %v6753, 0.0
  %v6773 = vadd.f32 %v6771, %v6772
  %v6774 = vsel %vm6755, %v6754, 0.0
  %v6775 = vadd.f32 %v6773, %v6774
  %v6776 = vrot.slane %v6775, 4
  %v6777 = vadd.f32 %v6775, %v6776
  %v6778 = vrot.slane %v6777, 2
  %v6779 = vadd.f32 %v6777, %v6778
  %v6780 = vrot.slane %v6779, 1
  %v6781 = vadd.f32 %v6779, %v6780
  %vm6782 = vcmask 0
  %6783 = vst.msk [vmem:[%s8] sm:$0x1] %vm6782, %v6768
  %6784 = vst.msk [vmem:[%s8 + $0x1] sm:$0x1] %vm6782, %v6781
  // Predicated region
  $region34: #{tpu_custom_call.1} parent=0 // pred_check
    _
  $region35: #{tpu_custom_call.1} parent=0 // pred_check_branch
    %6786 = sbr.rel (0) target = $region37
  $region36: #{tpu_custom_call.1} parent=0 // pred_region
    _
  $region37: #{tpu_custom_call.1} parent=0 // pred_fallthru
    _
  // Predicated region
  $region38: #{tpu_custom_call.1} parent=0 // pred_check
    _
  $region39: #{tpu_custom_call.1} parent=0 // pred_check_branch
    %6788 = sbr.rel (0) target = $region41
  $region40: #{tpu_custom_call.1} parent=0 // pred_region
    _
  $region41: #{tpu_custom_call.1} parent=0 // pred_fallthru
    _

</llo_original>
